<compile_context>
chip_gen: v7x
topology: tpu7x:2x2x1
jax: 0.10.0
libtpu: 0.0.40
codegen_flags: <defaults>
</compile_context>

<pallas_src>
import functools

import jax
import jax.numpy as jnp
from jax import lax
from jax.experimental import pallas as pl
from jax.experimental.pallas import tpu as pltpu


# ----------------------------------------------------------------------------
# In-kernel helper: 3x3 stride-1 "same" conv over a zero-padded VMEM scratch,
# expressed as a single im2col matmul on the MXU.
# ----------------------------------------------------------------------------
def _conv3x3_im2col(pad_ref, w_ref, b_ref, act, H, W):
    """pad_ref: (B, H+2, W+2, Cin) zero-padded activation (VMEM scratch).
    w_ref:   (9*Cin, Cout) weight, rows ordered (ky, kx, cin).
    b_ref:   (1, Cout) bias.
    Returns  (B*H*W, Cout) activation, rows ordered (b, h, w)."""
    B = pad_ref.shape[0]
    cin = pad_ref.shape[-1]
    cols = []
    for dy in range(3):
        for dx in range(3):
            tap = pad_ref[:, dy:dy + H, dx:dx + W, :]        # (B, H, W, Cin)
            cols.append(tap.reshape(B * H * W, cin))         # flatten batch+space
    col = jnp.concatenate(cols, axis=-1)                     # (B*H*W, 9*Cin)
    acc = jnp.dot(col, w_ref[...], preferred_element_type=jnp.float32)
    return act(acc + b_ref[...])


# ----------------------------------------------------------------------------
# Fused decoder kernel: fc+ReLU -> unflatten -> 3x (conv3x3 + act), all in VMEM.
# ----------------------------------------------------------------------------
def _decoder_kernel(x_ref, wfc_ref, bfc_ref, w1_ref, b1_ref, w2_ref, b2_ref,
                    w3_ref, b3_ref, o_ref, pad1, pad2, pad3, *, H, W):
    relu = lambda v: jnp.maximum(v, 0.0)
    B = x_ref.shape[0]
    C0 = pad1.shape[-1]

    # ---- fc + ReLU (fc weight columns pre-permuted to (h, w, c) order in glue) ----
    y = jnp.dot(x_ref[...], wfc_ref[...], preferred_element_type=jnp.float32)
    y = relu(y + bfc_ref[...])                               # (B, H*W*C0)

    # ---- UnflattenBatch straight into the zero-padded VMEM scratch ----
    pad1[...] = jnp.zeros_like(pad1)
    for p in range(H * W):                                   # unrolled: 64 tiny (B, C0) stores
        h, w = divmod(p, W)
        pad1[:, 1 + h, 1 + w, :] = y[:, p * C0:(p + 1) * C0]

    # ---- conv1 + ReLU ----
    a1 = _conv3x3_im2col(pad1, w1_ref, b1_ref, relu, H, W)   # (B*H*W, 16)
    pad2[...] = jnp.zeros_like(pad2)
    pad2[:, 1:H + 1, 1:W + 1, :] = a1.reshape(B, H, W, a1.shape[-1])

    # ---- conv2 + ReLU ----
    a2 = _conv3x3_im2col(pad2, w2_ref, b2_ref, relu, H, W)   # (B*H*W, 32)
    pad3[...] = jnp.zeros_like(pad3)
    pad3[:, 1:H + 1, 1:W + 1, :] = a2.reshape(B, H, W, a2.shape[-1])

    # ---- conv3 + Sigmoid ----
    a3 = _conv3x3_im2col(pad3, w3_ref, b3_ref, jax.nn.sigmoid, H, W)  # (B*H*W, Cout)
    o_ref[...] = a3


# ----------------------------------------------------------------------------
# One-time glue: permute / flatten weights so the kernel does no layout work.
# ----------------------------------------------------------------------------
def prepare_decoder_params(params, final_conv_shape):
    C0, H, W = final_conv_shape
    din = params["fc_w"].shape[0]
    prep = {
        # fc weight/bias columns reordered NCHW-flat -> NHWC-flat (h, w, c).
        "wfc": params["fc_w"].reshape(din, C0, H, W).transpose(0, 2, 3, 1)
                             .reshape(din, H * W * C0),
        "bfc": params["fc_b"].reshape(C0, H, W).transpose(1, 2, 0)
                             .reshape(1, H * W * C0),
    }
    for i in (1, 2, 3):
        w = params[f"w{i}"]                                  # (3, 3, Cin, Cout) HWIO
        prep[f"w{i}"] = w.reshape(9 * w.shape[2], w.shape[3])  # (9*Cin, Cout)
        prep[f"b{i}"] = params[f"b{i}"]                        # (1, Cout)
    return prep


# ----------------------------------------------------------------------------
# Forward: one pallas_call + a free reshape of the 512-byte result to NCHW.
# ----------------------------------------------------------------------------
def conv_decoder_forward(x, prep, final_conv_shape, in_channels=1):
    C0, H, W = final_conv_shape
    B = x.shape[0]
    c1 = prep["w1"].shape[-1]
    c2 = prep["w2"].shape[-1]

    out_flat = pl.pallas_call(
        functools.partial(_decoder_kernel, H=H, W=W),
        out_shape=jax.ShapeDtypeStruct((B * H * W, in_channels), jnp.float32),
        in_specs=[pl.BlockSpec(memory_space=pltpu.MemorySpace.VMEM)] * 9,
        out_specs=pl.BlockSpec(memory_space=pltpu.MemorySpace.VMEM),
        scratch_shapes=[
            pltpu.VMEM((B, H + 2, W + 2, C0), jnp.float32),   # padded unflattened fc out
            pltpu.VMEM((B, H + 2, W + 2, c1), jnp.float32),   # padded conv1 out
            pltpu.VMEM((B, H + 2, W + 2, c2), jnp.float32),   # padded conv2 out
        ],
    )(x, prep["wfc"], prep["bfc"], prep["w1"], prep["b1"],
      prep["w2"], prep["b2"], prep["w3"], prep["b3"])

    # rows are ordered (b, h, w); map to PyTorch's NCHW output.
    return out_flat.reshape(B, H, W, in_channels).transpose(0, 3, 1, 2)


# Pure-JAX reference (no Pallas) for numerical verification.
def conv_decoder_reference(x, params, final_conv_shape):
    C0, H, W = final_conv_shape
    B = x.shape[0]
    y = jnp.maximum(x @ params["fc_w"] + params["fc_b"], 0.0)
    y = y.reshape(B, C0, H, W).transpose(0, 2, 3, 1)
    for wk, bk, act in (("w1", "b1", lambda v: jnp.maximum(v, 0.0)),
                        ("w2", "b2", lambda v: jnp.maximum(v, 0.0)),
                        ("w3", "b3", jax.nn.sigmoid)):
        y = lax.conv_general_dilated(
            y, params[wk], window_strides=(1, 1), padding="SAME",
            dimension_numbers=("NHWC", "HWIO", "NHWC"),
        ) + params[bk].reshape(1, 1, 1, -1)
        y = act(y)
    return y.transpose(0, 3, 1, 2)


if __name__ == "__main__":
    # Shapes consistent with the module:
    #   fc_in_size = 32, final_conv_shape = [8, 8, 8], in_channels = 1, batch = 2
    B = 2
    fc_in_size = 32
    final_conv_shape = (8, 8, 8)          # (channels=8, H=8, W=8)
    in_channels = 1
    C0, H, W = final_conv_shape
    fc_out = C0 * H * W                   # 512

    key = jax.random.PRNGKey(0)
    keys = jax.random.split(key, 9)
    s = 0.1
    params = {
        "fc_w": s * jax.random.normal(keys[0], (fc_in_size, fc_out), jnp.float32),
        "fc_b": s * jax.random.normal(keys[1], (1, fc_out), jnp.float32),
        "w1":   s * jax.random.normal(keys[2], (3, 3, 8, 16), jnp.float32),
        "b1":   s * jax.random.normal(keys[3], (1, 16), jnp.float32),
        "w2":   s * jax.random.normal(keys[4], (3, 3, 16, 32), jnp.float32),
        "b2":   s * jax.random.normal(keys[5], (1, 32), jnp.float32),
        "w3":   s * jax.random.normal(keys[6], (3, 3, 32, in_channels), jnp.float32),
        "b3":   s * jax.random.normal(keys[7], (1, in_channels), jnp.float32),
    }
    x = jax.random.normal(keys[8], (B, fc_in_size), jnp.float32)

    prep = prepare_decoder_params(params, final_conv_shape)   # one-time weight prep (glue)
    fwd = jax.jit(functools.partial(conv_decoder_forward,
                                    final_conv_shape=final_conv_shape,
                                    in_channels=in_channels))
    out = jax.block_until_ready(fwd(x, prep))

    ref = conv_decoder_reference(x, params, final_conv_shape)
    assert out.shape == (B, in_channels, H, W), out.shape
    assert jnp.allclose(out, ref, atol=1e-4, rtol=1e-4), "mismatch vs reference"
    print("KERNEL_OK")
</pallas_src>

<mosaic_0001>
module attributes {stable_mosaic.version = 11 : i64} {
  func.func @_decoder_kernel(%arg0: memref<2x32xf32, #tpu.memory_space<vmem>>, %arg1: memref<32x512xf32, #tpu.memory_space<vmem>>, %arg2: memref<1x512xf32, #tpu.memory_space<vmem>>, %arg3: memref<72x16xf32, #tpu.memory_space<vmem>>, %arg4: memref<1x16xf32, #tpu.memory_space<vmem>>, %arg5: memref<144x32xf32, #tpu.memory_space<vmem>>, %arg6: memref<1x32xf32, #tpu.memory_space<vmem>>, %arg7: memref<288x1xf32, #tpu.memory_space<vmem>>, %arg8: memref<1x1xf32, #tpu.memory_space<vmem>>, %arg9: memref<128x1xf32, #tpu.memory_space<vmem>>, %arg10: memref<2x10x10x8xf32, #tpu.memory_space<vmem>>, %arg11: memref<2x10x10x16xf32, #tpu.memory_space<vmem>>, %arg12: memref<2x10x10x32xf32, #tpu.memory_space<vmem>>) attributes {dimension_semantics = [], scalar_prefetch = 0 : i64, scratch_operands = 3 : i64, tpu.core_type = #tpu.core_type<tc>} {
    %c0 = arith.constant 0 : index
    %c0_0 = arith.constant 0 : index
    %0 = vector.load %arg0[%c0, %c0_0] : memref<2x32xf32, #tpu.memory_space<vmem>>, vector<2x32xf32>
    %c0_1 = arith.constant 0 : index
    %c0_2 = arith.constant 0 : index
    %1 = vector.load %arg1[%c0_1, %c0_2] : memref<32x512xf32, #tpu.memory_space<vmem>>, vector<32x512xf32>
    %cst = arith.constant dense<0.000000e+00> : vector<2x512xf32>
    %2 = tpu.matmul %0, %1, %cst {dimension_numbers = #tpu.dot_dimension_numbers<[1], [0], [0], [1], [0, 0, 1, 1], [], []>} : vector<2x32xf32>, vector<32x512xf32>, vector<2x512xf32> -> vector<2x512xf32>
    %c0_3 = arith.constant 0 : index
    %c0_4 = arith.constant 0 : index
    %3 = vector.load %arg2[%c0_3, %c0_4] : memref<1x512xf32, #tpu.memory_space<vmem>>, vector<1x512xf32>
    %4 = vector.broadcast %3 : vector<1x512xf32> to vector<2x512xf32>
    %5 = arith.addf %2, %4 : vector<2x512xf32>
    %cst_5 = arith.constant 0.000000e+00 : f32
    %6 = vector.broadcast %cst_5 : f32 to vector<2x512xf32>
    %7 = arith.maximumf %5, %6 : vector<2x512xf32>
    %cst_6 = arith.constant 0.000000e+00 : f32
    %8 = vector.broadcast %cst_6 : f32 to vector<2x10x10x8xf32>
    %c0_7 = arith.constant 0 : index
    %c0_8 = arith.constant 0 : index
    %c0_9 = arith.constant 0 : index
    %c0_10 = arith.constant 0 : index
    %9 = vector.load %arg10[%c0_7, %c0_8, %c0_9, %c0_10] : memref<2x10x10x8xf32, #tpu.memory_space<vmem>>, vector<2x10x10x8xf32>
    tpu.vector_store %arg10[%c0_7, %c0_8, %c0_9, %c0_10], %8 {strides = array<i32>} : memref<2x10x10x8xf32, #tpu.memory_space<vmem>>, vector<2x10x10x8xf32>,
    %10 = vector.extract_strided_slice %7 {offsets = [0, 0], sizes = [2, 8], strides = [1, 1]} : vector<2x512xf32> to vector<2x8xf32>
    %c0_11 = arith.constant 0 : index
    %c1 = arith.constant 1 : index
    %c1_12 = arith.constant 1 : index
    %c0_13 = arith.constant 0 : index
    %11 = vector.load %arg10[%c0_11, %c1, %c1_12, %c0_13] : memref<2x10x10x8xf32, #tpu.memory_space<vmem>>, vector<2x1x1x8xf32>
    %12 = vector.shape_cast %11 : vector<2x1x1x8xf32> to vector<2x8xf32>
    %13 = vector.shape_cast %10 : vector<2x8xf32> to vector<2x1x1x8xf32>
    tpu.vector_store %arg10[%c0_11, %c1, %c1_12, %c0_13], %13 {strides = array<i32>} : memref<2x10x10x8xf32, #tpu.memory_space<vmem>>, vector<2x1x1x8xf32>,
    %14 = vector.extract_strided_slice %7 {offsets = [0, 8], sizes = [2, 8], strides = [1, 1]} : vector<2x512xf32> to vector<2x8xf32>
    %c0_14 = arith.constant 0 : index
    %c1_15 = arith.constant 1 : index
    %c2 = arith.constant 2 : index
    %c0_16 = arith.constant 0 : index
    %15 = vector.load %arg10[%c0_14, %c1_15, %c2, %c0_16] : memref<2x10x10x8xf32, #tpu.memory_space<vmem>>, vector<2x1x1x8xf32>
    %16 = vector.shape_cast %15 : vector<2x1x1x8xf32> to vector<2x8xf32>
    %17 = vector.shape_cast %14 : vector<2x8xf32> to vector<2x1x1x8xf32>
    tpu.vector_store %arg10[%c0_14, %c1_15, %c2, %c0_16], %17 {strides = array<i32>} : memref<2x10x10x8xf32, #tpu.memory_space<vmem>>, vector<2x1x1x8xf32>,
    %18 = vector.extract_strided_slice %7 {offsets = [0, 16], sizes = [2, 8], strides = [1, 1]} : vector<2x512xf32> to vector<2x8xf32>
    %c0_17 = arith.constant 0 : index
    %c1_18 = arith.constant 1 : index
    %c3 = arith.constant 3 : index
    %c0_19 = arith.constant 0 : index
    %19 = vector.load %arg10[%c0_17, %c1_18, %c3, %c0_19] : memref<2x10x10x8xf32, #tpu.memory_space<vmem>>, vector<2x1x1x8xf32>
    %20 = vector.shape_cast %19 : vector<2x1x1x8xf32> to vector<2x8xf32>
    %21 = vector.shape_cast %18 : vector<2x8xf32> to vector<2x1x1x8xf32>
    tpu.vector_store %arg10[%c0_17, %c1_18, %c3, %c0_19], %21 {strides = array<i32>} : memref<2x10x10x8xf32, #tpu.memory_space<vmem>>, vector<2x1x1x8xf32>,
    %22 = vector.extract_strided_slice %7 {offsets = [0, 24], sizes = [2, 8], strides = [1, 1]} : vector<2x512xf32> to vector<2x8xf32>
    %c0_20 = arith.constant 0 : index
    %c1_21 = arith.constant 1 : index
    %c4 = arith.constant 4 : index
    %c0_22 = arith.constant 0 : index
    %23 = vector.load %arg10[%c0_20, %c1_21, %c4, %c0_22] : memref<2x10x10x8xf32, #tpu.memory_space<vmem>>, vector<2x1x1x8xf32>
    %24 = vector.shape_cast %23 : vector<2x1x1x8xf32> to vector<2x8xf32>
    %25 = vector.shape_cast %22 : vector<2x8xf32> to vector<2x1x1x8xf32>
    tpu.vector_store %arg10[%c0_20, %c1_21, %c4, %c0_22], %25 {strides = array<i32>} : memref<2x10x10x8xf32, #tpu.memory_space<vmem>>, vector<2x1x1x8xf32>,
    %26 = vector.extract_strided_slice %7 {offsets = [0, 32], sizes = [2, 8], strides = [1, 1]} : vector<2x512xf32> to vector<2x8xf32>
    %c0_23 = arith.constant 0 : index
    %c1_24 = arith.constant 1 : index
    %c5 = arith.constant 5 : index
    %c0_25 = arith.constant 0 : index
    %27 = vector.load %arg10[%c0_23, %c1_24, %c5, %c0_25] : memref<2x10x10x8xf32, #tpu.memory_space<vmem>>, vector<2x1x1x8xf32>
    %28 = vector.shape_cast %27 : vector<2x1x1x8xf32> to vector<2x8xf32>
    %29 = vector.shape_cast %26 : vector<2x8xf32> to vector<2x1x1x8xf32>
    tpu.vector_store %arg10[%c0_23, %c1_24, %c5, %c0_25], %29 {strides = array<i32>} : memref<2x10x10x8xf32, #tpu.memory_space<vmem>>, vector<2x1x1x8xf32>,
    %30 = vector.extract_strided_slice %7 {offsets = [0, 40], sizes = [2, 8], strides = [1, 1]} : vector<2x512xf32> to vector<2x8xf32>
    %c0_26 = arith.constant 0 : index
    %c1_27 = arith.constant 1 : index
    %c6 = arith.constant 6 : index
    %c0_28 = arith.constant 0 : index
    %31 = vector.load %arg10[%c0_26, %c1_27, %c6, %c0_28] : memref<2x10x10x8xf32, #tpu.memory_space<vmem>>, vector<2x1x1x8xf32>
    %32 = vector.shape_cast %31 : vector<2x1x1x8xf32> to vector<2x8xf32>
    %33 = vector.shape_cast %30 : vector<2x8xf32> to vector<2x1x1x8xf32>
    tpu.vector_store %arg10[%c0_26, %c1_27, %c6, %c0_28], %33 {strides = array<i32>} : memref<2x10x10x8xf32, #tpu.memory_space<vmem>>, vector<2x1x1x8xf32>,
    %34 = vector.extract_strided_slice %7 {offsets = [0, 48], sizes = [2, 8], strides = [1, 1]} : vector<2x512xf32> to vector<2x8xf32>
    %c0_29 = arith.constant 0 : index
    %c1_30 = arith.constant 1 : index
    %c7 = arith.constant 7 : index
    %c0_31 = arith.constant 0 : index
    %35 = vector.load %arg10[%c0_29, %c1_30, %c7, %c0_31] : memref<2x10x10x8xf32, #tpu.memory_space<vmem>>, vector<2x1x1x8xf32>
    %36 = vector.shape_cast %35 : vector<2x1x1x8xf32> to vector<2x8xf32>
    %37 = vector.shape_cast %34 : vector<2x8xf32> to vector<2x1x1x8xf32>
    tpu.vector_store %arg10[%c0_29, %c1_30, %c7, %c0_31], %37 {strides = array<i32>} : memref<2x10x10x8xf32, #tpu.memory_space<vmem>>, vector<2x1x1x8xf32>,
    %38 = vector.extract_strided_slice %7 {offsets = [0, 56], sizes = [2, 8], strides = [1, 1]} : vector<2x512xf32> to vector<2x8xf32>
    %c0_32 = arith.constant 0 : index
    %c1_33 = arith.constant 1 : index
    %c8 = arith.constant 8 : index
    %c0_34 = arith.constant 0 : index
    %39 = vector.load %arg10[%c0_32, %c1_33, %c8, %c0_34] : memref<2x10x10x8xf32, #tpu.memory_space<vmem>>, vector<2x1x1x8xf32>
    %40 = vector.shape_cast %39 : vector<2x1x1x8xf32> to vector<2x8xf32>
    %41 = vector.shape_cast %38 : vector<2x8xf32> to vector<2x1x1x8xf32>
    tpu.vector_store %arg10[%c0_32, %c1_33, %c8, %c0_34], %41 {strides = array<i32>} : memref<2x10x10x8xf32, #tpu.memory_space<vmem>>, vector<2x1x1x8xf32>,
    %42 = vector.extract_strided_slice %7 {offsets = [0, 64], sizes = [2, 8], strides = [1, 1]} : vector<2x512xf32> to vector<2x8xf32>
    %c0_35 = arith.constant 0 : index
    %c2_36 = arith.constant 2 : index
    %c1_37 = arith.constant 1 : index
    %c0_38 = arith.constant 0 : index
    %43 = vector.load %arg10[%c0_35, %c2_36, %c1_37, %c0_38] : memref<2x10x10x8xf32, #tpu.memory_space<vmem>>, vector<2x1x1x8xf32>
    %44 = vector.shape_cast %43 : vector<2x1x1x8xf32> to vector<2x8xf32>
    %45 = vector.shape_cast %42 : vector<2x8xf32> to vector<2x1x1x8xf32>
    tpu.vector_store %arg10[%c0_35, %c2_36, %c1_37, %c0_38], %45 {strides = array<i32>} : memref<2x10x10x8xf32, #tpu.memory_space<vmem>>, vector<2x1x1x8xf32>,
    %46 = vector.extract_strided_slice %7 {offsets = [0, 72], sizes = [2, 8], strides = [1, 1]} : vector<2x512xf32> to vector<2x8xf32>
    %c0_39 = arith.constant 0 : index
    %c2_40 = arith.constant 2 : index
    %c2_41 = arith.constant 2 : index
    %c0_42 = arith.constant 0 : index
    %47 = vector.load %arg10[%c0_39, %c2_40, %c2_41, %c0_42] : memref<2x10x10x8xf32, #tpu.memory_space<vmem>>, vector<2x1x1x8xf32>
    %48 = vector.shape_cast %47 : vector<2x1x1x8xf32> to vector<2x8xf32>
    %49 = vector.shape_cast %46 : vector<2x8xf32> to vector<2x1x1x8xf32>
    tpu.vector_store %arg10[%c0_39, %c2_40, %c2_41, %c0_42], %49 {strides = array<i32>} : memref<2x10x10x8xf32, #tpu.memory_space<vmem>>, vector<2x1x1x8xf32>,
    %50 = vector.extract_strided_slice %7 {offsets = [0, 80], sizes = [2, 8], strides = [1, 1]} : vector<2x512xf32> to vector<2x8xf32>
    %c0_43 = arith.constant 0 : index
    %c2_44 = arith.constant 2 : index
    %c3_45 = arith.constant 3 : index
    %c0_46 = arith.constant 0 : index
    %51 = vector.load %arg10[%c0_43, %c2_44, %c3_45, %c0_46] : memref<2x10x10x8xf32, #tpu.memory_space<vmem>>, vector<2x1x1x8xf32>
    %52 = vector.shape_cast %51 : vector<2x1x1x8xf32> to vector<2x8xf32>
    %53 = vector.shape_cast %50 : vector<2x8xf32> to vector<2x1x1x8xf32>
    tpu.vector_store %arg10[%c0_43, %c2_44, %c3_45, %c0_46], %53 {strides = array<i32>} : memref<2x10x10x8xf32, #tpu.memory_space<vmem>>, vector<2x1x1x8xf32>,
    %54 = vector.extract_strided_slice %7 {offsets = [0, 88], sizes = [2, 8], strides = [1, 1]} : vector<2x512xf32> to vector<2x8xf32>
    %c0_47 = arith.constant 0 : index
    %c2_48 = arith.constant 2 : index
    %c4_49 = arith.constant 4 : index
    %c0_50 = arith.constant 0 : index
    %55 = vector.load %arg10[%c0_47, %c2_48, %c4_49, %c0_50] : memref<2x10x10x8xf32, #tpu.memory_space<vmem>>, vector<2x1x1x8xf32>
    %56 = vector.shape_cast %55 : vector<2x1x1x8xf32> to vector<2x8xf32>
    %57 = vector.shape_cast %54 : vector<2x8xf32> to vector<2x1x1x8xf32>
    tpu.vector_store %arg10[%c0_47, %c2_48, %c4_49, %c0_50], %57 {strides = array<i32>} : memref<2x10x10x8xf32, #tpu.memory_space<vmem>>, vector<2x1x1x8xf32>,
    %58 = vector.extract_strided_slice %7 {offsets = [0, 96], sizes = [2, 8], strides = [1, 1]} : vector<2x512xf32> to vector<2x8xf32>
    %c0_51 = arith.constant 0 : index
    %c2_52 = arith.constant 2 : index
    %c5_53 = arith.constant 5 : index
    %c0_54 = arith.constant 0 : index
    %59 = vector.load %arg10[%c0_51, %c2_52, %c5_53, %c0_54] : memref<2x10x10x8xf32, #tpu.memory_space<vmem>>, vector<2x1x1x8xf32>
    %60 = vector.shape_cast %59 : vector<2x1x1x8xf32> to vector<2x8xf32>
    %61 = vector.shape_cast %58 : vector<2x8xf32> to vector<2x1x1x8xf32>
    tpu.vector_store %arg10[%c0_51, %c2_52, %c5_53, %c0_54], %61 {strides = array<i32>} : memref<2x10x10x8xf32, #tpu.memory_space<vmem>>, vector<2x1x1x8xf32>,
    %62 = vector.extract_strided_slice %7 {offsets = [0, 104], sizes = [2, 8], strides = [1, 1]} : vector<2x512xf32> to vector<2x8xf32>
    %c0_55 = arith.constant 0 : index
    %c2_56 = arith.constant 2 : index
    %c6_57 = arith.constant 6 : index
    %c0_58 = arith.constant 0 : index
    %63 = vector.load %arg10[%c0_55, %c2_56, %c6_57, %c0_58] : memref<2x10x10x8xf32, #tpu.memory_space<vmem>>, vector<2x1x1x8xf32>
    %64 = vector.shape_cast %63 : vector<2x1x1x8xf32> to vector<2x8xf32>
    %65 = vector.shape_cast %62 : vector<2x8xf32> to vector<2x1x1x8xf32>
    tpu.vector_store %arg10[%c0_55, %c2_56, %c6_57, %c0_58], %65 {strides = array<i32>} : memref<2x10x10x8xf32, #tpu.memory_space<vmem>>, vector<2x1x1x8xf32>,
    %66 = vector.extract_strided_slice %7 {offsets = [0, 112], sizes = [2, 8], strides = [1, 1]} : vector<2x512xf32> to vector<2x8xf32>
    %c0_59 = arith.constant 0 : index
    %c2_60 = arith.constant 2 : index
    %c7_61 = arith.constant 7 : index
    %c0_62 = arith.constant 0 : index
    %67 = vector.load %arg10[%c0_59, %c2_60, %c7_61, %c0_62] : memref<2x10x10x8xf32, #tpu.memory_space<vmem>>, vector<2x1x1x8xf32>
    %68 = vector.shape_cast %67 : vector<2x1x1x8xf32> to vector<2x8xf32>
    %69 = vector.shape_cast %66 : vector<2x8xf32> to vector<2x1x1x8xf32>
    tpu.vector_store %arg10[%c0_59, %c2_60, %c7_61, %c0_62], %69 {strides = array<i32>} : memref<2x10x10x8xf32, #tpu.memory_space<vmem>>, vector<2x1x1x8xf32>,
    %70 = vector.extract_strided_slice %7 {offsets = [0, 120], sizes = [2, 8], strides = [1, 1]} : vector<2x512xf32> to vector<2x8xf32>
    %c0_63 = arith.constant 0 : index
    %c2_64 = arith.constant 2 : index
    %c8_65 = arith.constant 8 : index
    %c0_66 = arith.constant 0 : index
    %71 = vector.load %arg10[%c0_63, %c2_64, %c8_65, %c0_66] : memref<2x10x10x8xf32, #tpu.memory_space<vmem>>, vector<2x1x1x8xf32>
    %72 = vector.shape_cast %71 : vector<2x1x1x8xf32> to vector<2x8xf32>
    %73 = vector.shape_cast %70 : vector<2x8xf32> to vector<2x1x1x8xf32>
    tpu.vector_store %arg10[%c0_63, %c2_64, %c8_65, %c0_66], %73 {strides = array<i32>} : memref<2x10x10x8xf32, #tpu.memory_space<vmem>>, vector<2x1x1x8xf32>,
    %74 = vector.extract_strided_slice %7 {offsets = [0, 128], sizes = [2, 8], strides = [1, 1]} : vector<2x512xf32> to vector<2x8xf32>
    %c0_67 = arith.constant 0 : index
    %c3_68 = arith.constant 3 : index
    %c1_69 = arith.constant 1 : index
    %c0_70 = arith.constant 0 : index
    %75 = vector.load %arg10[%c0_67, %c3_68, %c1_69, %c0_70] : memref<2x10x10x8xf32, #tpu.memory_space<vmem>>, vector<2x1x1x8xf32>
    %76 = vector.shape_cast %75 : vector<2x1x1x8xf32> to vector<2x8xf32>
    %77 = vector.shape_cast %74 : vector<2x8xf32> to vector<2x1x1x8xf32>
    tpu.vector_store %arg10[%c0_67, %c3_68, %c1_69, %c0_70], %77 {strides = array<i32>} : memref<2x10x10x8xf32, #tpu.memory_space<vmem>>, vector<2x1x1x8xf32>,
    %78 = vector.extract_strided_slice %7 {offsets = [0, 136], sizes = [2, 8], strides = [1, 1]} : vector<2x512xf32> to vector<2x8xf32>
    %c0_71 = arith.constant 0 : index
    %c3_72 = arith.constant 3 : index
    %c2_73 = arith.constant 2 : index
    %c0_74 = arith.constant 0 : index
    %79 = vector.load %arg10[%c0_71, %c3_72, %c2_73, %c0_74] : memref<2x10x10x8xf32, #tpu.memory_space<vmem>>, vector<2x1x1x8xf32>
    %80 = vector.shape_cast %79 : vector<2x1x1x8xf32> to vector<2x8xf32>
    %81 = vector.shape_cast %78 : vector<2x8xf32> to vector<2x1x1x8xf32>
    tpu.vector_store %arg10[%c0_71, %c3_72, %c2_73, %c0_74], %81 {strides = array<i32>} : memref<2x10x10x8xf32, #tpu.memory_space<vmem>>, vector<2x1x1x8xf32>,
    %82 = vector.extract_strided_slice %7 {offsets = [0, 144], sizes = [2, 8], strides = [1, 1]} : vector<2x512xf32> to vector<2x8xf32>
    %c0_75 = arith.constant 0 : index
    %c3_76 = arith.constant 3 : index
    %c3_77 = arith.constant 3 : index
    %c0_78 = arith.constant 0 : index
    %83 = vector.load %arg10[%c0_75, %c3_76, %c3_77, %c0_78] : memref<2x10x10x8xf32, #tpu.memory_space<vmem>>, vector<2x1x1x8xf32>
    %84 = vector.shape_cast %83 : vector<2x1x1x8xf32> to vector<2x8xf32>
    %85 = vector.shape_cast %82 : vector<2x8xf32> to vector<2x1x1x8xf32>
    tpu.vector_store %arg10[%c0_75, %c3_76, %c3_77, %c0_78], %85 {strides = array<i32>} : memref<2x10x10x8xf32, #tpu.memory_space<vmem>>, vector<2x1x1x8xf32>,
    %86 = vector.extract_strided_slice %7 {offsets = [0, 152], sizes = [2, 8], strides = [1, 1]} : vector<2x512xf32> to vector<2x8xf32>
    %c0_79 = arith.constant 0 : index
    %c3_80 = arith.constant 3 : index
    %c4_81 = arith.constant 4 : index
    %c0_82 = arith.constant 0 : index
    %87 = vector.load %arg10[%c0_79, %c3_80, %c4_81, %c0_82] : memref<2x10x10x8xf32, #tpu.memory_space<vmem>>, vector<2x1x1x8xf32>
    %88 = vector.shape_cast %87 : vector<2x1x1x8xf32> to vector<2x8xf32>
    %89 = vector.shape_cast %86 : vector<2x8xf32> to vector<2x1x1x8xf32>
    tpu.vector_store %arg10[%c0_79, %c3_80, %c4_81, %c0_82], %89 {strides = array<i32>} : memref<2x10x10x8xf32, #tpu.memory_space<vmem>>, vector<2x1x1x8xf32>,
    %90 = vector.extract_strided_slice %7 {offsets = [0, 160], sizes = [2, 8], strides = [1, 1]} : vector<2x512xf32> to vector<2x8xf32>
    %c0_83 = arith.constant 0 : index
    %c3_84 = arith.constant 3 : index
    %c5_85 = arith.constant 5 : index
    %c0_86 = arith.constant 0 : index
    %91 = vector.load %arg10[%c0_83, %c3_84, %c5_85, %c0_86] : memref<2x10x10x8xf32, #tpu.memory_space<vmem>>, vector<2x1x1x8xf32>
    %92 = vector.shape_cast %91 : vector<2x1x1x8xf32> to vector<2x8xf32>
    %93 = vector.shape_cast %90 : vector<2x8xf32> to vector<2x1x1x8xf32>
    tpu.vector_store %arg10[%c0_83, %c3_84, %c5_85, %c0_86], %93 {strides = array<i32>} : memref<2x10x10x8xf32, #tpu.memory_space<vmem>>, vector<2x1x1x8xf32>,
    %94 = vector.extract_strided_slice %7 {offsets = [0, 168], sizes = [2, 8], strides = [1, 1]} : vector<2x512xf32> to vector<2x8xf32>
    %c0_87 = arith.constant 0 : index
    %c3_88 = arith.constant 3 : index
    %c6_89 = arith.constant 6 : index
    %c0_90 = arith.constant 0 : index
    %95 = vector.load %arg10[%c0_87, %c3_88, %c6_89, %c0_90] : memref<2x10x10x8xf32, #tpu.memory_space<vmem>>, vector<2x1x1x8xf32>
    %96 = vector.shape_cast %95 : vector<2x1x1x8xf32> to vector<2x8xf32>
    %97 = vector.shape_cast %94 : vector<2x8xf32> to vector<2x1x1x8xf32>
    tpu.vector_store %arg10[%c0_87, %c3_88, %c6_89, %c0_90], %97 {strides = array<i32>} : memref<2x10x10x8xf32, #tpu.memory_space<vmem>>, vector<2x1x1x8xf32>,
    %98 = vector.extract_strided_slice %7 {offsets = [0, 176], sizes = [2, 8], strides = [1, 1]} : vector<2x512xf32> to vector<2x8xf32>
    %c0_91 = arith.constant 0 : index
    %c3_92 = arith.constant 3 : index
    %c7_93 = arith.constant 7 : index
    %c0_94 = arith.constant 0 : index
    %99 = vector.load %arg10[%c0_91, %c3_92, %c7_93, %c0_94] : memref<2x10x10x8xf32, #tpu.memory_space<vmem>>, vector<2x1x1x8xf32>
    %100 = vector.shape_cast %99 : vector<2x1x1x8xf32> to vector<2x8xf32>
    %101 = vector.shape_cast %98 : vector<2x8xf32> to vector<2x1x1x8xf32>
    tpu.vector_store %arg10[%c0_91, %c3_92, %c7_93, %c0_94], %101 {strides = array<i32>} : memref<2x10x10x8xf32, #tpu.memory_space<vmem>>, vector<2x1x1x8xf32>,
    %102 = vector.extract_strided_slice %7 {offsets = [0, 184], sizes = [2, 8], strides = [1, 1]} : vector<2x512xf32> to vector<2x8xf32>
    %c0_95 = arith.constant 0 : index
    %c3_96 = arith.constant 3 : index
    %c8_97 = arith.constant 8 : index
    %c0_98 = arith.constant 0 : index
    %103 = vector.load %arg10[%c0_95, %c3_96, %c8_97, %c0_98] : memref<2x10x10x8xf32, #tpu.memory_space<vmem>>, vector<2x1x1x8xf32>
    %104 = vector.shape_cast %103 : vector<2x1x1x8xf32> to vector<2x8xf32>
    %105 = vector.shape_cast %102 : vector<2x8xf32> to vector<2x1x1x8xf32>
    tpu.vector_store %arg10[%c0_95, %c3_96, %c8_97, %c0_98], %105 {strides = array<i32>} : memref<2x10x10x8xf32, #tpu.memory_space<vmem>>, vector<2x1x1x8xf32>,
    %106 = vector.extract_strided_slice %7 {offsets = [0, 192], sizes = [2, 8], strides = [1, 1]} : vector<2x512xf32> to vector<2x8xf32>
    %c0_99 = arith.constant 0 : index
    %c4_100 = arith.constant 4 : index
    %c1_101 = arith.constant 1 : index
    %c0_102 = arith.constant 0 : index
    %107 = vector.load %arg10[%c0_99, %c4_100, %c1_101, %c0_102] : memref<2x10x10x8xf32, #tpu.memory_space<vmem>>, vector<2x1x1x8xf32>
    %108 = vector.shape_cast %107 : vector<2x1x1x8xf32> to vector<2x8xf32>
    %109 = vector.shape_cast %106 : vector<2x8xf32> to vector<2x1x1x8xf32>
    tpu.vector_store %arg10[%c0_99, %c4_100, %c1_101, %c0_102], %109 {strides = array<i32>} : memref<2x10x10x8xf32, #tpu.memory_space<vmem>>, vector<2x1x1x8xf32>,
    %110 = vector.extract_strided_slice %7 {offsets = [0, 200], sizes = [2, 8], strides = [1, 1]} : vector<2x512xf32> to vector<2x8xf32>
    %c0_103 = arith.constant 0 : index
    %c4_104 = arith.constant 4 : index
    %c2_105 = arith.constant 2 : index
    %c0_106 = arith.constant 0 : index
    %111 = vector.load %arg10[%c0_103, %c4_104, %c2_105, %c0_106] : memref<2x10x10x8xf32, #tpu.memory_space<vmem>>, vector<2x1x1x8xf32>
    %112 = vector.shape_cast %111 : vector<2x1x1x8xf32> to vector<2x8xf32>
    %113 = vector.shape_cast %110 : vector<2x8xf32> to vector<2x1x1x8xf32>
    tpu.vector_store %arg10[%c0_103, %c4_104, %c2_105, %c0_106], %113 {strides = array<i32>} : memref<2x10x10x8xf32, #tpu.memory_space<vmem>>, vector<2x1x1x8xf32>,
    %114 = vector.extract_strided_slice %7 {offsets = [0, 208], sizes = [2, 8], strides = [1, 1]} : vector<2x512xf32> to vector<2x8xf32>
    %c0_107 = arith.constant 0 : index
    %c4_108 = arith.constant 4 : index
    %c3_109 = arith.constant 3 : index
    %c0_110 = arith.constant 0 : index
    %115 = vector.load %arg10[%c0_107, %c4_108, %c3_109, %c0_110] : memref<2x10x10x8xf32, #tpu.memory_space<vmem>>, vector<2x1x1x8xf32>
    %116 = vector.shape_cast %115 : vector<2x1x1x8xf32> to vector<2x8xf32>
    %117 = vector.shape_cast %114 : vector<2x8xf32> to vector<2x1x1x8xf32>
    tpu.vector_store %arg10[%c0_107, %c4_108, %c3_109, %c0_110], %117 {strides = array<i32>} : memref<2x10x10x8xf32, #tpu.memory_space<vmem>>, vector<2x1x1x8xf32>,
    %118 = vector.extract_strided_slice %7 {offsets = [0, 216], sizes = [2, 8], strides = [1, 1]} : vector<2x512xf32> to vector<2x8xf32>
    %c0_111 = arith.constant 0 : index
    %c4_112 = arith.constant 4 : index
    %c4_113 = arith.constant 4 : index
    %c0_114 = arith.constant 0 : index
    %119 = vector.load %arg10[%c0_111, %c4_112, %c4_113, %c0_114] : memref<2x10x10x8xf32, #tpu.memory_space<vmem>>, vector<2x1x1x8xf32>
    %120 = vector.shape_cast %119 : vector<2x1x1x8xf32> to vector<2x8xf32>
    %121 = vector.shape_cast %118 : vector<2x8xf32> to vector<2x1x1x8xf32>
    tpu.vector_store %arg10[%c0_111, %c4_112, %c4_113, %c0_114], %121 {strides = array<i32>} : memref<2x10x10x8xf32, #tpu.memory_space<vmem>>, vector<2x1x1x8xf32>,
    %122 = vector.extract_strided_slice %7 {offsets = [0, 224], sizes = [2, 8], strides = [1, 1]} : vector<2x512xf32> to vector<2x8xf32>
    %c0_115 = arith.constant 0 : index
    %c4_116 = arith.constant 4 : index
    %c5_117 = arith.constant 5 : index
    %c0_118 = arith.constant 0 : index
    %123 = vector.load %arg10[%c0_115, %c4_116, %c5_117, %c0_118] : memref<2x10x10x8xf32, #tpu.memory_space<vmem>>, vector<2x1x1x8xf32>
    %124 = vector.shape_cast %123 : vector<2x1x1x8xf32> to vector<2x8xf32>
    %125 = vector.shape_cast %122 : vector<2x8xf32> to vector<2x1x1x8xf32>
    tpu.vector_store %arg10[%c0_115, %c4_116, %c5_117, %c0_118], %125 {strides = array<i32>} : memref<2x10x10x8xf32, #tpu.memory_space<vmem>>, vector<2x1x1x8xf32>,
    %126 = vector.extract_strided_slice %7 {offsets = [0, 232], sizes = [2, 8], strides = [1, 1]} : vector<2x512xf32> to vector<2x8xf32>
    %c0_119 = arith.constant 0 : index
    %c4_120 = arith.constant 4 : index
    %c6_121 = arith.constant 6 : index
    %c0_122 = arith.constant 0 : index
    %127 = vector.load %arg10[%c0_119, %c4_120, %c6_121, %c0_122] : memref<2x10x10x8xf32, #tpu.memory_space<vmem>>, vector<2x1x1x8xf32>
    %128 = vector.shape_cast %127 : vector<2x1x1x8xf32> to vector<2x8xf32>
    %129 = vector.shape_cast %126 : vector<2x8xf32> to vector<2x1x1x8xf32>
    tpu.vector_store %arg10[%c0_119, %c4_120, %c6_121, %c0_122], %129 {strides = array<i32>} : memref<2x10x10x8xf32, #tpu.memory_space<vmem>>, vector<2x1x1x8xf32>,
    %130 = vector.extract_strided_slice %7 {offsets = [0, 240], sizes = [2, 8], strides = [1, 1]} : vector<2x512xf32> to vector<2x8xf32>
    %c0_123 = arith.constant 0 : index
    %c4_124 = arith.constant 4 : index
    %c7_125 = arith.constant 7 : index
    %c0_126 = arith.constant 0 : index
    %131 = vector.load %arg10[%c0_123, %c4_124, %c7_125, %c0_126] : memref<2x10x10x8xf32, #tpu.memory_space<vmem>>, vector<2x1x1x8xf32>
    %132 = vector.shape_cast %131 : vector<2x1x1x8xf32> to vector<2x8xf32>
    %133 = vector.shape_cast %130 : vector<2x8xf32> to vector<2x1x1x8xf32>
    tpu.vector_store %arg10[%c0_123, %c4_124, %c7_125, %c0_126], %133 {strides = array<i32>} : memref<2x10x10x8xf32, #tpu.memory_space<vmem>>, vector<2x1x1x8xf32>,
    %134 = vector.extract_strided_slice %7 {offsets = [0, 248], sizes = [2, 8], strides = [1, 1]} : vector<2x512xf32> to vector<2x8xf32>
    %c0_127 = arith.constant 0 : index
    %c4_128 = arith.constant 4 : index
    %c8_129 = arith.constant 8 : index
    %c0_130 = arith.constant 0 : index
    %135 = vector.load %arg10[%c0_127, %c4_128, %c8_129, %c0_130] : memref<2x10x10x8xf32, #tpu.memory_space<vmem>>, vector<2x1x1x8xf32>
    %136 = vector.shape_cast %135 : vector<2x1x1x8xf32> to vector<2x8xf32>
    %137 = vector.shape_cast %134 : vector<2x8xf32> to vector<2x1x1x8xf32>
    tpu.vector_store %arg10[%c0_127, %c4_128, %c8_129, %c0_130], %137 {strides = array<i32>} : memref<2x10x10x8xf32, #tpu.memory_space<vmem>>, vector<2x1x1x8xf32>,
    %138 = vector.extract_strided_slice %7 {offsets = [0, 256], sizes = [2, 8], strides = [1, 1]} : vector<2x512xf32> to vector<2x8xf32>
    %c0_131 = arith.constant 0 : index
    %c5_132 = arith.constant 5 : index
    %c1_133 = arith.constant 1 : index
    %c0_134 = arith.constant 0 : index
    %139 = vector.load %arg10[%c0_131, %c5_132, %c1_133, %c0_134] : memref<2x10x10x8xf32, #tpu.memory_space<vmem>>, vector<2x1x1x8xf32>
    %140 = vector.shape_cast %139 : vector<2x1x1x8xf32> to vector<2x8xf32>
    %141 = vector.shape_cast %138 : vector<2x8xf32> to vector<2x1x1x8xf32>
    tpu.vector_store %arg10[%c0_131, %c5_132, %c1_133, %c0_134], %141 {strides = array<i32>} : memref<2x10x10x8xf32, #tpu.memory_space<vmem>>, vector<2x1x1x8xf32>,
    %142 = vector.extract_strided_slice %7 {offsets = [0, 264], sizes = [2, 8], strides = [1, 1]} : vector<2x512xf32> to vector<2x8xf32>
    %c0_135 = arith.constant 0 : index
    %c5_136 = arith.constant 5 : index
    %c2_137 = arith.constant 2 : index
    %c0_138 = arith.constant 0 : index
    %143 = vector.load %arg10[%c0_135, %c5_136, %c2_137, %c0_138] : memref<2x10x10x8xf32, #tpu.memory_space<vmem>>, vector<2x1x1x8xf32>
    %144 = vector.shape_cast %143 : vector<2x1x1x8xf32> to vector<2x8xf32>
    %145 = vector.shape_cast %142 : vector<2x8xf32> to vector<2x1x1x8xf32>
    tpu.vector_store %arg10[%c0_135, %c5_136, %c2_137, %c0_138], %145 {strides = array<i32>} : memref<2x10x10x8xf32, #tpu.memory_space<vmem>>, vector<2x1x1x8xf32>,
    %146 = vector.extract_strided_slice %7 {offsets = [0, 272], sizes = [2, 8], strides = [1, 1]} : vector<2x512xf32> to vector<2x8xf32>
    %c0_139 = arith.constant 0 : index
    %c5_140 = arith.constant 5 : index
    %c3_141 = arith.constant 3 : index
    %c0_142 = arith.constant 0 : index
    %147 = vector.load %arg10[%c0_139, %c5_140, %c3_141, %c0_142] : memref<2x10x10x8xf32, #tpu.memory_space<vmem>>, vector<2x1x1x8xf32>
    %148 = vector.shape_cast %147 : vector<2x1x1x8xf32> to vector<2x8xf32>
    %149 = vector.shape_cast %146 : vector<2x8xf32> to vector<2x1x1x8xf32>
    tpu.vector_store %arg10[%c0_139, %c5_140, %c3_141, %c0_142], %149 {strides = array<i32>} : memref<2x10x10x8xf32, #tpu.memory_space<vmem>>, vector<2x1x1x8xf32>,
    %150 = vector.extract_strided_slice %7 {offsets = [0, 280], sizes = [2, 8], strides = [1, 1]} : vector<2x512xf32> to vector<2x8xf32>
    %c0_143 = arith.constant 0 : index
    %c5_144 = arith.constant 5 : index
    %c4_145 = arith.constant 4 : index
    %c0_146 = arith.constant 0 : index
    %151 = vector.load %arg10[%c0_143, %c5_144, %c4_145, %c0_146] : memref<2x10x10x8xf32, #tpu.memory_space<vmem>>, vector<2x1x1x8xf32>
    %152 = vector.shape_cast %151 : vector<2x1x1x8xf32> to vector<2x8xf32>
    %153 = vector.shape_cast %150 : vector<2x8xf32> to vector<2x1x1x8xf32>
    tpu.vector_store %arg10[%c0_143, %c5_144, %c4_145, %c0_146], %153 {strides = array<i32>} : memref<2x10x10x8xf32, #tpu.memory_space<vmem>>, vector<2x1x1x8xf32>,
    %154 = vector.extract_strided_slice %7 {offsets = [0, 288], sizes = [2, 8], strides = [1, 1]} : vector<2x512xf32> to vector<2x8xf32>
    %c0_147 = arith.constant 0 : index
    %c5_148 = arith.constant 5 : index
    %c5_149 = arith.constant 5 : index
    %c0_150 = arith.constant 0 : index
    %155 = vector.load %arg10[%c0_147, %c5_148, %c5_149, %c0_150] : memref<2x10x10x8xf32, #tpu.memory_space<vmem>>, vector<2x1x1x8xf32>
    %156 = vector.shape_cast %155 : vector<2x1x1x8xf32> to vector<2x8xf32>
    %157 = vector.shape_cast %154 : vector<2x8xf32> to vector<2x1x1x8xf32>
    tpu.vector_store %arg10[%c0_147, %c5_148, %c5_149, %c0_150], %157 {strides = array<i32>} : memref<2x10x10x8xf32, #tpu.memory_space<vmem>>, vector<2x1x1x8xf32>,
    %158 = vector.extract_strided_slice %7 {offsets = [0, 296], sizes = [2, 8], strides = [1, 1]} : vector<2x512xf32> to vector<2x8xf32>
    %c0_151 = arith.constant 0 : index
    %c5_152 = arith.constant 5 : index
    %c6_153 = arith.constant 6 : index
    %c0_154 = arith.constant 0 : index
    %159 = vector.load %arg10[%c0_151, %c5_152, %c6_153, %c0_154] : memref<2x10x10x8xf32, #tpu.memory_space<vmem>>, vector<2x1x1x8xf32>
    %160 = vector.shape_cast %159 : vector<2x1x1x8xf32> to vector<2x8xf32>
    %161 = vector.shape_cast %158 : vector<2x8xf32> to vector<2x1x1x8xf32>
    tpu.vector_store %arg10[%c0_151, %c5_152, %c6_153, %c0_154], %161 {strides = array<i32>} : memref<2x10x10x8xf32, #tpu.memory_space<vmem>>, vector<2x1x1x8xf32>,
    %162 = vector.extract_strided_slice %7 {offsets = [0, 304], sizes = [2, 8], strides = [1, 1]} : vector<2x512xf32> to vector<2x8xf32>
    %c0_155 = arith.constant 0 : index
    %c5_156 = arith.constant 5 : index
    %c7_157 = arith.constant 7 : index
    %c0_158 = arith.constant 0 : index
    %163 = vector.load %arg10[%c0_155, %c5_156, %c7_157, %c0_158] : memref<2x10x10x8xf32, #tpu.memory_space<vmem>>, vector<2x1x1x8xf32>
    %164 = vector.shape_cast %163 : vector<2x1x1x8xf32> to vector<2x8xf32>
    %165 = vector.shape_cast %162 : vector<2x8xf32> to vector<2x1x1x8xf32>
    tpu.vector_store %arg10[%c0_155, %c5_156, %c7_157, %c0_158], %165 {strides = array<i32>} : memref<2x10x10x8xf32, #tpu.memory_space<vmem>>, vector<2x1x1x8xf32>,
    %166 = vector.extract_strided_slice %7 {offsets = [0, 312], sizes = [2, 8], strides = [1, 1]} : vector<2x512xf32> to vector<2x8xf32>
    %c0_159 = arith.constant 0 : index
    %c5_160 = arith.constant 5 : index
    %c8_161 = arith.constant 8 : index
    %c0_162 = arith.constant 0 : index
    %167 = vector.load %arg10[%c0_159, %c5_160, %c8_161, %c0_162] : memref<2x10x10x8xf32, #tpu.memory_space<vmem>>, vector<2x1x1x8xf32>
    %168 = vector.shape_cast %167 : vector<2x1x1x8xf32> to vector<2x8xf32>
    %169 = vector.shape_cast %166 : vector<2x8xf32> to vector<2x1x1x8xf32>
    tpu.vector_store %arg10[%c0_159, %c5_160, %c8_161, %c0_162], %169 {strides = array<i32>} : memref<2x10x10x8xf32, #tpu.memory_space<vmem>>, vector<2x1x1x8xf32>,
    %170 = vector.extract_strided_slice %7 {offsets = [0, 320], sizes = [2, 8], strides = [1, 1]} : vector<2x512xf32> to vector<2x8xf32>
    %c0_163 = arith.constant 0 : index
    %c6_164 = arith.constant 6 : index
    %c1_165 = arith.constant 1 : index
    %c0_166 = arith.constant 0 : index
    %171 = vector.load %arg10[%c0_163, %c6_164, %c1_165, %c0_166] : memref<2x10x10x8xf32, #tpu.memory_space<vmem>>, vector<2x1x1x8xf32>
    %172 = vector.shape_cast %171 : vector<2x1x1x8xf32> to vector<2x8xf32>
    %173 = vector.shape_cast %170 : vector<2x8xf32> to vector<2x1x1x8xf32>
    tpu.vector_store %arg10[%c0_163, %c6_164, %c1_165, %c0_166], %173 {strides = array<i32>} : memref<2x10x10x8xf32, #tpu.memory_space<vmem>>, vector<2x1x1x8xf32>,
    %174 = vector.extract_strided_slice %7 {offsets = [0, 328], sizes = [2, 8], strides = [1, 1]} : vector<2x512xf32> to vector<2x8xf32>
    %c0_167 = arith.constant 0 : index
    %c6_168 = arith.constant 6 : index
    %c2_169 = arith.constant 2 : index
    %c0_170 = arith.constant 0 : index
    %175 = vector.load %arg10[%c0_167, %c6_168, %c2_169, %c0_170] : memref<2x10x10x8xf32, #tpu.memory_space<vmem>>, vector<2x1x1x8xf32>
    %176 = vector.shape_cast %175 : vector<2x1x1x8xf32> to vector<2x8xf32>
    %177 = vector.shape_cast %174 : vector<2x8xf32> to vector<2x1x1x8xf32>
    tpu.vector_store %arg10[%c0_167, %c6_168, %c2_169, %c0_170], %177 {strides = array<i32>} : memref<2x10x10x8xf32, #tpu.memory_space<vmem>>, vector<2x1x1x8xf32>,
    %178 = vector.extract_strided_slice %7 {offsets = [0, 336], sizes = [2, 8], strides = [1, 1]} : vector<2x512xf32> to vector<2x8xf32>
    %c0_171 = arith.constant 0 : index
    %c6_172 = arith.constant 6 : index
    %c3_173 = arith.constant 3 : index
    %c0_174 = arith.constant 0 : index
    %179 = vector.load %arg10[%c0_171, %c6_172, %c3_173, %c0_174] : memref<2x10x10x8xf32, #tpu.memory_space<vmem>>, vector<2x1x1x8xf32>
    %180 = vector.shape_cast %179 : vector<2x1x1x8xf32> to vector<2x8xf32>
    %181 = vector.shape_cast %178 : vector<2x8xf32> to vector<2x1x1x8xf32>
    tpu.vector_store %arg10[%c0_171, %c6_172, %c3_173, %c0_174], %181 {strides = array<i32>} : memref<2x10x10x8xf32, #tpu.memory_space<vmem>>, vector<2x1x1x8xf32>,
    %182 = vector.extract_strided_slice %7 {offsets = [0, 344], sizes = [2, 8], strides = [1, 1]} : vector<2x512xf32> to vector<2x8xf32>
    %c0_175 = arith.constant 0 : index
    %c6_176 = arith.constant 6 : index
    %c4_177 = arith.constant 4 : index
    %c0_178 = arith.constant 0 : index
    %183 = vector.load %arg10[%c0_175, %c6_176, %c4_177, %c0_178] : memref<2x10x10x8xf32, #tpu.memory_space<vmem>>, vector<2x1x1x8xf32>
    %184 = vector.shape_cast %183 : vector<2x1x1x8xf32> to vector<2x8xf32>
    %185 = vector.shape_cast %182 : vector<2x8xf32> to vector<2x1x1x8xf32>
    tpu.vector_store %arg10[%c0_175, %c6_176, %c4_177, %c0_178], %185 {strides = array<i32>} : memref<2x10x10x8xf32, #tpu.memory_space<vmem>>, vector<2x1x1x8xf32>,
    %186 = vector.extract_strided_slice %7 {offsets = [0, 352], sizes = [2, 8], strides = [1, 1]} : vector<2x512xf32> to vector<2x8xf32>
    %c0_179 = arith.constant 0 : index
    %c6_180 = arith.constant 6 : index
    %c5_181 = arith.constant 5 : index
    %c0_182 = arith.constant 0 : index
    %187 = vector.load %arg10[%c0_179, %c6_180, %c5_181, %c0_182] : memref<2x10x10x8xf32, #tpu.memory_space<vmem>>, vector<2x1x1x8xf32>
    %188 = vector.shape_cast %187 : vector<2x1x1x8xf32> to vector<2x8xf32>
    %189 = vector.shape_cast %186 : vector<2x8xf32> to vector<2x1x1x8xf32>
    tpu.vector_store %arg10[%c0_179, %c6_180, %c5_181, %c0_182], %189 {strides = array<i32>} : memref<2x10x10x8xf32, #tpu.memory_space<vmem>>, vector<2x1x1x8xf32>,
    %190 = vector.extract_strided_slice %7 {offsets = [0, 360], sizes = [2, 8], strides = [1, 1]} : vector<2x512xf32> to vector<2x8xf32>
    %c0_183 = arith.constant 0 : index
    %c6_184 = arith.constant 6 : index
    %c6_185 = arith.constant 6 : index
    %c0_186 = arith.constant 0 : index
    %191 = vector.load %arg10[%c0_183, %c6_184, %c6_185, %c0_186] : memref<2x10x10x8xf32, #tpu.memory_space<vmem>>, vector<2x1x1x8xf32>
    %192 = vector.shape_cast %191 : vector<2x1x1x8xf32> to vector<2x8xf32>
    %193 = vector.shape_cast %190 : vector<2x8xf32> to vector<2x1x1x8xf32>
    tpu.vector_store %arg10[%c0_183, %c6_184, %c6_185, %c0_186], %193 {strides = array<i32>} : memref<2x10x10x8xf32, #tpu.memory_space<vmem>>, vector<2x1x1x8xf32>,
    %194 = vector.extract_strided_slice %7 {offsets = [0, 368], sizes = [2, 8], strides = [1, 1]} : vector<2x512xf32> to vector<2x8xf32>
    %c0_187 = arith.constant 0 : index
    %c6_188 = arith.constant 6 : index
    %c7_189 = arith.constant 7 : index
    %c0_190 = arith.constant 0 : index
    %195 = vector.load %arg10[%c0_187, %c6_188, %c7_189, %c0_190] : memref<2x10x10x8xf32, #tpu.memory_space<vmem>>, vector<2x1x1x8xf32>
    %196 = vector.shape_cast %195 : vector<2x1x1x8xf32> to vector<2x8xf32>
    %197 = vector.shape_cast %194 : vector<2x8xf32> to vector<2x1x1x8xf32>
    tpu.vector_store %arg10[%c0_187, %c6_188, %c7_189, %c0_190], %197 {strides = array<i32>} : memref<2x10x10x8xf32, #tpu.memory_space<vmem>>, vector<2x1x1x8xf32>,
    %198 = vector.extract_strided_slice %7 {offsets = [0, 376], sizes = [2, 8], strides = [1, 1]} : vector<2x512xf32> to vector<2x8xf32>
    %c0_191 = arith.constant 0 : index
    %c6_192 = arith.constant 6 : index
    %c8_193 = arith.constant 8 : index
    %c0_194 = arith.constant 0 : index
    %199 = vector.load %arg10[%c0_191, %c6_192, %c8_193, %c0_194] : memref<2x10x10x8xf32, #tpu.memory_space<vmem>>, vector<2x1x1x8xf32>
    %200 = vector.shape_cast %199 : vector<2x1x1x8xf32> to vector<2x8xf32>
    %201 = vector.shape_cast %198 : vector<2x8xf32> to vector<2x1x1x8xf32>
    tpu.vector_store %arg10[%c0_191, %c6_192, %c8_193, %c0_194], %201 {strides = array<i32>} : memref<2x10x10x8xf32, #tpu.memory_space<vmem>>, vector<2x1x1x8xf32>,
    %202 = vector.extract_strided_slice %7 {offsets = [0, 384], sizes = [2, 8], strides = [1, 1]} : vector<2x512xf32> to vector<2x8xf32>
    %c0_195 = arith.constant 0 : index
    %c7_196 = arith.constant 7 : index
    %c1_197 = arith.constant 1 : index
    %c0_198 = arith.constant 0 : index
    %203 = vector.load %arg10[%c0_195, %c7_196, %c1_197, %c0_198] : memref<2x10x10x8xf32, #tpu.memory_space<vmem>>, vector<2x1x1x8xf32>
    %204 = vector.shape_cast %203 : vector<2x1x1x8xf32> to vector<2x8xf32>
    %205 = vector.shape_cast %202 : vector<2x8xf32> to vector<2x1x1x8xf32>
    tpu.vector_store %arg10[%c0_195, %c7_196, %c1_197, %c0_198], %205 {strides = array<i32>} : memref<2x10x10x8xf32, #tpu.memory_space<vmem>>, vector<2x1x1x8xf32>,
    %206 = vector.extract_strided_slice %7 {offsets = [0, 392], sizes = [2, 8], strides = [1, 1]} : vector<2x512xf32> to vector<2x8xf32>
    %c0_199 = arith.constant 0 : index
    %c7_200 = arith.constant 7 : index
    %c2_201 = arith.constant 2 : index
    %c0_202 = arith.constant 0 : index
    %207 = vector.load %arg10[%c0_199, %c7_200, %c2_201, %c0_202] : memref<2x10x10x8xf32, #tpu.memory_space<vmem>>, vector<2x1x1x8xf32>
    %208 = vector.shape_cast %207 : vector<2x1x1x8xf32> to vector<2x8xf32>
    %209 = vector.shape_cast %206 : vector<2x8xf32> to vector<2x1x1x8xf32>
    tpu.vector_store %arg10[%c0_199, %c7_200, %c2_201, %c0_202], %209 {strides = array<i32>} : memref<2x10x10x8xf32, #tpu.memory_space<vmem>>, vector<2x1x1x8xf32>,
    %210 = vector.extract_strided_slice %7 {offsets = [0, 400], sizes = [2, 8], strides = [1, 1]} : vector<2x512xf32> to vector<2x8xf32>
    %c0_203 = arith.constant 0 : index
    %c7_204 = arith.constant 7 : index
    %c3_205 = arith.constant 3 : index
    %c0_206 = arith.constant 0 : index
    %211 = vector.load %arg10[%c0_203, %c7_204, %c3_205, %c0_206] : memref<2x10x10x8xf32, #tpu.memory_space<vmem>>, vector<2x1x1x8xf32>
    %212 = vector.shape_cast %211 : vector<2x1x1x8xf32> to vector<2x8xf32>
    %213 = vector.shape_cast %210 : vector<2x8xf32> to vector<2x1x1x8xf32>
    tpu.vector_store %arg10[%c0_203, %c7_204, %c3_205, %c0_206], %213 {strides = array<i32>} : memref<2x10x10x8xf32, #tpu.memory_space<vmem>>, vector<2x1x1x8xf32>,
    %214 = vector.extract_strided_slice %7 {offsets = [0, 408], sizes = [2, 8], strides = [1, 1]} : vector<2x512xf32> to vector<2x8xf32>
    %c0_207 = arith.constant 0 : index
    %c7_208 = arith.constant 7 : index
    %c4_209 = arith.constant 4 : index
    %c0_210 = arith.constant 0 : index
    %215 = vector.load %arg10[%c0_207, %c7_208, %c4_209, %c0_210] : memref<2x10x10x8xf32, #tpu.memory_space<vmem>>, vector<2x1x1x8xf32>
    %216 = vector.shape_cast %215 : vector<2x1x1x8xf32> to vector<2x8xf32>
    %217 = vector.shape_cast %214 : vector<2x8xf32> to vector<2x1x1x8xf32>
    tpu.vector_store %arg10[%c0_207, %c7_208, %c4_209, %c0_210], %217 {strides = array<i32>} : memref<2x10x10x8xf32, #tpu.memory_space<vmem>>, vector<2x1x1x8xf32>,
    %218 = vector.extract_strided_slice %7 {offsets = [0, 416], sizes = [2, 8], strides = [1, 1]} : vector<2x512xf32> to vector<2x8xf32>
    %c0_211 = arith.constant 0 : index
    %c7_212 = arith.constant 7 : index
    %c5_213 = arith.constant 5 : index
    %c0_214 = arith.constant 0 : index
    %219 = vector.load %arg10[%c0_211, %c7_212, %c5_213, %c0_214] : memref<2x10x10x8xf32, #tpu.memory_space<vmem>>, vector<2x1x1x8xf32>
    %220 = vector.shape_cast %219 : vector<2x1x1x8xf32> to vector<2x8xf32>
    %221 = vector.shape_cast %218 : vector<2x8xf32> to vector<2x1x1x8xf32>
    tpu.vector_store %arg10[%c0_211, %c7_212, %c5_213, %c0_214], %221 {strides = array<i32>} : memref<2x10x10x8xf32, #tpu.memory_space<vmem>>, vector<2x1x1x8xf32>,
    %222 = vector.extract_strided_slice %7 {offsets = [0, 424], sizes = [2, 8], strides = [1, 1]} : vector<2x512xf32> to vector<2x8xf32>
    %c0_215 = arith.constant 0 : index
    %c7_216 = arith.constant 7 : index
    %c6_217 = arith.constant 6 : index
    %c0_218 = arith.constant 0 : index
    %223 = vector.load %arg10[%c0_215, %c7_216, %c6_217, %c0_218] : memref<2x10x10x8xf32, #tpu.memory_space<vmem>>, vector<2x1x1x8xf32>
    %224 = vector.shape_cast %223 : vector<2x1x1x8xf32> to vector<2x8xf32>
    %225 = vector.shape_cast %222 : vector<2x8xf32> to vector<2x1x1x8xf32>
    tpu.vector_store %arg10[%c0_215, %c7_216, %c6_217, %c0_218], %225 {strides = array<i32>} : memref<2x10x10x8xf32, #tpu.memory_space<vmem>>, vector<2x1x1x8xf32>,
    %226 = vector.extract_strided_slice %7 {offsets = [0, 432], sizes = [2, 8], strides = [1, 1]} : vector<2x512xf32> to vector<2x8xf32>
    %c0_219 = arith.constant 0 : index
    %c7_220 = arith.constant 7 : index
    %c7_221 = arith.constant 7 : index
    %c0_222 = arith.constant 0 : index
    %227 = vector.load %arg10[%c0_219, %c7_220, %c7_221, %c0_222] : memref<2x10x10x8xf32, #tpu.memory_space<vmem>>, vector<2x1x1x8xf32>
    %228 = vector.shape_cast %227 : vector<2x1x1x8xf32> to vector<2x8xf32>
    %229 = vector.shape_cast %226 : vector<2x8xf32> to vector<2x1x1x8xf32>
    tpu.vector_store %arg10[%c0_219, %c7_220, %c7_221, %c0_222], %229 {strides = array<i32>} : memref<2x10x10x8xf32, #tpu.memory_space<vmem>>, vector<2x1x1x8xf32>,
    %230 = vector.extract_strided_slice %7 {offsets = [0, 440], sizes = [2, 8], strides = [1, 1]} : vector<2x512xf32> to vector<2x8xf32>
    %c0_223 = arith.constant 0 : index
    %c7_224 = arith.constant 7 : index
    %c8_225 = arith.constant 8 : index
    %c0_226 = arith.constant 0 : index
    %231 = vector.load %arg10[%c0_223, %c7_224, %c8_225, %c0_226] : memref<2x10x10x8xf32, #tpu.memory_space<vmem>>, vector<2x1x1x8xf32>
    %232 = vector.shape_cast %231 : vector<2x1x1x8xf32> to vector<2x8xf32>
    %233 = vector.shape_cast %230 : vector<2x8xf32> to vector<2x1x1x8xf32>
    tpu.vector_store %arg10[%c0_223, %c7_224, %c8_225, %c0_226], %233 {strides = array<i32>} : memref<2x10x10x8xf32, #tpu.memory_space<vmem>>, vector<2x1x1x8xf32>,
    %234 = vector.extract_strided_slice %7 {offsets = [0, 448], sizes = [2, 8], strides = [1, 1]} : vector<2x512xf32> to vector<2x8xf32>
    %c0_227 = arith.constant 0 : index
    %c8_228 = arith.constant 8 : index
    %c1_229 = arith.constant 1 : index
    %c0_230 = arith.constant 0 : index
    %235 = vector.load %arg10[%c0_227, %c8_228, %c1_229, %c0_230] : memref<2x10x10x8xf32, #tpu.memory_space<vmem>>, vector<2x1x1x8xf32>
    %236 = vector.shape_cast %235 : vector<2x1x1x8xf32> to vector<2x8xf32>
    %237 = vector.shape_cast %234 : vector<2x8xf32> to vector<2x1x1x8xf32>
    tpu.vector_store %arg10[%c0_227, %c8_228, %c1_229, %c0_230], %237 {strides = array<i32>} : memref<2x10x10x8xf32, #tpu.memory_space<vmem>>, vector<2x1x1x8xf32>,
    %238 = vector.extract_strided_slice %7 {offsets = [0, 456], sizes = [2, 8], strides = [1, 1]} : vector<2x512xf32> to vector<2x8xf32>
    %c0_231 = arith.constant 0 : index
    %c8_232 = arith.constant 8 : index
    %c2_233 = arith.constant 2 : index
    %c0_234 = arith.constant 0 : index
    %239 = vector.load %arg10[%c0_231, %c8_232, %c2_233, %c0_234] : memref<2x10x10x8xf32, #tpu.memory_space<vmem>>, vector<2x1x1x8xf32>
    %240 = vector.shape_cast %239 : vector<2x1x1x8xf32> to vector<2x8xf32>
    %241 = vector.shape_cast %238 : vector<2x8xf32> to vector<2x1x1x8xf32>
    tpu.vector_store %arg10[%c0_231, %c8_232, %c2_233, %c0_234], %241 {strides = array<i32>} : memref<2x10x10x8xf32, #tpu.memory_space<vmem>>, vector<2x1x1x8xf32>,
    %242 = vector.extract_strided_slice %7 {offsets = [0, 464], sizes = [2, 8], strides = [1, 1]} : vector<2x512xf32> to vector<2x8xf32>
    %c0_235 = arith.constant 0 : index
    %c8_236 = arith.constant 8 : index
    %c3_237 = arith.constant 3 : index
    %c0_238 = arith.constant 0 : index
    %243 = vector.load %arg10[%c0_235, %c8_236, %c3_237, %c0_238] : memref<2x10x10x8xf32, #tpu.memory_space<vmem>>, vector<2x1x1x8xf32>
    %244 = vector.shape_cast %243 : vector<2x1x1x8xf32> to vector<2x8xf32>
    %245 = vector.shape_cast %242 : vector<2x8xf32> to vector<2x1x1x8xf32>
    tpu.vector_store %arg10[%c0_235, %c8_236, %c3_237, %c0_238], %245 {strides = array<i32>} : memref<2x10x10x8xf32, #tpu.memory_space<vmem>>, vector<2x1x1x8xf32>,
    %246 = vector.extract_strided_slice %7 {offsets = [0, 472], sizes = [2, 8], strides = [1, 1]} : vector<2x512xf32> to vector<2x8xf32>
    %c0_239 = arith.constant 0 : index
    %c8_240 = arith.constant 8 : index
    %c4_241 = arith.constant 4 : index
    %c0_242 = arith.constant 0 : index
    %247 = vector.load %arg10[%c0_239, %c8_240, %c4_241, %c0_242] : memref<2x10x10x8xf32, #tpu.memory_space<vmem>>, vector<2x1x1x8xf32>
    %248 = vector.shape_cast %247 : vector<2x1x1x8xf32> to vector<2x8xf32>
    %249 = vector.shape_cast %246 : vector<2x8xf32> to vector<2x1x1x8xf32>
    tpu.vector_store %arg10[%c0_239, %c8_240, %c4_241, %c0_242], %249 {strides = array<i32>} : memref<2x10x10x8xf32, #tpu.memory_space<vmem>>, vector<2x1x1x8xf32>,
    %250 = vector.extract_strided_slice %7 {offsets = [0, 480], sizes = [2, 8], strides = [1, 1]} : vector<2x512xf32> to vector<2x8xf32>
    %c0_243 = arith.constant 0 : index
    %c8_244 = arith.constant 8 : index
    %c5_245 = arith.constant 5 : index
    %c0_246 = arith.constant 0 : index
    %251 = vector.load %arg10[%c0_243, %c8_244, %c5_245, %c0_246] : memref<2x10x10x8xf32, #tpu.memory_space<vmem>>, vector<2x1x1x8xf32>
    %252 = vector.shape_cast %251 : vector<2x1x1x8xf32> to vector<2x8xf32>
    %253 = vector.shape_cast %250 : vector<2x8xf32> to vector<2x1x1x8xf32>
    tpu.vector_store %arg10[%c0_243, %c8_244, %c5_245, %c0_246], %253 {strides = array<i32>} : memref<2x10x10x8xf32, #tpu.memory_space<vmem>>, vector<2x1x1x8xf32>,
    %254 = vector.extract_strided_slice %7 {offsets = [0, 488], sizes = [2, 8], strides = [1, 1]} : vector<2x512xf32> to vector<2x8xf32>
    %c0_247 = arith.constant 0 : index
    %c8_248 = arith.constant 8 : index
    %c6_249 = arith.constant 6 : index
    %c0_250 = arith.constant 0 : index
    %255 = vector.load %arg10[%c0_247, %c8_248, %c6_249, %c0_250] : memref<2x10x10x8xf32, #tpu.memory_space<vmem>>, vector<2x1x1x8xf32>
    %256 = vector.shape_cast %255 : vector<2x1x1x8xf32> to vector<2x8xf32>
    %257 = vector.shape_cast %254 : vector<2x8xf32> to vector<2x1x1x8xf32>
    tpu.vector_store %arg10[%c0_247, %c8_248, %c6_249, %c0_250], %257 {strides = array<i32>} : memref<2x10x10x8xf32, #tpu.memory_space<vmem>>, vector<2x1x1x8xf32>,
    %258 = vector.extract_strided_slice %7 {offsets = [0, 496], sizes = [2, 8], strides = [1, 1]} : vector<2x512xf32> to vector<2x8xf32>
    %c0_251 = arith.constant 0 : index
    %c8_252 = arith.constant 8 : index
    %c7_253 = arith.constant 7 : index
    %c0_254 = arith.constant 0 : index
    %259 = vector.load %arg10[%c0_251, %c8_252, %c7_253, %c0_254] : memref<2x10x10x8xf32, #tpu.memory_space<vmem>>, vector<2x1x1x8xf32>
    %260 = vector.shape_cast %259 : vector<2x1x1x8xf32> to vector<2x8xf32>
    %261 = vector.shape_cast %258 : vector<2x8xf32> to vector<2x1x1x8xf32>
    tpu.vector_store %arg10[%c0_251, %c8_252, %c7_253, %c0_254], %261 {strides = array<i32>} : memref<2x10x10x8xf32, #tpu.memory_space<vmem>>, vector<2x1x1x8xf32>,
    %262 = vector.extract_strided_slice %7 {offsets = [0, 504], sizes = [2, 8], strides = [1, 1]} : vector<2x512xf32> to vector<2x8xf32>
    %c0_255 = arith.constant 0 : index
    %c8_256 = arith.constant 8 : index
    %c8_257 = arith.constant 8 : index
    %c0_258 = arith.constant 0 : index
    %263 = vector.load %arg10[%c0_255, %c8_256, %c8_257, %c0_258] : memref<2x10x10x8xf32, #tpu.memory_space<vmem>>, vector<2x1x1x8xf32>
    %264 = vector.shape_cast %263 : vector<2x1x1x8xf32> to vector<2x8xf32>
    %265 = vector.shape_cast %262 : vector<2x8xf32> to vector<2x1x1x8xf32>
    tpu.vector_store %arg10[%c0_255, %c8_256, %c8_257, %c0_258], %265 {strides = array<i32>} : memref<2x10x10x8xf32, #tpu.memory_space<vmem>>, vector<2x1x1x8xf32>,
    %c0_259 = arith.constant 0 : index
    %c0_260 = arith.constant 0 : index
    %c0_261 = arith.constant 0 : index
    %c0_262 = arith.constant 0 : index
    %266 = vector.load %arg10[%c0_259, %c0_260, %c0_261, %c0_262] : memref<2x10x10x8xf32, #tpu.memory_space<vmem>>, vector<2x8x8x8xf32>
    %267 = vector.shape_cast %266 : vector<2x8x8x8xf32> to vector<128x8xf32>
    %c0_263 = arith.constant 0 : index
    %c0_264 = arith.constant 0 : index
    %c1_265 = arith.constant 1 : index
    %c0_266 = arith.constant 0 : index
    %268 = vector.load %arg10[%c0_263, %c0_264, %c1_265, %c0_266] : memref<2x10x10x8xf32, #tpu.memory_space<vmem>>, vector<2x8x8x8xf32>
    %269 = vector.shape_cast %268 : vector<2x8x8x8xf32> to vector<128x8xf32>
    %c0_267 = arith.constant 0 : index
    %c0_268 = arith.constant 0 : index
    %c2_269 = arith.constant 2 : index
    %c0_270 = arith.constant 0 : index
    %270 = vector.load %arg10[%c0_267, %c0_268, %c2_269, %c0_270] : memref<2x10x10x8xf32, #tpu.memory_space<vmem>>, vector<2x8x8x8xf32>
    %271 = vector.shape_cast %270 : vector<2x8x8x8xf32> to vector<128x8xf32>
    %c0_271 = arith.constant 0 : index
    %c1_272 = arith.constant 1 : index
    %c0_273 = arith.constant 0 : index
    %c0_274 = arith.constant 0 : index
    %272 = vector.load %arg10[%c0_271, %c1_272, %c0_273, %c0_274] : memref<2x10x10x8xf32, #tpu.memory_space<vmem>>, vector<2x8x8x8xf32>
    %273 = vector.shape_cast %272 : vector<2x8x8x8xf32> to vector<128x8xf32>
    %c0_275 = arith.constant 0 : index
    %c1_276 = arith.constant 1 : index
    %c1_277 = arith.constant 1 : index
    %c0_278 = arith.constant 0 : index
    %274 = vector.load %arg10[%c0_275, %c1_276, %c1_277, %c0_278] : memref<2x10x10x8xf32, #tpu.memory_space<vmem>>, vector<2x8x8x8xf32>
    %275 = vector.shape_cast %274 : vector<2x8x8x8xf32> to vector<128x8xf32>
    %c0_279 = arith.constant 0 : index
    %c1_280 = arith.constant 1 : index
    %c2_281 = arith.constant 2 : index
    %c0_282 = arith.constant 0 : index
    %276 = vector.load %arg10[%c0_279, %c1_280, %c2_281, %c0_282] : memref<2x10x10x8xf32, #tpu.memory_space<vmem>>, vector<2x8x8x8xf32>
    %277 = vector.shape_cast %276 : vector<2x8x8x8xf32> to vector<128x8xf32>
    %c0_283 = arith.constant 0 : index
    %c2_284 = arith.constant 2 : index
    %c0_285 = arith.constant 0 : index
    %c0_286 = arith.constant 0 : index
    %278 = vector.load %arg10[%c0_283, %c2_284, %c0_285, %c0_286] : memref<2x10x10x8xf32, #tpu.memory_space<vmem>>, vector<2x8x8x8xf32>
    %279 = vector.shape_cast %278 : vector<2x8x8x8xf32> to vector<128x8xf32>
    %c0_287 = arith.constant 0 : index
    %c2_288 = arith.constant 2 : index
    %c1_289 = arith.constant 1 : index
    %c0_290 = arith.constant 0 : index
    %280 = vector.load %arg10[%c0_287, %c2_288, %c1_289, %c0_290] : memref<2x10x10x8xf32, #tpu.memory_space<vmem>>, vector<2x8x8x8xf32>
    %281 = vector.shape_cast %280 : vector<2x8x8x8xf32> to vector<128x8xf32>
    %c0_291 = arith.constant 0 : index
    %c2_292 = arith.constant 2 : index
    %c2_293 = arith.constant 2 : index
    %c0_294 = arith.constant 0 : index
    %282 = vector.load %arg10[%c0_291, %c2_292, %c2_293, %c0_294] : memref<2x10x10x8xf32, #tpu.memory_space<vmem>>, vector<2x8x8x8xf32>
    %283 = vector.shape_cast %282 : vector<2x8x8x8xf32> to vector<128x8xf32>
    %284 = tpu.concatenate %267, %269, %271, %273, %275, %277, %279, %281, %283 in 1 : vector<128x8xf32>, vector<128x8xf32>, vector<128x8xf32>, vector<128x8xf32>, vector<128x8xf32>, vector<128x8xf32>, vector<128x8xf32>, vector<128x8xf32>, vector<128x8xf32> -> vector<128x72xf32>
    %c0_295 = arith.constant 0 : index
    %c0_296 = arith.constant 0 : index
    %285 = vector.load %arg3[%c0_295, %c0_296] : memref<72x16xf32, #tpu.memory_space<vmem>>, vector<72x16xf32>
    %cst_297 = arith.constant dense<0.000000e+00> : vector<128x16xf32>
    %286 = tpu.matmul %284, %285, %cst_297 {dimension_numbers = #tpu.dot_dimension_numbers<[1], [0], [0], [1], [0, 0, 1, 1], [], []>} : vector<128x72xf32>, vector<72x16xf32>, vector<128x16xf32> -> vector<128x16xf32>
    %c0_298 = arith.constant 0 : index
    %c0_299 = arith.constant 0 : index
    %287 = vector.load %arg4[%c0_298, %c0_299] : memref<1x16xf32, #tpu.memory_space<vmem>>, vector<1x16xf32>
    %288 = vector.broadcast %287 : vector<1x16xf32> to vector<128x16xf32>
    %289 = arith.addf %286, %288 : vector<128x16xf32>
    %cst_300 = arith.constant 0.000000e+00 : f32
    %290 = vector.broadcast %cst_300 : f32 to vector<128x16xf32>
    %291 = arith.maximumf %289, %290 : vector<128x16xf32>
    %cst_301 = arith.constant 0.000000e+00 : f32
    %292 = vector.broadcast %cst_301 : f32 to vector<2x10x10x16xf32>
    %c0_302 = arith.constant 0 : index
    %c0_303 = arith.constant 0 : index
    %c0_304 = arith.constant 0 : index
    %c0_305 = arith.constant 0 : index
    %293 = vector.load %arg11[%c0_302, %c0_303, %c0_304, %c0_305] : memref<2x10x10x16xf32, #tpu.memory_space<vmem>>, vector<2x10x10x16xf32>
    tpu.vector_store %arg11[%c0_302, %c0_303, %c0_304, %c0_305], %292 {strides = array<i32>} : memref<2x10x10x16xf32, #tpu.memory_space<vmem>>, vector<2x10x10x16xf32>,
    %294 = vector.shape_cast %291 : vector<128x16xf32> to vector<2x8x8x16xf32>
    %c0_306 = arith.constant 0 : index
    %c1_307 = arith.constant 1 : index
    %c1_308 = arith.constant 1 : index
    %c0_309 = arith.constant 0 : index
    %295 = vector.load %arg11[%c0_306, %c1_307, %c1_308, %c0_309] : memref<2x10x10x16xf32, #tpu.memory_space<vmem>>, vector<2x8x8x16xf32>
    tpu.vector_store %arg11[%c0_306, %c1_307, %c1_308, %c0_309], %294 {strides = array<i32>} : memref<2x10x10x16xf32, #tpu.memory_space<vmem>>, vector<2x8x8x16xf32>,
    %c0_310 = arith.constant 0 : index
    %c0_311 = arith.constant 0 : index
    %c0_312 = arith.constant 0 : index
    %c0_313 = arith.constant 0 : index
    %296 = vector.load %arg11[%c0_310, %c0_311, %c0_312, %c0_313] : memref<2x10x10x16xf32, #tpu.memory_space<vmem>>, vector<2x8x8x16xf32>
    %297 = vector.shape_cast %296 : vector<2x8x8x16xf32> to vector<128x16xf32>
    %c0_314 = arith.constant 0 : index
    %c0_315 = arith.constant 0 : index
    %c1_316 = arith.constant 1 : index
    %c0_317 = arith.constant 0 : index
    %298 = vector.load %arg11[%c0_314, %c0_315, %c1_316, %c0_317] : memref<2x10x10x16xf32, #tpu.memory_space<vmem>>, vector<2x8x8x16xf32>
    %299 = vector.shape_cast %298 : vector<2x8x8x16xf32> to vector<128x16xf32>
    %c0_318 = arith.constant 0 : index
    %c0_319 = arith.constant 0 : index
    %c2_320 = arith.constant 2 : index
    %c0_321 = arith.constant 0 : index
    %300 = vector.load %arg11[%c0_318, %c0_319, %c2_320, %c0_321] : memref<2x10x10x16xf32, #tpu.memory_space<vmem>>, vector<2x8x8x16xf32>
    %301 = vector.shape_cast %300 : vector<2x8x8x16xf32> to vector<128x16xf32>
    %c0_322 = arith.constant 0 : index
    %c1_323 = arith.constant 1 : index
    %c0_324 = arith.constant 0 : index
    %c0_325 = arith.constant 0 : index
    %302 = vector.load %arg11[%c0_322, %c1_323, %c0_324, %c0_325] : memref<2x10x10x16xf32, #tpu.memory_space<vmem>>, vector<2x8x8x16xf32>
    %303 = vector.shape_cast %302 : vector<2x8x8x16xf32> to vector<128x16xf32>
    %c0_326 = arith.constant 0 : index
    %c1_327 = arith.constant 1 : index
    %c1_328 = arith.constant 1 : index
    %c0_329 = arith.constant 0 : index
    %304 = vector.load %arg11[%c0_326, %c1_327, %c1_328, %c0_329] : memref<2x10x10x16xf32, #tpu.memory_space<vmem>>, vector<2x8x8x16xf32>
    %305 = vector.shape_cast %304 : vector<2x8x8x16xf32> to vector<128x16xf32>
    %c0_330 = arith.constant 0 : index
    %c1_331 = arith.constant 1 : index
    %c2_332 = arith.constant 2 : index
    %c0_333 = arith.constant 0 : index
    %306 = vector.load %arg11[%c0_330, %c1_331, %c2_332, %c0_333] : memref<2x10x10x16xf32, #tpu.memory_space<vmem>>, vector<2x8x8x16xf32>
    %307 = vector.shape_cast %306 : vector<2x8x8x16xf32> to vector<128x16xf32>
    %c0_334 = arith.constant 0 : index
    %c2_335 = arith.constant 2 : index
    %c0_336 = arith.constant 0 : index
    %c0_337 = arith.constant 0 : index
    %308 = vector.load %arg11[%c0_334, %c2_335, %c0_336, %c0_337] : memref<2x10x10x16xf32, #tpu.memory_space<vmem>>, vector<2x8x8x16xf32>
    %309 = vector.shape_cast %308 : vector<2x8x8x16xf32> to vector<128x16xf32>
    %c0_338 = arith.constant 0 : index
    %c2_339 = arith.constant 2 : index
    %c1_340 = arith.constant 1 : index
    %c0_341 = arith.constant 0 : index
    %310 = vector.load %arg11[%c0_338, %c2_339, %c1_340, %c0_341] : memref<2x10x10x16xf32, #tpu.memory_space<vmem>>, vector<2x8x8x16xf32>
    %311 = vector.shape_cast %310 : vector<2x8x8x16xf32> to vector<128x16xf32>
    %c0_342 = arith.constant 0 : index
    %c2_343 = arith.constant 2 : index
    %c2_344 = arith.constant 2 : index
    %c0_345 = arith.constant 0 : index
    %312 = vector.load %arg11[%c0_342, %c2_343, %c2_344, %c0_345] : memref<2x10x10x16xf32, #tpu.memory_space<vmem>>, vector<2x8x8x16xf32>
    %313 = vector.shape_cast %312 : vector<2x8x8x16xf32> to vector<128x16xf32>
    %314 = tpu.concatenate %297, %299, %301, %303, %305, %307, %309, %311, %313 in 1 : vector<128x16xf32>, vector<128x16xf32>, vector<128x16xf32>, vector<128x16xf32>, vector<128x16xf32>, vector<128x16xf32>, vector<128x16xf32>, vector<128x16xf32>, vector<128x16xf32> -> vector<128x144xf32>
    %c0_346 = arith.constant 0 : index
    %c0_347 = arith.constant 0 : index
    %315 = vector.load %arg5[%c0_346, %c0_347] : memref<144x32xf32, #tpu.memory_space<vmem>>, vector<144x32xf32>
    %cst_348 = arith.constant dense<0.000000e+00> : vector<128x32xf32>
    %316 = tpu.matmul %314, %315, %cst_348 {dimension_numbers = #tpu.dot_dimension_numbers<[1], [0], [0], [1], [0, 0, 1, 1], [], []>} : vector<128x144xf32>, vector<144x32xf32>, vector<128x32xf32> -> vector<128x32xf32>
    %c0_349 = arith.constant 0 : index
    %c0_350 = arith.constant 0 : index
    %317 = vector.load %arg6[%c0_349, %c0_350] : memref<1x32xf32, #tpu.memory_space<vmem>>, vector<1x32xf32>
    %318 = vector.broadcast %317 : vector<1x32xf32> to vector<128x32xf32>
    %319 = arith.addf %316, %318 : vector<128x32xf32>
    %cst_351 = arith.constant 0.000000e+00 : f32
    %320 = vector.broadcast %cst_351 : f32 to vector<128x32xf32>
    %321 = arith.maximumf %319, %320 : vector<128x32xf32>
    %cst_352 = arith.constant 0.000000e+00 : f32
    %322 = vector.broadcast %cst_352 : f32 to vector<2x10x10x32xf32>
    %c0_353 = arith.constant 0 : index
    %c0_354 = arith.constant 0 : index
    %c0_355 = arith.constant 0 : index
    %c0_356 = arith.constant 0 : index
    %323 = vector.load %arg12[%c0_353, %c0_354, %c0_355, %c0_356] : memref<2x10x10x32xf32, #tpu.memory_space<vmem>>, vector<2x10x10x32xf32>
    tpu.vector_store %arg12[%c0_353, %c0_354, %c0_355, %c0_356], %322 {strides = array<i32>} : memref<2x10x10x32xf32, #tpu.memory_space<vmem>>, vector<2x10x10x32xf32>,
    %324 = vector.shape_cast %321 : vector<128x32xf32> to vector<2x8x8x32xf32>
    %c0_357 = arith.constant 0 : index
    %c1_358 = arith.constant 1 : index
    %c1_359 = arith.constant 1 : index
    %c0_360 = arith.constant 0 : index
    %325 = vector.load %arg12[%c0_357, %c1_358, %c1_359, %c0_360] : memref<2x10x10x32xf32, #tpu.memory_space<vmem>>, vector<2x8x8x32xf32>
    tpu.vector_store %arg12[%c0_357, %c1_358, %c1_359, %c0_360], %324 {strides = array<i32>} : memref<2x10x10x32xf32, #tpu.memory_space<vmem>>, vector<2x8x8x32xf32>,
    %c0_361 = arith.constant 0 : index
    %c0_362 = arith.constant 0 : index
    %c0_363 = arith.constant 0 : index
    %c0_364 = arith.constant 0 : index
    %326 = vector.load %arg12[%c0_361, %c0_362, %c0_363, %c0_364] : memref<2x10x10x32xf32, #tpu.memory_space<vmem>>, vector<2x8x8x32xf32>
    %327 = vector.shape_cast %326 : vector<2x8x8x32xf32> to vector<128x32xf32>
    %c0_365 = arith.constant 0 : index
    %c0_366 = arith.constant 0 : index
    %c1_367 = arith.constant 1 : index
    %c0_368 = arith.constant 0 : index
    %328 = vector.load %arg12[%c0_365, %c0_366, %c1_367, %c0_368] : memref<2x10x10x32xf32, #tpu.memory_space<vmem>>, vector<2x8x8x32xf32>
    %329 = vector.shape_cast %328 : vector<2x8x8x32xf32> to vector<128x32xf32>
    %c0_369 = arith.constant 0 : index
    %c0_370 = arith.constant 0 : index
    %c2_371 = arith.constant 2 : index
    %c0_372 = arith.constant 0 : index
    %330 = vector.load %arg12[%c0_369, %c0_370, %c2_371, %c0_372] : memref<2x10x10x32xf32, #tpu.memory_space<vmem>>, vector<2x8x8x32xf32>
    %331 = vector.shape_cast %330 : vector<2x8x8x32xf32> to vector<128x32xf32>
    %c0_373 = arith.constant 0 : index
    %c1_374 = arith.constant 1 : index
    %c0_375 = arith.constant 0 : index
    %c0_376 = arith.constant 0 : index
    %332 = vector.load %arg12[%c0_373, %c1_374, %c0_375, %c0_376] : memref<2x10x10x32xf32, #tpu.memory_space<vmem>>, vector<2x8x8x32xf32>
    %333 = vector.shape_cast %332 : vector<2x8x8x32xf32> to vector<128x32xf32>
    %c0_377 = arith.constant 0 : index
    %c1_378 = arith.constant 1 : index
    %c1_379 = arith.constant 1 : index
    %c0_380 = arith.constant 0 : index
    %334 = vector.load %arg12[%c0_377, %c1_378, %c1_379, %c0_380] : memref<2x10x10x32xf32, #tpu.memory_space<vmem>>, vector<2x8x8x32xf32>
    %335 = vector.shape_cast %334 : vector<2x8x8x32xf32> to vector<128x32xf32>
    %c0_381 = arith.constant 0 : index
    %c1_382 = arith.constant 1 : index
    %c2_383 = arith.constant 2 : index
    %c0_384 = arith.constant 0 : index
    %336 = vector.load %arg12[%c0_381, %c1_382, %c2_383, %c0_384] : memref<2x10x10x32xf32, #tpu.memory_space<vmem>>, vector<2x8x8x32xf32>
    %337 = vector.shape_cast %336 : vector<2x8x8x32xf32> to vector<128x32xf32>
    %c0_385 = arith.constant 0 : index
    %c2_386 = arith.constant 2 : index
    %c0_387 = arith.constant 0 : index
    %c0_388 = arith.constant 0 : index
    %338 = vector.load %arg12[%c0_385, %c2_386, %c0_387, %c0_388] : memref<2x10x10x32xf32, #tpu.memory_space<vmem>>, vector<2x8x8x32xf32>
    %339 = vector.shape_cast %338 : vector<2x8x8x32xf32> to vector<128x32xf32>
    %c0_389 = arith.constant 0 : index
    %c2_390 = arith.constant 2 : index
    %c1_391 = arith.constant 1 : index
    %c0_392 = arith.constant 0 : index
    %340 = vector.load %arg12[%c0_389, %c2_390, %c1_391, %c0_392] : memref<2x10x10x32xf32, #tpu.memory_space<vmem>>, vector<2x8x8x32xf32>
    %341 = vector.shape_cast %340 : vector<2x8x8x32xf32> to vector<128x32xf32>
    %c0_393 = arith.constant 0 : index
    %c2_394 = arith.constant 2 : index
    %c2_395 = arith.constant 2 : index
    %c0_396 = arith.constant 0 : index
    %342 = vector.load %arg12[%c0_393, %c2_394, %c2_395, %c0_396] : memref<2x10x10x32xf32, #tpu.memory_space<vmem>>, vector<2x8x8x32xf32>
    %343 = vector.shape_cast %342 : vector<2x8x8x32xf32> to vector<128x32xf32>
    %344 = tpu.concatenate %327, %329, %331, %333, %335, %337, %339, %341, %343 in 1 : vector<128x32xf32>, vector<128x32xf32>, vector<128x32xf32>, vector<128x32xf32>, vector<128x32xf32>, vector<128x32xf32>, vector<128x32xf32>, vector<128x32xf32>, vector<128x32xf32> -> vector<128x288xf32>
    %c0_397 = arith.constant 0 : index
    %c0_398 = arith.constant 0 : index
    %345 = vector.load %arg7[%c0_397, %c0_398] : memref<288x1xf32, #tpu.memory_space<vmem>>, vector<288x1xf32>
    %cst_399 = arith.constant dense<0.000000e+00> : vector<128x1xf32>
    %346 = tpu.matmul %344, %345, %cst_399 {dimension_numbers = #tpu.dot_dimension_numbers<[1], [0], [0], [1], [0, 0, 1, 1], [], []>} : vector<128x288xf32>, vector<288x1xf32>, vector<128x1xf32> -> vector<128x1xf32>
    %c0_400 = arith.constant 0 : index
    %c0_401 = arith.constant 0 : index
    %347 = vector.load %arg8[%c0_400, %c0_401] : memref<1x1xf32, #tpu.memory_space<vmem>>, vector<1x1xf32>
    %348 = vector.broadcast %347 : vector<1x1xf32> to vector<128x1xf32>
    %349 = arith.addf %346, %348 : vector<128x1xf32>
    %350 = arith.negf %349 : vector<128x1xf32>
    %351 = math.exp %350 : vector<128x1xf32>
    %cst_402 = arith.constant 1.000000e+00 : f32
    %352 = vector.broadcast %cst_402 : f32 to vector<128x1xf32>
    %353 = arith.addf %352, %351 : vector<128x1xf32>
    %354 = arith.divf %352, %353 : vector<128x1xf32>
    %c0_403 = arith.constant 0 : index
    %c0_404 = arith.constant 0 : index
    %355 = vector.load %arg9[%c0_403, %c0_404] : memref<128x1xf32, #tpu.memory_space<vmem>>, vector<128x1xf32>
    tpu.vector_store %arg9[%c0_403, %c0_404], %354 {strides = array<i32>} : memref<128x1xf32, #tpu.memory_space<vmem>>, vector<128x1xf32>,
    return
  }
}

</mosaic_0001>

<llo_original>
// kernel: conv_decoder_forward.1
$region0: #{conv_decoder_forward.1}
  #allocation0 [shape = 'u32[]', space=smem, size = 0x4, offset = 0x4, fixed_abs, tag = 'smem constant byte address 0x4 - core index']
  #allocation1 [shape = 'u32[144,128]{1,0:T(1,128)}', space=vmem, size = 0x12000, scoped, tag = 'internal scratch']
  #allocation2 [shape = 'f32[2,10,10,8]{3,2,1,0:T(8,128)}', space=vmem, size = 0x28000, scoped, tag = 'scratch operand']
  #allocation3 [shape = 'f32[2,10,10,16]{3,2,1,0:T(8,128)}', space=vmem, size = 0x28000, scoped, tag = 'scratch operand']
  #allocation4 [shape = 'f32[2,10,10,32]{3,2,1,0:T(8,128)}', space=vmem, size = 0x28000, scoped, tag = 'scratch operand']
  #allocation5 [shape = 'f32[1,1]{1,0:T(1,128)S(1)}', space=vmem, size = 0x200, scoped, tag = 'scoped memory for conv_decoder_forward.1']
  %s0 = inlined_call_operand.vmem [shape: f32[2,32], index: 0, kind: input, shape index: {}]
  %s1 = inlined_call_operand.vmem [shape: f32[32,512], index: 1, kind: input, shape index: {}]
  %s2 = inlined_call_operand.vmem [shape: f32[1,512], index: 2, kind: input, shape index: {}]
  %s3 = inlined_call_operand.vmem [shape: f32[72,16], index: 3, kind: input, shape index: {}]
  %s4 = inlined_call_operand.vmem [shape: f32[1,16], index: 4, kind: input, shape index: {}]
  %s5 = inlined_call_operand.vmem [shape: f32[144,32], index: 5, kind: input, shape index: {}]
  %s6 = inlined_call_operand.vmem [shape: f32[1,32], index: 6, kind: input, shape index: {}]
  %s7 = inlined_call_operand.vmem [shape: f32[288,1], index: 7, kind: input, shape index: {}]
  %s8 = inlined_call_operand.<no memory space> [shape: f32[1,1], index: 8, kind: input, shape index: {}]
  %s9 = inlined_call_operand.vmem [shape: f32[128,1], index: 9, kind: output, shape index: {}]
  %s10 = sld [smem:[#allocation0]]
  $region46: #{conv_decoder_forward.1} parent=0
    _
  %s12 = ssub.s32 1, %s10
  %s13 = scalar_select 0, %s12, %s10
  %v14 = vstv %s8
  %15 = vst [vmem:[#allocation5] sm:$0x1] %v14
  // Predicated region
  $region2: #{conv_decoder_forward.1} parent=0 // pred_check
    _
  $region3: #{conv_decoder_forward.1} parent=0 // pred_check_branch
    %17 = sbr.rel (0) target = $region5
  $region4: #{conv_decoder_forward.1} parent=0 // pred_region
    _
  $region5: #{conv_decoder_forward.1} parent=0 // pred_fallthru
    _
  // Predicated region
  $region6: #{conv_decoder_forward.1} parent=0 // pred_check
    _
  $region7: #{conv_decoder_forward.1} parent=0 // pred_check_branch
    %19 = sbr.rel (0) target = $region9
  $region8: #{conv_decoder_forward.1} parent=0 // pred_region
    _
  $region9: #{conv_decoder_forward.1} parent=0 // pred_fallthru
    _
  // Predicated region
  $region10: #{conv_decoder_forward.1} parent=0 // pred_check
    _
  $region11: #{conv_decoder_forward.1} parent=0 // pred_check_branch
    %21 = sbr.rel (0) target = $region13
  $region12: #{conv_decoder_forward.1} parent=0 // pred_region
    _
  $region13: #{conv_decoder_forward.1} parent=0 // pred_fallthru
    _
  // Predicated region
  $region14: #{conv_decoder_forward.1} parent=0 // pred_check
    _
  $region15: #{conv_decoder_forward.1} parent=0 // pred_check_branch
    %23 = sbr.rel (0) target = $region17
  $region16: #{conv_decoder_forward.1} parent=0 // pred_region
    _
  $region17: #{conv_decoder_forward.1} parent=0 // pred_fallthru
    _
  // Predicated region
  $region18: #{conv_decoder_forward.1} parent=0 // pred_check
    _
  $region19: #{conv_decoder_forward.1} parent=0 // pred_check_branch
    %25 = sbr.rel (0) target = $region21
  $region20: #{conv_decoder_forward.1} parent=0 // pred_region
    _
  $region21: #{conv_decoder_forward.1} parent=0 // pred_fallthru
    _
  // Predicated region
  $region22: #{conv_decoder_forward.1} parent=0 // pred_check
    _
  $region23: #{conv_decoder_forward.1} parent=0 // pred_check_branch
    %27 = sbr.rel (0) target = $region25
  $region24: #{conv_decoder_forward.1} parent=0 // pred_region
    _
  $region25: #{conv_decoder_forward.1} parent=0 // pred_fallthru
    _
  // Predicated region
  $region26: #{conv_decoder_forward.1} parent=0 // pred_check
    _
  $region27: #{conv_decoder_forward.1} parent=0 // pred_check_branch
    %29 = sbr.rel (0) target = $region29
  $region28: #{conv_decoder_forward.1} parent=0 // pred_region
    _
  $region29: #{conv_decoder_forward.1} parent=0 // pred_fallthru
    _
  // Predicated region
  $region30: #{conv_decoder_forward.1} parent=0 // pred_check
    _
  $region31: #{conv_decoder_forward.1} parent=0 // pred_check_branch
    %31 = sbr.rel (0) target = $region33
  $region32: #{conv_decoder_forward.1} parent=0 // pred_region
    _
  $region33: #{conv_decoder_forward.1} parent=0 // pred_fallthru
    _
  // Predicated region
  $region34: #{conv_decoder_forward.1} parent=0 // pred_check
    _
  $region35: #{conv_decoder_forward.1} parent=0 // pred_check_branch
    %33 = sbr.rel (0) target = $region37
  $region36: #{conv_decoder_forward.1} parent=0 // pred_region
    _
  $region37: #{conv_decoder_forward.1} parent=0 // pred_fallthru
    _
  %v34 = vld [vmem:[%s0] sm:$0x3]
  %v35 = vld [vmem:[%s1] sm:$0xff]
  %v36 = vld [vmem:[%s1 + $0x8] sm:$0xff]
  %v37 = vld [vmem:[%s1 + $0x10] sm:$0xff]
  %v38 = vld [vmem:[%s1 + $0x18] sm:$0xff]
  %v39 = vld [vmem:[%s1 + $0x20] sm:$0xff]
  %v40 = vld [vmem:[%s1 + $0x28] sm:$0xff]
  %v41 = vld [vmem:[%s1 + $0x30] sm:$0xff]
  %v42 = vld [vmem:[%s1 + $0x38] sm:$0xff]
  %v43 = vld [vmem:[%s1 + $0x40] sm:$0xff]
  %v44 = vld [vmem:[%s1 + $0x48] sm:$0xff]
  %v45 = vld [vmem:[%s1 + $0x50] sm:$0xff]
  %v46 = vld [vmem:[%s1 + $0x58] sm:$0xff]
  %v47 = vld [vmem:[%s1 + $0x60] sm:$0xff]
  %v48 = vld [vmem:[%s1 + $0x68] sm:$0xff]
  %v49 = vld [vmem:[%s1 + $0x70] sm:$0xff]
  %v50 = vld [vmem:[%s1 + $0x78] sm:$0xff]
  %v51 = vld [vmem:[%s2] sm:$0xf]
  %v53 = vlaneseq
  %v54 = vshrl.u32 %v53, 7
  %v55 = vsub.s32 0, %v54
  %v56 = vrot.slane %v51, %v55
  %v57 = vlaneseq
  %v58 = vshrl.u32 %v57, 7
  %v59 = vsub.s32 1, %v58
  %v60 = vrot.slane %v51, %v59
  %v61 = vlaneseq
  %v62 = vshrl.u32 %v61, 7
  %v63 = vsub.s32 2, %v62
  %v64 = vrot.slane %v51, %v63
  %v65 = vlaneseq
  %v66 = vshrl.u32 %v65, 7
  %v67 = vsub.s32 3, %v66
  %v68 = vrot.slane %v51, %v67
  %vm73 = vcmask 261120
  %v75 = vsel %vm73, %v34, 0
  %77 = vmatprep.subr.mxu0 %v36
  %78 = vmatpush1.msra.mxu0 %v35
  %79 = vmatprep.subr.mxu0 %v40
  %80 = vmatpush1.msra.mxu0 %v39
  %81 = vmatprep.subr.mxu0 %v44
  %82 = vmatpush1.msra.mxu0 %v43
  %83 = vmatprep.subr.mxu0 %v48
  %84 = vmatpush1.msra.mxu0 %v47
  %85 = vmatprep.subr.mxu0 0.0
  %86 = vmatpush1.msra.mxu0 0.0
  %87 = vmatprep.subr.mxu0 0.0
  %88 = vmatpush1.msra.mxu0 0.0
  %89 = vmatprep.subr.mxu0 0.0
  %90 = vmatpush1.msra.mxu0 0.0
  %91 = vmatprep.subr.mxu0 0.0
  %92 = vmatpush1.msra.mxu0 0.0
  %93 = vmatprep.subr.mxu0 0.0
  %94 = vmatpush1.msra.mxu0 0.0
  %95 = vmatprep.subr.mxu0 0.0
  %96 = vmatpush1.msra.mxu0 0.0
  %97 = vmatprep.subr.mxu0 0.0
  %98 = vmatpush1.msra.mxu0 0.0
  %99 = vmatprep.subr.mxu0 0.0
  %100 = vmatpush1.msra.mxu0 0.0
  %101 = vmatprep.subr.mxu0 0.0
  %102 = vmatpush1.msra.mxu0 0.0
  %103 = vmatprep.subr.mxu0 0.0
  %104 = vmatpush1.msra.mxu0 0.0
  %105 = vmatprep.subr.mxu0 0.0
  %106 = vmatpush1.msra.mxu0 0.0
  %107 = vmatprep.subr.mxu0 0.0
  %108 = vmatpush1.msra.mxu0 0.0
  %109 = vmatprep.subr.mxu0 0.0
  %110 = vmatpush1.msra.mxu0 0.0
  %111 = vmatprep.subr.mxu0 0.0
  %112 = vmatpush1.msra.mxu0 0.0
  %113 = vmatprep.subr.mxu0 0.0
  %114 = vmatpush1.msra.mxu0 0.0
  %115 = vmatprep.subr.mxu0 0.0
  %116 = vmatpush1.msra.mxu0 0.0
  %117 = vmatprep.subr.mxu0 0.0
  %118 = vmatpush1.msra.mxu0 0.0
  %119 = vmatprep.subr.mxu0 0.0
  %120 = vmatpush1.msra.mxu0 0.0
  %121 = vmatprep.subr.mxu0 0.0
  %122 = vmatpush1.msra.mxu0 0.0
  %123 = vmatprep.subr.mxu0 0.0
  %124 = vmatpush1.msra.mxu0 0.0
  %125 = vmatprep.subr.mxu0 0.0
  %126 = vmatpush1.msra.mxu0 0.0
  %127 = vmatprep.subr.mxu0 0.0
  %128 = vmatpush1.msra.mxu0 0.0
  %129 = vmatprep.subr.mxu0 0.0
  %130 = vmatpush1.msra.mxu0 0.0
  %131 = vmatprep.subr.mxu0 0.0
  %132 = vmatpush1.msra.mxu0 0.0
  %133 = vmatprep.subr.mxu0 0.0
  %134 = vmatpush1.msra.mxu0 0.0
  %135 = vmatprep.subr.mxu0 0.0
  %136 = vmatpush1.msra.mxu0 0.0
  %137 = vmatprep.subr.mxu0 0.0
  %138 = vmatpush1.msra.mxu0 0.0
  %139 = vmatprep.subr.mxu0 0.0
  %140 = vmatpush1.msra.mxu0 0.0
  %141 = vmatprep.mubr.f32.mxu0 0.0
  %142 = vmatmul.mubr.f32.gmra.mrb[0].mxu0 %v75
  %v143 = vpop.f32.mrb[0].mxu0
  %v144 = vadd.f32 %v56, %v143
  %v145 = vpop.f32.mrb[0].mxu0
  %v146 = vadd.f32 %v60, %v145
  %147 = vdwg.mxu0
  %148 = vmatprep.subr.mxu0 %v38
  %149 = vmatpush1.msra.mxu0 %v37
  %150 = vmatprep.subr.mxu0 %v42
  %151 = vmatpush1.msra.mxu0 %v41
  %152 = vmatprep.subr.mxu0 %v46
  %153 = vmatpush1.msra.mxu0 %v45
  %154 = vmatprep.subr.mxu0 %v50
  %155 = vmatpush1.msra.mxu0 %v49
  %156 = vmatprep.subr.mxu0 0.0
  %157 = vmatpush1.msra.mxu0 0.0
  %158 = vmatprep.subr.mxu0 0.0
  %159 = vmatpush1.msra.mxu0 0.0
  %160 = vmatprep.subr.mxu0 0.0
  %161 = vmatpush1.msra.mxu0 0.0
  %162 = vmatprep.subr.mxu0 0.0
  %163 = vmatpush1.msra.mxu0 0.0
  %164 = vmatprep.subr.mxu0 0.0
  %165 = vmatpush1.msra.mxu0 0.0
  %166 = vmatprep.subr.mxu0 0.0
  %167 = vmatpush1.msra.mxu0 0.0
  %168 = vmatprep.subr.mxu0 0.0
  %169 = vmatpush1.msra.mxu0 0.0
  %170 = vmatprep.subr.mxu0 0.0
  %171 = vmatpush1.msra.mxu0 0.0
  %172 = vmatprep.subr.mxu0 0.0
  %173 = vmatpush1.msra.mxu0 0.0
  %174 = vmatprep.subr.mxu0 0.0
  %175 = vmatpush1.msra.mxu0 0.0
  %176 = vmatprep.subr.mxu0 0.0
  %177 = vmatpush1.msra.mxu0 0.0
  %178 = vmatprep.subr.mxu0 0.0
  %179 = vmatpush1.msra.mxu0 0.0
  %180 = vmatprep.subr.mxu0 0.0
  %181 = vmatpush1.msra.mxu0 0.0
  %182 = vmatprep.subr.mxu0 0.0
  %183 = vmatpush1.msra.mxu0 0.0
  %184 = vmatprep.subr.mxu0 0.0
  %185 = vmatpush1.msra.mxu0 0.0
  %186 = vmatprep.subr.mxu0 0.0
  %187 = vmatpush1.msra.mxu0 0.0
  %188 = vmatprep.subr.mxu0 0.0
  %189 = vmatpush1.msra.mxu0 0.0
  %190 = vmatprep.subr.mxu0 0.0
  %191 = vmatpush1.msra.mxu0 0.0
  %192 = vmatprep.subr.mxu0 0.0
  %193 = vmatpush1.msra.mxu0 0.0
  %194 = vmatprep.subr.mxu0 0.0
  %195 = vmatpush1.msra.mxu0 0.0
  %196 = vmatprep.subr.mxu0 0.0
  %197 = vmatpush1.msra.mxu0 0.0
  %198 = vmatprep.subr.mxu0 0.0
  %199 = vmatpush1.msra.mxu0 0.0
  %200 = vmatprep.subr.mxu0 0.0
  %201 = vmatpush1.msra.mxu0 0.0
  %202 = vmatprep.subr.mxu0 0.0
  %203 = vmatpush1.msra.mxu0 0.0
  %204 = vmatprep.subr.mxu0 0.0
  %205 = vmatpush1.msra.mxu0 0.0
  %206 = vmatprep.subr.mxu0 0.0
  %207 = vmatpush1.msra.mxu0 0.0
  %208 = vmatprep.subr.mxu0 0.0
  %209 = vmatpush1.msra.mxu0 0.0
  %210 = vmatprep.subr.mxu0 0.0
  %211 = vmatpush1.msra.mxu0 0.0
  %212 = vmatprep.mubr.f32.mxu0 0.0
  %213 = vmatmul.mubr.f32.gmra.mrb[0].mxu0 %v75
  %v214 = vpop.f32.mrb[0].mxu0
  %v215 = vadd.f32 %v64, %v214
  %v216 = vpop.f32.mrb[0].mxu0
  %v217 = vadd.f32 %v68, %v216
  %218 = vdwg.mxu0
  %v219 = vmax.f32 %v144, 0.0
  %v220 = vmax.f32 %v146, 0.0
  %v221 = vmax.f32 %v215, 0.0
  %v222 = vmax.f32 %v217, 0.0
  %vm223 = vcmask 64512
  %224 = vst.msk [vmem:[#allocation2] sm:$0xff] %vm223, 0.0
  %vm225 = vcmask 58368
  %226 = vst.msk [vmem:[#allocation2 + $0x8] sm:$0x3] %vm225, 0.0
  %227 = vst.msk [vmem:[#allocation2 + $0x10] sm:$0xff] %vm223, 0.0
  %228 = vst.msk [vmem:[#allocation2 + $0x18] sm:$0x3] %vm225, 0.0
  %229 = vst.msk [vmem:[#allocation2 + $0x20] sm:$0xff] %vm223, 0.0
  %230 = vst.msk [vmem:[#allocation2 + $0x28] sm:$0x3] %vm225, 0.0
  %231 = vst.msk [vmem:[#allocation2 + $0x30] sm:$0xff] %vm223, 0.0
  %232 = vst.msk [vmem:[#allocation2 + $0x38] sm:$0x3] %vm225, 0.0
  %233 = vst.msk [vmem:[#allocation2 + $0x40] sm:$0xff] %vm223, 0.0
  %234 = vst.msk [vmem:[#allocation2 + $0x48] sm:$0x3] %vm225, 0.0
  %235 = vst.msk [vmem:[#allocation2 + $0x50] sm:$0xff] %vm223, 0.0
  %236 = vst.msk [vmem:[#allocation2 + $0x58] sm:$0x3] %vm225, 0.0
  %237 = vst.msk [vmem:[#allocation2 + $0x60] sm:$0xff] %vm223, 0.0
  %238 = vst.msk [vmem:[#allocation2 + $0x68] sm:$0x3] %vm225, 0.0
  %239 = vst.msk [vmem:[#allocation2 + $0x70] sm:$0xff] %vm223, 0.0
  %240 = vst.msk [vmem:[#allocation2 + $0x78] sm:$0x3] %vm225, 0.0
  %241 = vst.msk [vmem:[#allocation2 + $0x80] sm:$0xff] %vm223, 0.0
  %242 = vst.msk [vmem:[#allocation2 + $0x88] sm:$0x3] %vm225, 0.0
  %243 = vst.msk [vmem:[#allocation2 + $0x90] sm:$0xff] %vm223, 0.0
  %244 = vst.msk [vmem:[#allocation2 + $0x98] sm:$0x3] %vm225, 0.0
  %245 = vst.msk [vmem:[#allocation2 + $0xa0] sm:$0xff] %vm223, 0.0
  %246 = vst.msk [vmem:[#allocation2 + $0xa8] sm:$0x3] %vm225, 0.0
  %247 = vst.msk [vmem:[#allocation2 + $0xb0] sm:$0xff] %vm223, 0.0
  %248 = vst.msk [vmem:[#allocation2 + $0xb8] sm:$0x3] %vm225, 0.0
  %249 = vst.msk [vmem:[#allocation2 + $0xc0] sm:$0xff] %vm223, 0.0
  %250 = vst.msk [vmem:[#allocation2 + $0xc8] sm:$0x3] %vm225, 0.0
  %251 = vst.msk [vmem:[#allocation2 + $0xd0] sm:$0xff] %vm223, 0.0
  %252 = vst.msk [vmem:[#allocation2 + $0xd8] sm:$0x3] %vm225, 0.0
  %253 = vst.msk [vmem:[#allocation2 + $0xe0] sm:$0xff] %vm223, 0.0
  %254 = vst.msk [vmem:[#allocation2 + $0xe8] sm:$0x3] %vm225, 0.0
  %255 = vst.msk [vmem:[#allocation2 + $0xf0] sm:$0xff] %vm223, 0.0
  %256 = vst.msk [vmem:[#allocation2 + $0xf8] sm:$0x3] %vm225, 0.0
  %257 = vst.msk [vmem:[#allocation2 + $0x100] sm:$0xff] %vm223, 0.0
  %258 = vst.msk [vmem:[#allocation2 + $0x108] sm:$0x3] %vm225, 0.0
  %259 = vst.msk [vmem:[#allocation2 + $0x110] sm:$0xff] %vm223, 0.0
  %260 = vst.msk [vmem:[#allocation2 + $0x118] sm:$0x3] %vm225, 0.0
  %261 = vst.msk [vmem:[#allocation2 + $0x120] sm:$0xff] %vm223, 0.0
  %262 = vst.msk [vmem:[#allocation2 + $0x128] sm:$0x3] %vm225, 0.0
  %263 = vst.msk [vmem:[#allocation2 + $0x130] sm:$0xff] %vm223, 0.0
  %264 = vst.msk [vmem:[#allocation2 + $0x138] sm:$0x3] %vm225, 0.0
  %v267 = vunpack.c.l.s4 1966171168
  %v268 = vunpack.c.0.s8 %v267
  %v269 = vlaneseq
  %v270 = vshrl.u32 %v269, 7
  %v271 = vsub.s32 %v268, %v270
  %v272 = vrot.slane %v219, %v271
  %v273 = vcombine.high %v272, %v272
  %v275 = vunpack.c.l.s4 1966171168
  %v276 = vunpack.c.0.s8 %v275
  %v277 = vlaneseq
  %v278 = vshrl.u32 %v277, 7
  %v279 = vsub.s32 %v276, %v278
  %v280 = vrot.slane %v272, %v279
  %v282 = vunpack.c.l.s4 1966171168
  %v283 = vunpack.c.0.s8 %v282
  %v284 = vlaneseq
  %v285 = vshrl.u32 %v284, 7
  %v286 = vsub.s32 %v283, %v285
  %v287 = vrot.slane %v273, %v286
  %s290 = scalar_lea.vmem [#allocation2], 16
  %vm291 = vcmask 57344
  %292 = vst.msk [vmem:[%s290 + $0x1] sm:$0x1] %vm291, %v280
  %293 = vst.msk [vmem:[%s290 + $0xa1] sm:$0x1] %vm291, %v287
  %v294 = vlaneseq
  %v295 = vshrl.u32 %v294, 7
  %v296 = vsub.s32 0, %v295
  %v297 = vrot.slane %v280, %v296
  %v298 = vlaneseq
  %v299 = vshrl.u32 %v298, 7
  %v300 = vsub.s32 0, %v299
  %v301 = vrot.slane %v287, %v300
  %302 = vrot.lane.b32.xlu0 %v297, 120
  %v303 = vpop.permute.xlu0 %302
  %304 = vrot.lane.b32.xlu0 %v301, 120
  %v305 = vpop.permute.xlu0 %304
  %308 = vst.msk [vmem:[%s290 + $0x2] sm:$0x1] %vm291, %v303
  %309 = vst.msk [vmem:[%s290 + $0xa2] sm:$0x1] %vm291, %v305
  %310 = vrot.lane.b32.xlu0 %v297, 112
  %v311 = vpop.permute.xlu0 %310
  %312 = vrot.lane.b32.xlu0 %v301, 112
  %v313 = vpop.permute.xlu0 %312
  %316 = vst.msk [vmem:[%s290 + $0x3] sm:$0x1] %vm291, %v311
  %317 = vst.msk [vmem:[%s290 + $0xa3] sm:$0x1] %vm291, %v313
  %318 = vrot.lane.b32.xlu0 %v297, 104
  %v319 = vpop.permute.xlu0 %318
  %320 = vrot.lane.b32.xlu0 %v301, 104
  %v321 = vpop.permute.xlu0 %320
  %324 = vst.msk [vmem:[%s290 + $0x4] sm:$0x1] %vm291, %v319
  %325 = vst.msk [vmem:[%s290 + $0xa4] sm:$0x1] %vm291, %v321
  %326 = vrot.lane.b32.xlu0 %v297, 96
  %v327 = vpop.permute.xlu0 %326
  %328 = vrot.lane.b32.xlu0 %v301, 96
  %v329 = vpop.permute.xlu0 %328
  %332 = vst.msk [vmem:[%s290 + $0x5] sm:$0x1] %vm291, %v327
  %333 = vst.msk [vmem:[%s290 + $0xa5] sm:$0x1] %vm291, %v329
  %334 = vrot.lane.b32.xlu0 %v297, 88
  %v335 = vpop.permute.xlu0 %334
  %336 = vrot.lane.b32.xlu0 %v301, 88
  %v337 = vpop.permute.xlu0 %336
  %340 = vst.msk [vmem:[%s290 + $0x6] sm:$0x1] %vm291, %v335
  %341 = vst.msk [vmem:[%s290 + $0xa6] sm:$0x1] %vm291, %v337
  %342 = vrot.lane.b32.xlu0 %v297, 80
  %v343 = vpop.permute.xlu0 %342
  %344 = vrot.lane.b32.xlu0 %v301, 80
  %v345 = vpop.permute.xlu0 %344
  %348 = vst.msk [vmem:[%s290 + $0x7] sm:$0x1] %vm291, %v343
  %349 = vst.msk [vmem:[%s290 + $0xa7] sm:$0x1] %vm291, %v345
  %350 = vrot.lane.b32.xlu0 %v297, 72
  %v351 = vpop.permute.xlu0 %350
  %352 = vrot.lane.b32.xlu0 %v301, 72
  %v353 = vpop.permute.xlu0 %352
  %356 = vst.msk [vmem:[%s290 + $0x8] sm:$0x1] %vm291, %v351
  %357 = vst.msk [vmem:[%s290 + $0xa8] sm:$0x1] %vm291, %v353
  %358 = vrot.lane.b32.xlu0 %v297, 64
  %v359 = vpop.permute.xlu0 %358
  %360 = vrot.lane.b32.xlu0 %v301, 64
  %v361 = vpop.permute.xlu0 %360
  %s364 = scalar_lea.vmem [#allocation2], 32
  %365 = vst.msk [vmem:[%s364 + $0x1] sm:$0x1] %vm291, %v359
  %366 = vst.msk [vmem:[%s364 + $0xa1] sm:$0x1] %vm291, %v361
  %367 = vrot.lane.b32.xlu0 %v297, 56
  %v368 = vpop.permute.xlu0 %367
  %369 = vrot.lane.b32.xlu0 %v301, 56
  %v370 = vpop.permute.xlu0 %369
  %373 = vst.msk [vmem:[%s364 + $0x2] sm:$0x1] %vm291, %v368
  %374 = vst.msk [vmem:[%s364 + $0xa2] sm:$0x1] %vm291, %v370
  %375 = vrot.lane.b32.xlu0 %v297, 48
  %v376 = vpop.permute.xlu0 %375
  %377 = vrot.lane.b32.xlu0 %v301, 48
  %v378 = vpop.permute.xlu0 %377
  %381 = vst.msk [vmem:[%s364 + $0x3] sm:$0x1] %vm291, %v376
  %382 = vst.msk [vmem:[%s364 + $0xa3] sm:$0x1] %vm291, %v378
  %383 = vrot.lane.b32.xlu0 %v297, 40
  %v384 = vpop.permute.xlu0 %383
  %385 = vrot.lane.b32.xlu0 %v301, 40
  %v386 = vpop.permute.xlu0 %385
  %389 = vst.msk [vmem:[%s364 + $0x4] sm:$0x1] %vm291, %v384
  %390 = vst.msk [vmem:[%s364 + $0xa4] sm:$0x1] %vm291, %v386
  %391 = vrot.lane.b32.xlu0 %v297, 32
  %v392 = vpop.permute.xlu0 %391
  %393 = vrot.lane.b32.xlu0 %v301, 32
  %v394 = vpop.permute.xlu0 %393
  %397 = vst.msk [vmem:[%s364 + $0x5] sm:$0x1] %vm291, %v392
  %398 = vst.msk [vmem:[%s364 + $0xa5] sm:$0x1] %vm291, %v394
  %399 = vrot.lane.b32.xlu0 %v297, 24
  %v400 = vpop.permute.xlu0 %399
  %401 = vrot.lane.b32.xlu0 %v301, 24
  %v402 = vpop.permute.xlu0 %401
  %405 = vst.msk [vmem:[%s364 + $0x6] sm:$0x1] %vm291, %v400
  %406 = vst.msk [vmem:[%s364 + $0xa6] sm:$0x1] %vm291, %v402
  %407 = vrot.lane.b32.xlu0 %v297, 16
  %v408 = vpop.permute.xlu0 %407
  %409 = vrot.lane.b32.xlu0 %v301, 16
  %v410 = vpop.permute.xlu0 %409
  %413 = vst.msk [vmem:[%s364 + $0x7] sm:$0x1] %vm291, %v408
  %414 = vst.msk [vmem:[%s364 + $0xa7] sm:$0x1] %vm291, %v410
  %415 = vrot.lane.b32.xlu0 %v297, 8
  %v416 = vpop.permute.xlu0 %415
  %417 = vrot.lane.b32.xlu0 %v301, 8
  %v418 = vpop.permute.xlu0 %417
  %421 = vst.msk [vmem:[%s364 + $0x8] sm:$0x1] %vm291, %v416
  %422 = vst.msk [vmem:[%s364 + $0xa8] sm:$0x1] %vm291, %v418
  %v425 = vunpack.c.l.s4 1966171168
  %v426 = vunpack.c.0.s8 %v425
  %v427 = vlaneseq
  %v428 = vshrl.u32 %v427, 7
  %v429 = vsub.s32 %v426, %v428
  %v430 = vrot.slane %v220, %v429
  %v431 = vcombine.high %v430, %v430
  %v433 = vunpack.c.l.s4 1966171168
  %v434 = vunpack.c.0.s8 %v433
  %v435 = vlaneseq
  %v436 = vshrl.u32 %v435, 7
  %v437 = vsub.s32 %v434, %v436
  %v438 = vrot.slane %v430, %v437
  %v440 = vunpack.c.l.s4 1966171168
  %v441 = vunpack.c.0.s8 %v440
  %v442 = vlaneseq
  %v443 = vshrl.u32 %v442, 7
  %v444 = vsub.s32 %v441, %v443
  %v445 = vrot.slane %v431, %v444
  %s448 = scalar_lea.vmem [#allocation2], 48
  %449 = vst.msk [vmem:[%s448 + $0x1] sm:$0x1] %vm291, %v438
  %450 = vst.msk [vmem:[%s448 + $0xa1] sm:$0x1] %vm291, %v445
  %v451 = vlaneseq
  %v452 = vshrl.u32 %v451, 7
  %v453 = vsub.s32 0, %v452
  %v454 = vrot.slane %v438, %v453
  %v455 = vlaneseq
  %v456 = vshrl.u32 %v455, 7
  %v457 = vsub.s32 0, %v456
  %v458 = vrot.slane %v445, %v457
  %459 = vrot.lane.b32.xlu0 %v454, 120
  %v460 = vpop.permute.xlu0 %459
  %461 = vrot.lane.b32.xlu0 %v458, 120
  %v462 = vpop.permute.xlu0 %461
  %465 = vst.msk [vmem:[%s448 + $0x2] sm:$0x1] %vm291, %v460
  %466 = vst.msk [vmem:[%s448 + $0xa2] sm:$0x1] %vm291, %v462
  %467 = vrot.lane.b32.xlu0 %v454, 112
  %v468 = vpop.permute.xlu0 %467
  %469 = vrot.lane.b32.xlu0 %v458, 112
  %v470 = vpop.permute.xlu0 %469
  %473 = vst.msk [vmem:[%s448 + $0x3] sm:$0x1] %vm291, %v468
  %474 = vst.msk [vmem:[%s448 + $0xa3] sm:$0x1] %vm291, %v470
  %475 = vrot.lane.b32.xlu0 %v454, 104
  %v476 = vpop.permute.xlu0 %475
  %477 = vrot.lane.b32.xlu0 %v458, 104
  %v478 = vpop.permute.xlu0 %477
  %481 = vst.msk [vmem:[%s448 + $0x4] sm:$0x1] %vm291, %v476
  %482 = vst.msk [vmem:[%s448 + $0xa4] sm:$0x1] %vm291, %v478
  %483 = vrot.lane.b32.xlu0 %v454, 96
  %v484 = vpop.permute.xlu0 %483
  %485 = vrot.lane.b32.xlu0 %v458, 96
  %v486 = vpop.permute.xlu0 %485
  %489 = vst.msk [vmem:[%s448 + $0x5] sm:$0x1] %vm291, %v484
  %490 = vst.msk [vmem:[%s448 + $0xa5] sm:$0x1] %vm291, %v486
  %491 = vrot.lane.b32.xlu0 %v454, 88
  %v492 = vpop.permute.xlu0 %491
  %493 = vrot.lane.b32.xlu0 %v458, 88
  %v494 = vpop.permute.xlu0 %493
  %497 = vst.msk [vmem:[%s448 + $0x6] sm:$0x1] %vm291, %v492
  %498 = vst.msk [vmem:[%s448 + $0xa6] sm:$0x1] %vm291, %v494
  %499 = vrot.lane.b32.xlu0 %v454, 80
  %v500 = vpop.permute.xlu0 %499
  %501 = vrot.lane.b32.xlu0 %v458, 80
  %v502 = vpop.permute.xlu0 %501
  %505 = vst.msk [vmem:[%s448 + $0x7] sm:$0x1] %vm291, %v500
  %506 = vst.msk [vmem:[%s448 + $0xa7] sm:$0x1] %vm291, %v502
  %507 = vrot.lane.b32.xlu0 %v454, 72
  %v508 = vpop.permute.xlu0 %507
  %509 = vrot.lane.b32.xlu0 %v458, 72
  %v510 = vpop.permute.xlu0 %509
  %513 = vst.msk [vmem:[%s448 + $0x8] sm:$0x1] %vm291, %v508
  %514 = vst.msk [vmem:[%s448 + $0xa8] sm:$0x1] %vm291, %v510
  %515 = vrot.lane.b32.xlu0 %v454, 64
  %v516 = vpop.permute.xlu0 %515
  %517 = vrot.lane.b32.xlu0 %v458, 64
  %v518 = vpop.permute.xlu0 %517
  %s521 = scalar_lea.vmem [#allocation2], 64
  %522 = vst.msk [vmem:[%s521 + $0x1] sm:$0x1] %vm291, %v516
  %523 = vst.msk [vmem:[%s521 + $0xa1] sm:$0x1] %vm291, %v518
  %524 = vrot.lane.b32.xlu0 %v454, 56
  %v525 = vpop.permute.xlu0 %524
  %526 = vrot.lane.b32.xlu0 %v458, 56
  %v527 = vpop.permute.xlu0 %526
  %530 = vst.msk [vmem:[%s521 + $0x2] sm:$0x1] %vm291, %v525
  %531 = vst.msk [vmem:[%s521 + $0xa2] sm:$0x1] %vm291, %v527
  %532 = vrot.lane.b32.xlu0 %v454, 48
  %v533 = vpop.permute.xlu0 %532
  %534 = vrot.lane.b32.xlu0 %v458, 48
  %v535 = vpop.permute.xlu0 %534
  %538 = vst.msk [vmem:[%s521 + $0x3] sm:$0x1] %vm291, %v533
  %539 = vst.msk [vmem:[%s521 + $0xa3] sm:$0x1] %vm291, %v535
  %540 = vrot.lane.b32.xlu0 %v454, 40
  %v541 = vpop.permute.xlu0 %540
  %542 = vrot.lane.b32.xlu0 %v458, 40
  %v543 = vpop.permute.xlu0 %542
  %546 = vst.msk [vmem:[%s521 + $0x4] sm:$0x1] %vm291, %v541
  %547 = vst.msk [vmem:[%s521 + $0xa4] sm:$0x1] %vm291, %v543
  %548 = vrot.lane.b32.xlu0 %v454, 32
  %v549 = vpop.permute.xlu0 %548
  %550 = vrot.lane.b32.xlu0 %v458, 32
  %v551 = vpop.permute.xlu0 %550
  %554 = vst.msk [vmem:[%s521 + $0x5] sm:$0x1] %vm291, %v549
  %555 = vst.msk [vmem:[%s521 + $0xa5] sm:$0x1] %vm291, %v551
  %556 = vrot.lane.b32.xlu0 %v454, 24
  %v557 = vpop.permute.xlu0 %556
  %558 = vrot.lane.b32.xlu0 %v458, 24
  %v559 = vpop.permute.xlu0 %558
  %562 = vst.msk [vmem:[%s521 + $0x6] sm:$0x1] %vm291, %v557
  %563 = vst.msk [vmem:[%s521 + $0xa6] sm:$0x1] %vm291, %v559
  %564 = vrot.lane.b32.xlu0 %v454, 16
  %v565 = vpop.permute.xlu0 %564
  %566 = vrot.lane.b32.xlu0 %v458, 16
  %v567 = vpop.permute.xlu0 %566
  %570 = vst.msk [vmem:[%s521 + $0x7] sm:$0x1] %vm291, %v565
  %571 = vst.msk [vmem:[%s521 + $0xa7] sm:$0x1] %vm291, %v567
  %572 = vrot.lane.b32.xlu0 %v454, 8
  %v573 = vpop.permute.xlu0 %572
  %574 = vrot.lane.b32.xlu0 %v458, 8
  %v575 = vpop.permute.xlu0 %574
  %578 = vst.msk [vmem:[%s521 + $0x8] sm:$0x1] %vm291, %v573
  %579 = vst.msk [vmem:[%s521 + $0xa8] sm:$0x1] %vm291, %v575
  %v582 = vunpack.c.l.s4 1966171168
  %v583 = vunpack.c.0.s8 %v582
  %v584 = vlaneseq
  %v585 = vshrl.u32 %v584, 7
  %v586 = vsub.s32 %v583, %v585
  %v587 = vrot.slane %v221, %v586
  %v588 = vcombine.high %v587, %v587
  %v590 = vunpack.c.l.s4 1966171168
  %v591 = vunpack.c.0.s8 %v590
  %v592 = vlaneseq
  %v593 = vshrl.u32 %v592, 7
  %v594 = vsub.s32 %v591, %v593
  %v595 = vrot.slane %v587, %v594
  %v597 = vunpack.c.l.s4 1966171168
  %v598 = vunpack.c.0.s8 %v597
  %v599 = vlaneseq
  %v600 = vshrl.u32 %v599, 7
  %v601 = vsub.s32 %v598, %v600
  %v602 = vrot.slane %v588, %v601
  %s605 = scalar_lea.vmem [#allocation2], 80
  %606 = vst.msk [vmem:[%s605 + $0x1] sm:$0x1] %vm291, %v595
  %607 = vst.msk [vmem:[%s605 + $0xa1] sm:$0x1] %vm291, %v602
  %v608 = vlaneseq
  %v609 = vshrl.u32 %v608, 7
  %v610 = vsub.s32 0, %v609
  %v611 = vrot.slane %v595, %v610
  %v612 = vlaneseq
  %v613 = vshrl.u32 %v612, 7
  %v614 = vsub.s32 0, %v613
  %v615 = vrot.slane %v602, %v614
  %616 = vrot.lane.b32.xlu0 %v611, 120
  %v617 = vpop.permute.xlu0 %616
  %618 = vrot.lane.b32.xlu0 %v615, 120
  %v619 = vpop.permute.xlu0 %618
  %622 = vst.msk [vmem:[%s605 + $0x2] sm:$0x1] %vm291, %v617
  %623 = vst.msk [vmem:[%s605 + $0xa2] sm:$0x1] %vm291, %v619
  %624 = vrot.lane.b32.xlu0 %v611, 112
  %v625 = vpop.permute.xlu0 %624
  %626 = vrot.lane.b32.xlu0 %v615, 112
  %v627 = vpop.permute.xlu0 %626
  %630 = vst.msk [vmem:[%s605 + $0x3] sm:$0x1] %vm291, %v625
  %631 = vst.msk [vmem:[%s605 + $0xa3] sm:$0x1] %vm291, %v627
  %632 = vrot.lane.b32.xlu0 %v611, 104
  %v633 = vpop.permute.xlu0 %632
  %634 = vrot.lane.b32.xlu0 %v615, 104
  %v635 = vpop.permute.xlu0 %634
  %638 = vst.msk [vmem:[%s605 + $0x4] sm:$0x1] %vm291, %v633
  %639 = vst.msk [vmem:[%s605 + $0xa4] sm:$0x1] %vm291, %v635
  %640 = vrot.lane.b32.xlu0 %v611, 96
  %v641 = vpop.permute.xlu0 %640
  %642 = vrot.lane.b32.xlu0 %v615, 96
  %v643 = vpop.permute.xlu0 %642
  %646 = vst.msk [vmem:[%s605 + $0x5] sm:$0x1] %vm291, %v641
  %647 = vst.msk [vmem:[%s605 + $0xa5] sm:$0x1] %vm291, %v643
  %648 = vrot.lane.b32.xlu0 %v611, 88
  %v649 = vpop.permute.xlu0 %648
  %650 = vrot.lane.b32.xlu0 %v615, 88
  %v651 = vpop.permute.xlu0 %650
  %654 = vst.msk [vmem:[%s605 + $0x6] sm:$0x1] %vm291, %v649
  %655 = vst.msk [vmem:[%s605 + $0xa6] sm:$0x1] %vm291, %v651
  %656 = vrot.lane.b32.xlu0 %v611, 80
  %v657 = vpop.permute.xlu0 %656
  %658 = vrot.lane.b32.xlu0 %v615, 80
  %v659 = vpop.permute.xlu0 %658
  %662 = vst.msk [vmem:[%s605 + $0x7] sm:$0x1] %vm291, %v657
  %663 = vst.msk [vmem:[%s605 + $0xa7] sm:$0x1] %vm291, %v659
  %664 = vrot.lane.b32.xlu0 %v611, 72
  %v665 = vpop.permute.xlu0 %664
  %666 = vrot.lane.b32.xlu0 %v615, 72
  %v667 = vpop.permute.xlu0 %666
  %670 = vst.msk [vmem:[%s605 + $0x8] sm:$0x1] %vm291, %v665
  %671 = vst.msk [vmem:[%s605 + $0xa8] sm:$0x1] %vm291, %v667
  %672 = vrot.lane.b32.xlu0 %v611, 64
  %v673 = vpop.permute.xlu0 %672
  %674 = vrot.lane.b32.xlu0 %v615, 64
  %v675 = vpop.permute.xlu0 %674
  %s678 = scalar_lea.vmem [#allocation2], 96
  %679 = vst.msk [vmem:[%s678 + $0x1] sm:$0x1] %vm291, %v673
  %680 = vst.msk [vmem:[%s678 + $0xa1] sm:$0x1] %vm291, %v675
  %681 = vrot.lane.b32.xlu0 %v611, 56
  %v682 = vpop.permute.xlu0 %681
  %683 = vrot.lane.b32.xlu0 %v615, 56
  %v684 = vpop.permute.xlu0 %683
  %687 = vst.msk [vmem:[%s678 + $0x2] sm:$0x1] %vm291, %v682
  %688 = vst.msk [vmem:[%s678 + $0xa2] sm:$0x1] %vm291, %v684
  %689 = vrot.lane.b32.xlu0 %v611, 48
  %v690 = vpop.permute.xlu0 %689
  %691 = vrot.lane.b32.xlu0 %v615, 48
  %v692 = vpop.permute.xlu0 %691
  %695 = vst.msk [vmem:[%s678 + $0x3] sm:$0x1] %vm291, %v690
  %696 = vst.msk [vmem:[%s678 + $0xa3] sm:$0x1] %vm291, %v692
  %697 = vrot.lane.b32.xlu0 %v611, 40
  %v698 = vpop.permute.xlu0 %697
  %699 = vrot.lane.b32.xlu0 %v615, 40
  %v700 = vpop.permute.xlu0 %699
  %703 = vst.msk [vmem:[%s678 + $0x4] sm:$0x1] %vm291, %v698
  %704 = vst.msk [vmem:[%s678 + $0xa4] sm:$0x1] %vm291, %v700
  %705 = vrot.lane.b32.xlu0 %v611, 32
  %v706 = vpop.permute.xlu0 %705
  %707 = vrot.lane.b32.xlu0 %v615, 32
  %v708 = vpop.permute.xlu0 %707
  %711 = vst.msk [vmem:[%s678 + $0x5] sm:$0x1] %vm291, %v706
  %712 = vst.msk [vmem:[%s678 + $0xa5] sm:$0x1] %vm291, %v708
  %713 = vrot.lane.b32.xlu0 %v611, 24
  %v714 = vpop.permute.xlu0 %713
  %715 = vrot.lane.b32.xlu0 %v615, 24
  %v716 = vpop.permute.xlu0 %715
  %719 = vst.msk [vmem:[%s678 + $0x6] sm:$0x1] %vm291, %v714
  %720 = vst.msk [vmem:[%s678 + $0xa6] sm:$0x1] %vm291, %v716
  %721 = vrot.lane.b32.xlu0 %v611, 16
  %v722 = vpop.permute.xlu0 %721
  %723 = vrot.lane.b32.xlu0 %v615, 16
  %v724 = vpop.permute.xlu0 %723
  %727 = vst.msk [vmem:[%s678 + $0x7] sm:$0x1] %vm291, %v722
  %728 = vst.msk [vmem:[%s678 + $0xa7] sm:$0x1] %vm291, %v724
  %729 = vrot.lane.b32.xlu0 %v611, 8
  %v730 = vpop.permute.xlu0 %729
  %731 = vrot.lane.b32.xlu0 %v615, 8
  %v732 = vpop.permute.xlu0 %731
  %735 = vst.msk [vmem:[%s678 + $0x8] sm:$0x1] %vm291, %v730
  %736 = vst.msk [vmem:[%s678 + $0xa8] sm:$0x1] %vm291, %v732
  %v739 = vunpack.c.l.s4 1966171168
  %v740 = vunpack.c.0.s8 %v739
  %v741 = vlaneseq
  %v742 = vshrl.u32 %v741, 7
  %v743 = vsub.s32 %v740, %v742
  %v744 = vrot.slane %v222, %v743
  %v745 = vcombine.high %v744, %v744
  %v747 = vunpack.c.l.s4 1966171168
  %v748 = vunpack.c.0.s8 %v747
  %v749 = vlaneseq
  %v750 = vshrl.u32 %v749, 7
  %v751 = vsub.s32 %v748, %v750
  %v752 = vrot.slane %v744, %v751
  %v754 = vunpack.c.l.s4 1966171168
  %v755 = vunpack.c.0.s8 %v754
  %v756 = vlaneseq
  %v757 = vshrl.u32 %v756, 7
  %v758 = vsub.s32 %v755, %v757
  %v759 = vrot.slane %v745, %v758
  %s762 = scalar_lea.vmem [#allocation2], 112
  %763 = vst.msk [vmem:[%s762 + $0x1] sm:$0x1] %vm291, %v752
  %764 = vst.msk [vmem:[%s762 + $0xa1] sm:$0x1] %vm291, %v759
  %v765 = vlaneseq
  %v766 = vshrl.u32 %v765, 7
  %v767 = vsub.s32 0, %v766
  %v768 = vrot.slane %v752, %v767
  %v769 = vlaneseq
  %v770 = vshrl.u32 %v769, 7
  %v771 = vsub.s32 0, %v770
  %v772 = vrot.slane %v759, %v771
  %773 = vrot.lane.b32.xlu0 %v768, 120
  %v774 = vpop.permute.xlu0 %773
  %775 = vrot.lane.b32.xlu0 %v772, 120
  %v776 = vpop.permute.xlu0 %775
  %779 = vst.msk [vmem:[%s762 + $0x2] sm:$0x1] %vm291, %v774
  %780 = vst.msk [vmem:[%s762 + $0xa2] sm:$0x1] %vm291, %v776
  %781 = vrot.lane.b32.xlu0 %v768, 112
  %v782 = vpop.permute.xlu0 %781
  %783 = vrot.lane.b32.xlu0 %v772, 112
  %v784 = vpop.permute.xlu0 %783
  %787 = vst.msk [vmem:[%s762 + $0x3] sm:$0x1] %vm291, %v782
  %788 = vst.msk [vmem:[%s762 + $0xa3] sm:$0x1] %vm291, %v784
  %789 = vrot.lane.b32.xlu0 %v768, 104
  %v790 = vpop.permute.xlu0 %789
  %791 = vrot.lane.b32.xlu0 %v772, 104
  %v792 = vpop.permute.xlu0 %791
  %795 = vst.msk [vmem:[%s762 + $0x4] sm:$0x1] %vm291, %v790
  %796 = vst.msk [vmem:[%s762 + $0xa4] sm:$0x1] %vm291, %v792
  %797 = vrot.lane.b32.xlu0 %v768, 96
  %v798 = vpop.permute.xlu0 %797
  %799 = vrot.lane.b32.xlu0 %v772, 96
  %v800 = vpop.permute.xlu0 %799
  %803 = vst.msk [vmem:[%s762 + $0x5] sm:$0x1] %vm291, %v798
  %804 = vst.msk [vmem:[%s762 + $0xa5] sm:$0x1] %vm291, %v800
  %805 = vrot.lane.b32.xlu0 %v768, 88
  %v806 = vpop.permute.xlu0 %805
  %807 = vrot.lane.b32.xlu0 %v772, 88
  %v808 = vpop.permute.xlu0 %807
  %811 = vst.msk [vmem:[%s762 + $0x6] sm:$0x1] %vm291, %v806
  %812 = vst.msk [vmem:[%s762 + $0xa6] sm:$0x1] %vm291, %v808
  %813 = vrot.lane.b32.xlu0 %v768, 80
  %v814 = vpop.permute.xlu0 %813
  %815 = vrot.lane.b32.xlu0 %v772, 80
  %v816 = vpop.permute.xlu0 %815
  %819 = vst.msk [vmem:[%s762 + $0x7] sm:$0x1] %vm291, %v814
  %820 = vst.msk [vmem:[%s762 + $0xa7] sm:$0x1] %vm291, %v816
  %821 = vrot.lane.b32.xlu0 %v768, 72
  %v822 = vpop.permute.xlu0 %821
  %823 = vrot.lane.b32.xlu0 %v772, 72
  %v824 = vpop.permute.xlu0 %823
  %827 = vst.msk [vmem:[%s762 + $0x8] sm:$0x1] %vm291, %v822
  %828 = vst.msk [vmem:[%s762 + $0xa8] sm:$0x1] %vm291, %v824
  %829 = vrot.lane.b32.xlu0 %v768, 64
  %v830 = vpop.permute.xlu0 %829
  %831 = vrot.lane.b32.xlu0 %v772, 64
  %v832 = vpop.permute.xlu0 %831
  %s835 = scalar_lea.vmem [#allocation2], 128
  %836 = vst.msk [vmem:[%s835 + $0x1] sm:$0x1] %vm291, %v830
  %837 = vst.msk [vmem:[%s835 + $0xa1] sm:$0x1] %vm291, %v832
  %838 = vrot.lane.b32.xlu0 %v768, 56
  %v839 = vpop.permute.xlu0 %838
  %840 = vrot.lane.b32.xlu0 %v772, 56
  %v841 = vpop.permute.xlu0 %840
  %844 = vst.msk [vmem:[%s835 + $0x2] sm:$0x1] %vm291, %v839
  %845 = vst.msk [vmem:[%s835 + $0xa2] sm:$0x1] %vm291, %v841
  %846 = vrot.lane.b32.xlu0 %v768, 48
  %v847 = vpop.permute.xlu0 %846
  %848 = vrot.lane.b32.xlu0 %v772, 48
  %v849 = vpop.permute.xlu0 %848
  %852 = vst.msk [vmem:[%s835 + $0x3] sm:$0x1] %vm291, %v847
  %853 = vst.msk [vmem:[%s835 + $0xa3] sm:$0x1] %vm291, %v849
  %854 = vrot.lane.b32.xlu0 %v768, 40
  %v855 = vpop.permute.xlu0 %854
  %856 = vrot.lane.b32.xlu0 %v772, 40
  %v857 = vpop.permute.xlu0 %856
  %860 = vst.msk [vmem:[%s835 + $0x4] sm:$0x1] %vm291, %v855
  %861 = vst.msk [vmem:[%s835 + $0xa4] sm:$0x1] %vm291, %v857
  %862 = vrot.lane.b32.xlu0 %v768, 32
  %v863 = vpop.permute.xlu0 %862
  %864 = vrot.lane.b32.xlu0 %v772, 32
  %v865 = vpop.permute.xlu0 %864
  %868 = vst.msk [vmem:[%s835 + $0x5] sm:$0x1] %vm291, %v863
  %869 = vst.msk [vmem:[%s835 + $0xa5] sm:$0x1] %vm291, %v865
  %870 = vrot.lane.b32.xlu0 %v768, 24
  %v871 = vpop.permute.xlu0 %870
  %872 = vrot.lane.b32.xlu0 %v772, 24
  %v873 = vpop.permute.xlu0 %872
  %876 = vst.msk [vmem:[%s835 + $0x6] sm:$0x1] %vm291, %v871
  %877 = vst.msk [vmem:[%s835 + $0xa6] sm:$0x1] %vm291, %v873
  %878 = vrot.lane.b32.xlu0 %v768, 16
  %v879 = vpop.permute.xlu0 %878
  %880 = vrot.lane.b32.xlu0 %v772, 16
  %v881 = vpop.permute.xlu0 %880
  %884 = vst.msk [vmem:[%s835 + $0x7] sm:$0x1] %vm291, %v879
  %885 = vst.msk [vmem:[%s835 + $0xa7] sm:$0x1] %vm291, %v881
  %886 = vrot.lane.b32.xlu0 %v768, 8
  %v887 = vpop.permute.xlu0 %886
  %888 = vrot.lane.b32.xlu0 %v772, 8
  %v889 = vpop.permute.xlu0 %888
  %892 = vst.msk [vmem:[%s835 + $0x8] sm:$0x1] %vm291, %v887
  %893 = vst.msk [vmem:[%s835 + $0xa8] sm:$0x1] %vm291, %v889
  %v894 = vld [vmem:[#allocation2] sm:$0xff]
  %v895 = vld [vmem:[#allocation2 + $0x10] sm:$0xff]
  %v896 = vld [vmem:[#allocation2 + $0x20] sm:$0xff]
  %v897 = vld [vmem:[#allocation2 + $0x30] sm:$0xff]
  %v898 = vld [vmem:[#allocation2 + $0x40] sm:$0xff]
  %v899 = vld [vmem:[#allocation2 + $0x50] sm:$0xff]
  %v900 = vld [vmem:[#allocation2 + $0x60] sm:$0xff]
  %v901 = vld [vmem:[#allocation2 + $0x70] sm:$0xff]
  %v902 = vld [vmem:[#allocation2 + $0xa0] sm:$0xff]
  %v903 = vld [vmem:[#allocation2 + $0xb0] sm:$0xff]
  %v904 = vld [vmem:[#allocation2 + $0xc0] sm:$0xff]
  %v905 = vld [vmem:[#allocation2 + $0xd0] sm:$0xff]
  %v906 = vld [vmem:[#allocation2 + $0xe0] sm:$0xff]
  %v907 = vld [vmem:[#allocation2 + $0xf0] sm:$0xff]
  %v908 = vld [vmem:[#allocation2 + $0x100] sm:$0xff]
  %v909 = vld [vmem:[#allocation2 + $0x110] sm:$0xff]
  %v910 = vld [vmem:[#allocation2 + $0x1] sm:$0xff]
  %v911 = vld [vmem:[#allocation2 + $0x11] sm:$0xff]
  %v912 = vld [vmem:[#allocation2 + $0x21] sm:$0xff]
  %v913 = vld [vmem:[#allocation2 + $0x31] sm:$0xff]
  %v914 = vld [vmem:[#allocation2 + $0x41] sm:$0xff]
  %v915 = vld [vmem:[#allocation2 + $0x51] sm:$0xff]
  %v916 = vld [vmem:[#allocation2 + $0x61] sm:$0xff]
  %v917 = vld [vmem:[#allocation2 + $0x71] sm:$0xff]
  %v918 = vld [vmem:[#allocation2 + $0xa1] sm:$0xff]
  %v919 = vld [vmem:[#allocation2 + $0xb1] sm:$0xff]
  %v920 = vld [vmem:[#allocation2 + $0xc1] sm:$0xff]
  %v921 = vld [vmem:[#allocation2 + $0xd1] sm:$0xff]
  %v922 = vld [vmem:[#allocation2 + $0xe1] sm:$0xff]
  %v923 = vld [vmem:[#allocation2 + $0xf1] sm:$0xff]
  %v924 = vld [vmem:[#allocation2 + $0x101] sm:$0xff]
  %v925 = vld [vmem:[#allocation2 + $0x111] sm:$0xff]
  %v926 = vld [vmem:[#allocation2 + $0x2] sm:$0xff]
  %v927 = vld [vmem:[#allocation2 + $0x12] sm:$0xff]
  %v928 = vld [vmem:[#allocation2 + $0x22] sm:$0xff]
  %v929 = vld [vmem:[#allocation2 + $0x32] sm:$0xff]
  %v930 = vld [vmem:[#allocation2 + $0x42] sm:$0xff]
  %v931 = vld [vmem:[#allocation2 + $0x52] sm:$0xff]
  %v932 = vld [vmem:[#allocation2 + $0x62] sm:$0xff]
  %v933 = vld [vmem:[#allocation2 + $0x72] sm:$0xff]
  %v934 = vld [vmem:[#allocation2 + $0xa2] sm:$0xff]
  %v935 = vld [vmem:[#allocation2 + $0xb2] sm:$0xff]
  %v936 = vld [vmem:[#allocation2 + $0xc2] sm:$0xff]
  %v937 = vld [vmem:[#allocation2 + $0xd2] sm:$0xff]
  %v938 = vld [vmem:[#allocation2 + $0xe2] sm:$0xff]
  %v939 = vld [vmem:[#allocation2 + $0xf2] sm:$0xff]
  %v940 = vld [vmem:[#allocation2 + $0x102] sm:$0xff]
  %v941 = vld [vmem:[#allocation2 + $0x112] sm:$0xff]
  %v942 = vld [vmem:[%s290] sm:$0xff]
  %v943 = vld [vmem:[%s290 + $0x10] sm:$0xff]
  %v944 = vld [vmem:[%s290 + $0x20] sm:$0xff]
  %v945 = vld [vmem:[%s290 + $0x30] sm:$0xff]
  %v946 = vld [vmem:[%s290 + $0x40] sm:$0xff]
  %v947 = vld [vmem:[%s290 + $0x50] sm:$0xff]
  %v948 = vld [vmem:[%s290 + $0x60] sm:$0xff]
  %v949 = vld [vmem:[%s290 + $0x70] sm:$0xff]
  %v950 = vld [vmem:[%s290 + $0xa0] sm:$0xff]
  %v951 = vld [vmem:[%s290 + $0xb0] sm:$0xff]
  %v952 = vld [vmem:[%s290 + $0xc0] sm:$0xff]
  %v953 = vld [vmem:[%s290 + $0xd0] sm:$0xff]
  %v954 = vld [vmem:[%s290 + $0xe0] sm:$0xff]
  %v955 = vld [vmem:[%s290 + $0xf0] sm:$0xff]
  %v956 = vld [vmem:[%s290 + $0x100] sm:$0xff]
  %v957 = vld [vmem:[%s290 + $0x110] sm:$0xff]
  %v958 = vld [vmem:[%s290 + $0x1] sm:$0xff]
  %v959 = vld [vmem:[%s290 + $0x11] sm:$0xff]
  %v960 = vld [vmem:[%s290 + $0x21] sm:$0xff]
  %v961 = vld [vmem:[%s290 + $0x31] sm:$0xff]
  %v962 = vld [vmem:[%s290 + $0x41] sm:$0xff]
  %v963 = vld [vmem:[%s290 + $0x51] sm:$0xff]
  %v964 = vld [vmem:[%s290 + $0x61] sm:$0xff]
  %v965 = vld [vmem:[%s290 + $0x71] sm:$0xff]
  %v966 = vld [vmem:[%s290 + $0xa1] sm:$0xff]
  %v967 = vld [vmem:[%s290 + $0xb1] sm:$0xff]
  %v968 = vld [vmem:[%s290 + $0xc1] sm:$0xff]
  %v969 = vld [vmem:[%s290 + $0xd1] sm:$0xff]
  %v970 = vld [vmem:[%s290 + $0xe1] sm:$0xff]
  %v971 = vld [vmem:[%s290 + $0xf1] sm:$0xff]
  %v972 = vld [vmem:[%s290 + $0x101] sm:$0xff]
  %v973 = vld [vmem:[%s290 + $0x111] sm:$0xff]
  %v974 = vld [vmem:[%s290 + $0x2] sm:$0xff]
  %v975 = vld [vmem:[%s290 + $0x12] sm:$0xff]
  %v976 = vld [vmem:[%s290 + $0x22] sm:$0xff]
  %v977 = vld [vmem:[%s290 + $0x32] sm:$0xff]
  %v978 = vld [vmem:[%s290 + $0x42] sm:$0xff]
  %v979 = vld [vmem:[%s290 + $0x52] sm:$0xff]
  %v980 = vld [vmem:[%s290 + $0x62] sm:$0xff]
  %v981 = vld [vmem:[%s290 + $0x72] sm:$0xff]
  %v982 = vld [vmem:[%s290 + $0xa2] sm:$0xff]
  %v983 = vld [vmem:[%s290 + $0xb2] sm:$0xff]
  %v984 = vld [vmem:[%s290 + $0xc2] sm:$0xff]
  %v985 = vld [vmem:[%s290 + $0xd2] sm:$0xff]
  %v986 = vld [vmem:[%s290 + $0xe2] sm:$0xff]
  %v987 = vld [vmem:[%s290 + $0xf2] sm:$0xff]
  %v988 = vld [vmem:[%s290 + $0x102] sm:$0xff]
  %v989 = vld [vmem:[%s290 + $0x112] sm:$0xff]
  %v990 = vld [vmem:[%s364] sm:$0xff]
  %v991 = vld [vmem:[%s364 + $0x10] sm:$0xff]
  %v992 = vld [vmem:[%s364 + $0x20] sm:$0xff]
  %v993 = vld [vmem:[%s364 + $0x30] sm:$0xff]
  %v994 = vld [vmem:[%s364 + $0x40] sm:$0xff]
  %v995 = vld [vmem:[%s364 + $0x50] sm:$0xff]
  %v996 = vld [vmem:[%s364 + $0x60] sm:$0xff]
  %v997 = vld [vmem:[%s364 + $0x70] sm:$0xff]
  %v998 = vld [vmem:[%s364 + $0xa0] sm:$0xff]
  %v999 = vld [vmem:[%s364 + $0xb0] sm:$0xff]
  %v1000 = vld [vmem:[%s364 + $0xc0] sm:$0xff]
  %v1001 = vld [vmem:[%s364 + $0xd0] sm:$0xff]
  %v1002 = vld [vmem:[%s364 + $0xe0] sm:$0xff]
  %v1003 = vld [vmem:[%s364 + $0xf0] sm:$0xff]
  %v1004 = vld [vmem:[%s364 + $0x100] sm:$0xff]
  %v1005 = vld [vmem:[%s364 + $0x110] sm:$0xff]
  %v1006 = vld [vmem:[%s364 + $0x1] sm:$0xff]
  %v1007 = vld [vmem:[%s364 + $0x11] sm:$0xff]
  %v1008 = vld [vmem:[%s364 + $0x21] sm:$0xff]
  %v1009 = vld [vmem:[%s364 + $0x31] sm:$0xff]
  %v1010 = vld [vmem:[%s364 + $0x41] sm:$0xff]
  %v1011 = vld [vmem:[%s364 + $0x51] sm:$0xff]
  %v1012 = vld [vmem:[%s364 + $0x61] sm:$0xff]
  %v1013 = vld [vmem:[%s364 + $0x71] sm:$0xff]
  %v1014 = vld [vmem:[%s364 + $0xa1] sm:$0xff]
  %v1015 = vld [vmem:[%s364 + $0xb1] sm:$0xff]
  %v1016 = vld [vmem:[%s364 + $0xc1] sm:$0xff]
  %v1017 = vld [vmem:[%s364 + $0xd1] sm:$0xff]
  %v1018 = vld [vmem:[%s364 + $0xe1] sm:$0xff]
  %v1019 = vld [vmem:[%s364 + $0xf1] sm:$0xff]
  %v1020 = vld [vmem:[%s364 + $0x101] sm:$0xff]
  %v1021 = vld [vmem:[%s364 + $0x111] sm:$0xff]
  %v1022 = vld [vmem:[%s364 + $0x2] sm:$0xff]
  %v1023 = vld [vmem:[%s364 + $0x12] sm:$0xff]
  %v1024 = vld [vmem:[%s364 + $0x22] sm:$0xff]
  %v1025 = vld [vmem:[%s364 + $0x32] sm:$0xff]
  %v1026 = vld [vmem:[%s364 + $0x42] sm:$0xff]
  %v1027 = vld [vmem:[%s364 + $0x52] sm:$0xff]
  %v1028 = vld [vmem:[%s364 + $0x62] sm:$0xff]
  %v1029 = vld [vmem:[%s364 + $0x72] sm:$0xff]
  %v1030 = vld [vmem:[%s364 + $0xa2] sm:$0xff]
  %v1031 = vld [vmem:[%s364 + $0xb2] sm:$0xff]
  %v1032 = vld [vmem:[%s364 + $0xc2] sm:$0xff]
  %v1033 = vld [vmem:[%s364 + $0xd2] sm:$0xff]
  %v1034 = vld [vmem:[%s364 + $0xe2] sm:$0xff]
  %v1035 = vld [vmem:[%s364 + $0xf2] sm:$0xff]
  %v1036 = vld [vmem:[%s364 + $0x102] sm:$0xff]
  %v1037 = vld [vmem:[%s364 + $0x112] sm:$0xff]
  %1054 = vrot.lane.b32.xlu0 %v910, 8
  %v1055 = vpop.permute.xlu0 %1054
  %1056 = vrot.lane.b32.xlu0 %v911, 8
  %v1057 = vpop.permute.xlu0 %1056
  %1058 = vrot.lane.b32.xlu0 %v912, 8
  %v1059 = vpop.permute.xlu0 %1058
  %1060 = vrot.lane.b32.xlu0 %v913, 8
  %v1061 = vpop.permute.xlu0 %1060
  %1062 = vrot.lane.b32.xlu0 %v914, 8
  %v1063 = vpop.permute.xlu0 %1062
  %1064 = vrot.lane.b32.xlu0 %v915, 8
  %v1065 = vpop.permute.xlu0 %1064
  %1066 = vrot.lane.b32.xlu0 %v916, 8
  %v1067 = vpop.permute.xlu0 %1066
  %1068 = vrot.lane.b32.xlu0 %v917, 8
  %v1069 = vpop.permute.xlu0 %1068
  %1070 = vrot.lane.b32.xlu0 %v918, 8
  %v1071 = vpop.permute.xlu0 %1070
  %1072 = vrot.lane.b32.xlu0 %v919, 8
  %v1073 = vpop.permute.xlu0 %1072
  %1074 = vrot.lane.b32.xlu0 %v920, 8
  %v1075 = vpop.permute.xlu0 %1074
  %1076 = vrot.lane.b32.xlu0 %v921, 8
  %v1077 = vpop.permute.xlu0 %1076
  %1078 = vrot.lane.b32.xlu0 %v922, 8
  %v1079 = vpop.permute.xlu0 %1078
  %1080 = vrot.lane.b32.xlu0 %v923, 8
  %v1081 = vpop.permute.xlu0 %1080
  %1082 = vrot.lane.b32.xlu0 %v924, 8
  %v1083 = vpop.permute.xlu0 %1082
  %1084 = vrot.lane.b32.xlu0 %v925, 8
  %v1085 = vpop.permute.xlu0 %1084
  %1118 = vrot.lane.b32.xlu0 %v926, 16
  %v1119 = vpop.permute.xlu0 %1118
  %1120 = vrot.lane.b32.xlu0 %v927, 16
  %v1121 = vpop.permute.xlu0 %1120
  %1122 = vrot.lane.b32.xlu0 %v928, 16
  %v1123 = vpop.permute.xlu0 %1122
  %1124 = vrot.lane.b32.xlu0 %v929, 16
  %v1125 = vpop.permute.xlu0 %1124
  %1126 = vrot.lane.b32.xlu0 %v930, 16
  %v1127 = vpop.permute.xlu0 %1126
  %1128 = vrot.lane.b32.xlu0 %v931, 16
  %v1129 = vpop.permute.xlu0 %1128
  %1130 = vrot.lane.b32.xlu0 %v932, 16
  %v1131 = vpop.permute.xlu0 %1130
  %1132 = vrot.lane.b32.xlu0 %v933, 16
  %v1133 = vpop.permute.xlu0 %1132
  %1134 = vrot.lane.b32.xlu0 %v934, 16
  %v1135 = vpop.permute.xlu0 %1134
  %1136 = vrot.lane.b32.xlu0 %v935, 16
  %v1137 = vpop.permute.xlu0 %1136
  %1138 = vrot.lane.b32.xlu0 %v936, 16
  %v1139 = vpop.permute.xlu0 %1138
  %1140 = vrot.lane.b32.xlu0 %v937, 16
  %v1141 = vpop.permute.xlu0 %1140
  %1142 = vrot.lane.b32.xlu0 %v938, 16
  %v1143 = vpop.permute.xlu0 %1142
  %1144 = vrot.lane.b32.xlu0 %v939, 16
  %v1145 = vpop.permute.xlu0 %1144
  %1146 = vrot.lane.b32.xlu0 %v940, 16
  %v1147 = vpop.permute.xlu0 %1146
  %1148 = vrot.lane.b32.xlu0 %v941, 16
  %v1149 = vpop.permute.xlu0 %1148
  %1182 = vrot.lane.b32.xlu0 %v942, 24
  %v1183 = vpop.permute.xlu0 %1182
  %1184 = vrot.lane.b32.xlu0 %v943, 24
  %v1185 = vpop.permute.xlu0 %1184
  %1186 = vrot.lane.b32.xlu0 %v944, 24
  %v1187 = vpop.permute.xlu0 %1186
  %1188 = vrot.lane.b32.xlu0 %v945, 24
  %v1189 = vpop.permute.xlu0 %1188
  %1190 = vrot.lane.b32.xlu0 %v946, 24
  %v1191 = vpop.permute.xlu0 %1190
  %1192 = vrot.lane.b32.xlu0 %v947, 24
  %v1193 = vpop.permute.xlu0 %1192
  %1194 = vrot.lane.b32.xlu0 %v948, 24
  %v1195 = vpop.permute.xlu0 %1194
  %1196 = vrot.lane.b32.xlu0 %v949, 24
  %v1197 = vpop.permute.xlu0 %1196
  %1198 = vrot.lane.b32.xlu0 %v950, 24
  %v1199 = vpop.permute.xlu0 %1198
  %1200 = vrot.lane.b32.xlu0 %v951, 24
  %v1201 = vpop.permute.xlu0 %1200
  %1202 = vrot.lane.b32.xlu0 %v952, 24
  %v1203 = vpop.permute.xlu0 %1202
  %1204 = vrot.lane.b32.xlu0 %v953, 24
  %v1205 = vpop.permute.xlu0 %1204
  %1206 = vrot.lane.b32.xlu0 %v954, 24
  %v1207 = vpop.permute.xlu0 %1206
  %1208 = vrot.lane.b32.xlu0 %v955, 24
  %v1209 = vpop.permute.xlu0 %1208
  %1210 = vrot.lane.b32.xlu0 %v956, 24
  %v1211 = vpop.permute.xlu0 %1210
  %1212 = vrot.lane.b32.xlu0 %v957, 24
  %v1213 = vpop.permute.xlu0 %1212
  %1246 = vrot.lane.b32.xlu0 %v958, 32
  %v1247 = vpop.permute.xlu0 %1246
  %1248 = vrot.lane.b32.xlu0 %v959, 32
  %v1249 = vpop.permute.xlu0 %1248
  %1250 = vrot.lane.b32.xlu0 %v960, 32
  %v1251 = vpop.permute.xlu0 %1250
  %1252 = vrot.lane.b32.xlu0 %v961, 32
  %v1253 = vpop.permute.xlu0 %1252
  %1254 = vrot.lane.b32.xlu0 %v962, 32
  %v1255 = vpop.permute.xlu0 %1254
  %1256 = vrot.lane.b32.xlu0 %v963, 32
  %v1257 = vpop.permute.xlu0 %1256
  %1258 = vrot.lane.b32.xlu0 %v964, 32
  %v1259 = vpop.permute.xlu0 %1258
  %1260 = vrot.lane.b32.xlu0 %v965, 32
  %v1261 = vpop.permute.xlu0 %1260
  %1262 = vrot.lane.b32.xlu0 %v966, 32
  %v1263 = vpop.permute.xlu0 %1262
  %1264 = vrot.lane.b32.xlu0 %v967, 32
  %v1265 = vpop.permute.xlu0 %1264
  %1266 = vrot.lane.b32.xlu0 %v968, 32
  %v1267 = vpop.permute.xlu0 %1266
  %1268 = vrot.lane.b32.xlu0 %v969, 32
  %v1269 = vpop.permute.xlu0 %1268
  %1270 = vrot.lane.b32.xlu0 %v970, 32
  %v1271 = vpop.permute.xlu0 %1270
  %1272 = vrot.lane.b32.xlu0 %v971, 32
  %v1273 = vpop.permute.xlu0 %1272
  %1274 = vrot.lane.b32.xlu0 %v972, 32
  %v1275 = vpop.permute.xlu0 %1274
  %1276 = vrot.lane.b32.xlu0 %v973, 32
  %v1277 = vpop.permute.xlu0 %1276
  %1310 = vrot.lane.b32.xlu0 %v974, 40
  %v1311 = vpop.permute.xlu0 %1310
  %1312 = vrot.lane.b32.xlu0 %v975, 40
  %v1313 = vpop.permute.xlu0 %1312
  %1314 = vrot.lane.b32.xlu0 %v976, 40
  %v1315 = vpop.permute.xlu0 %1314
  %1316 = vrot.lane.b32.xlu0 %v977, 40
  %v1317 = vpop.permute.xlu0 %1316
  %1318 = vrot.lane.b32.xlu0 %v978, 40
  %v1319 = vpop.permute.xlu0 %1318
  %1320 = vrot.lane.b32.xlu0 %v979, 40
  %v1321 = vpop.permute.xlu0 %1320
  %1322 = vrot.lane.b32.xlu0 %v980, 40
  %v1323 = vpop.permute.xlu0 %1322
  %1324 = vrot.lane.b32.xlu0 %v981, 40
  %v1325 = vpop.permute.xlu0 %1324
  %1326 = vrot.lane.b32.xlu0 %v982, 40
  %v1327 = vpop.permute.xlu0 %1326
  %1328 = vrot.lane.b32.xlu0 %v983, 40
  %v1329 = vpop.permute.xlu0 %1328
  %1330 = vrot.lane.b32.xlu0 %v984, 40
  %v1331 = vpop.permute.xlu0 %1330
  %1332 = vrot.lane.b32.xlu0 %v985, 40
  %v1333 = vpop.permute.xlu0 %1332
  %1334 = vrot.lane.b32.xlu0 %v986, 40
  %v1335 = vpop.permute.xlu0 %1334
  %1336 = vrot.lane.b32.xlu0 %v987, 40
  %v1337 = vpop.permute.xlu0 %1336
  %1338 = vrot.lane.b32.xlu0 %v988, 40
  %v1339 = vpop.permute.xlu0 %1338
  %1340 = vrot.lane.b32.xlu0 %v989, 40
  %v1341 = vpop.permute.xlu0 %1340
  %1374 = vrot.lane.b32.xlu0 %v990, 48
  %v1375 = vpop.permute.xlu0 %1374
  %1376 = vrot.lane.b32.xlu0 %v991, 48
  %v1377 = vpop.permute.xlu0 %1376
  %1378 = vrot.lane.b32.xlu0 %v992, 48
  %v1379 = vpop.permute.xlu0 %1378
  %1380 = vrot.lane.b32.xlu0 %v993, 48
  %v1381 = vpop.permute.xlu0 %1380
  %1382 = vrot.lane.b32.xlu0 %v994, 48
  %v1383 = vpop.permute.xlu0 %1382
  %1384 = vrot.lane.b32.xlu0 %v995, 48
  %v1385 = vpop.permute.xlu0 %1384
  %1386 = vrot.lane.b32.xlu0 %v996, 48
  %v1387 = vpop.permute.xlu0 %1386
  %1388 = vrot.lane.b32.xlu0 %v997, 48
  %v1389 = vpop.permute.xlu0 %1388
  %1390 = vrot.lane.b32.xlu0 %v998, 48
  %v1391 = vpop.permute.xlu0 %1390
  %1392 = vrot.lane.b32.xlu0 %v999, 48
  %v1393 = vpop.permute.xlu0 %1392
  %1394 = vrot.lane.b32.xlu0 %v1000, 48
  %v1395 = vpop.permute.xlu0 %1394
  %1396 = vrot.lane.b32.xlu0 %v1001, 48
  %v1397 = vpop.permute.xlu0 %1396
  %1398 = vrot.lane.b32.xlu0 %v1002, 48
  %v1399 = vpop.permute.xlu0 %1398
  %1400 = vrot.lane.b32.xlu0 %v1003, 48
  %v1401 = vpop.permute.xlu0 %1400
  %1402 = vrot.lane.b32.xlu0 %v1004, 48
  %v1403 = vpop.permute.xlu0 %1402
  %1404 = vrot.lane.b32.xlu0 %v1005, 48
  %v1405 = vpop.permute.xlu0 %1404
  %1438 = vrot.lane.b32.xlu0 %v1006, 56
  %v1439 = vpop.permute.xlu0 %1438
  %1440 = vrot.lane.b32.xlu0 %v1007, 56
  %v1441 = vpop.permute.xlu0 %1440
  %1442 = vrot.lane.b32.xlu0 %v1008, 56
  %v1443 = vpop.permute.xlu0 %1442
  %1444 = vrot.lane.b32.xlu0 %v1009, 56
  %v1445 = vpop.permute.xlu0 %1444
  %1446 = vrot.lane.b32.xlu0 %v1010, 56
  %v1447 = vpop.permute.xlu0 %1446
  %1448 = vrot.lane.b32.xlu0 %v1011, 56
  %v1449 = vpop.permute.xlu0 %1448
  %1450 = vrot.lane.b32.xlu0 %v1012, 56
  %v1451 = vpop.permute.xlu0 %1450
  %1452 = vrot.lane.b32.xlu0 %v1013, 56
  %v1453 = vpop.permute.xlu0 %1452
  %1454 = vrot.lane.b32.xlu0 %v1014, 56
  %v1455 = vpop.permute.xlu0 %1454
  %1456 = vrot.lane.b32.xlu0 %v1015, 56
  %v1457 = vpop.permute.xlu0 %1456
  %1458 = vrot.lane.b32.xlu0 %v1016, 56
  %v1459 = vpop.permute.xlu0 %1458
  %1460 = vrot.lane.b32.xlu0 %v1017, 56
  %v1461 = vpop.permute.xlu0 %1460
  %1462 = vrot.lane.b32.xlu0 %v1018, 56
  %v1463 = vpop.permute.xlu0 %1462
  %1464 = vrot.lane.b32.xlu0 %v1019, 56
  %v1465 = vpop.permute.xlu0 %1464
  %1466 = vrot.lane.b32.xlu0 %v1020, 56
  %v1467 = vpop.permute.xlu0 %1466
  %1468 = vrot.lane.b32.xlu0 %v1021, 56
  %v1469 = vpop.permute.xlu0 %1468
  %1502 = vrot.lane.b32.xlu0 %v1022, 64
  %v1503 = vpop.permute.xlu0 %1502
  %1504 = vrot.lane.b32.xlu0 %v1023, 64
  %v1505 = vpop.permute.xlu0 %1504
  %1506 = vrot.lane.b32.xlu0 %v1024, 64
  %v1507 = vpop.permute.xlu0 %1506
  %1508 = vrot.lane.b32.xlu0 %v1025, 64
  %v1509 = vpop.permute.xlu0 %1508
  %1510 = vrot.lane.b32.xlu0 %v1026, 64
  %v1511 = vpop.permute.xlu0 %1510
  %1512 = vrot.lane.b32.xlu0 %v1027, 64
  %v1513 = vpop.permute.xlu0 %1512
  %1514 = vrot.lane.b32.xlu0 %v1028, 64
  %v1515 = vpop.permute.xlu0 %1514
  %1516 = vrot.lane.b32.xlu0 %v1029, 64
  %v1517 = vpop.permute.xlu0 %1516
  %1518 = vrot.lane.b32.xlu0 %v1030, 64
  %v1519 = vpop.permute.xlu0 %1518
  %1520 = vrot.lane.b32.xlu0 %v1031, 64
  %v1521 = vpop.permute.xlu0 %1520
  %1522 = vrot.lane.b32.xlu0 %v1032, 64
  %v1523 = vpop.permute.xlu0 %1522
  %1524 = vrot.lane.b32.xlu0 %v1033, 64
  %v1525 = vpop.permute.xlu0 %1524
  %1526 = vrot.lane.b32.xlu0 %v1034, 64
  %v1527 = vpop.permute.xlu0 %1526
  %1528 = vrot.lane.b32.xlu0 %v1035, 64
  %v1529 = vpop.permute.xlu0 %1528
  %1530 = vrot.lane.b32.xlu0 %v1036, 64
  %v1531 = vpop.permute.xlu0 %1530
  %1532 = vrot.lane.b32.xlu0 %v1037, 64
  %v1533 = vpop.permute.xlu0 %1532
  %v1550 = vsel %vm223, %v894, %v1055
  %v1551 = vsel %vm223, %v895, %v1057
  %v1552 = vsel %vm223, %v896, %v1059
  %v1553 = vsel %vm223, %v897, %v1061
  %v1554 = vsel %vm223, %v898, %v1063
  %v1555 = vsel %vm223, %v899, %v1065
  %v1556 = vsel %vm223, %v900, %v1067
  %v1557 = vsel %vm223, %v901, %v1069
  %v1558 = vsel %vm223, %v902, %v1071
  %v1559 = vsel %vm223, %v903, %v1073
  %v1560 = vsel %vm223, %v904, %v1075
  %v1561 = vsel %vm223, %v905, %v1077
  %v1562 = vsel %vm223, %v906, %v1079
  %v1563 = vsel %vm223, %v907, %v1081
  %v1564 = vsel %vm223, %v908, %v1083
  %v1565 = vsel %vm223, %v909, %v1085
  %vm1566 = vcmask 130048
  %v1567 = vsel %vm1566, %v1550, %v1119
  %v1568 = vsel %vm1566, %v1551, %v1121
  %v1569 = vsel %vm1566, %v1552, %v1123
  %v1570 = vsel %vm1566, %v1553, %v1125
  %v1571 = vsel %vm1566, %v1554, %v1127
  %v1572 = vsel %vm1566, %v1555, %v1129
  %v1573 = vsel %vm1566, %v1556, %v1131
  %v1574 = vsel %vm1566, %v1557, %v1133
  %v1575 = vsel %vm1566, %v1558, %v1135
  %v1576 = vsel %vm1566, %v1559, %v1137
  %v1577 = vsel %vm1566, %v1560, %v1139
  %v1578 = vsel %vm1566, %v1561, %v1141
  %v1579 = vsel %vm1566, %v1562, %v1143
  %v1580 = vsel %vm1566, %v1563, %v1145
  %v1581 = vsel %vm1566, %v1564, %v1147
  %v1582 = vsel %vm1566, %v1565, %v1149
  %vm1583 = vcmask 195584
  %v1584 = vsel %vm1583, %v1567, %v1183
  %v1585 = vsel %vm1583, %v1568, %v1185
  %v1586 = vsel %vm1583, %v1569, %v1187
  %v1587 = vsel %vm1583, %v1570, %v1189
  %v1588 = vsel %vm1583, %v1571, %v1191
  %v1589 = vsel %vm1583, %v1572, %v1193
  %v1590 = vsel %vm1583, %v1573, %v1195
  %v1591 = vsel %vm1583, %v1574, %v1197
  %v1592 = vsel %vm1583, %v1575, %v1199
  %v1593 = vsel %vm1583, %v1576, %v1201
  %v1594 = vsel %vm1583, %v1577, %v1203
  %v1595 = vsel %vm1583, %v1578, %v1205
  %v1596 = vsel %vm1583, %v1579, %v1207
  %v1597 = vsel %vm1583, %v1580, %v1209
  %v1598 = vsel %vm1583, %v1581, %v1211
  %v1599 = vsel %vm1583, %v1582, %v1213
  %v1600 = vsel %vm73, %v1584, %v1247
  %v1601 = vsel %vm73, %v1585, %v1249
  %v1602 = vsel %vm73, %v1586, %v1251
  %v1603 = vsel %vm73, %v1587, %v1253
  %v1604 = vsel %vm73, %v1588, %v1255
  %v1605 = vsel %vm73, %v1589, %v1257
  %v1606 = vsel %vm73, %v1590, %v1259
  %v1607 = vsel %vm73, %v1591, %v1261
  %v1608 = vsel %vm73, %v1592, %v1263
  %v1609 = vsel %vm73, %v1593, %v1265
  %v1610 = vsel %vm73, %v1594, %v1267
  %v1611 = vsel %vm73, %v1595, %v1269
  %v1612 = vsel %vm73, %v1596, %v1271
  %v1613 = vsel %vm73, %v1597, %v1273
  %v1614 = vsel %vm73, %v1598, %v1275
  %v1615 = vsel %vm73, %v1599, %v1277
  %vm1616 = vcmask 326656
  %v1617 = vsel %vm1616, %v1600, %v1311
  %v1618 = vsel %vm1616, %v1601, %v1313
  %v1619 = vsel %vm1616, %v1602, %v1315
  %v1620 = vsel %vm1616, %v1603, %v1317
  %v1621 = vsel %vm1616, %v1604, %v1319
  %v1622 = vsel %vm1616, %v1605, %v1321
  %v1623 = vsel %vm1616, %v1606, %v1323
  %v1624 = vsel %vm1616, %v1607, %v1325
  %v1625 = vsel %vm1616, %v1608, %v1327
  %v1626 = vsel %vm1616, %v1609, %v1329
  %v1627 = vsel %vm1616, %v1610, %v1331
  %v1628 = vsel %vm1616, %v1611, %v1333
  %v1629 = vsel %vm1616, %v1612, %v1335
  %v1630 = vsel %vm1616, %v1613, %v1337
  %v1631 = vsel %vm1616, %v1614, %v1339
  %v1632 = vsel %vm1616, %v1615, %v1341
  %vm1633 = vcmask 392192
  %v1634 = vsel %vm1633, %v1617, %v1375
  %v1635 = vsel %vm1633, %v1618, %v1377
  %v1636 = vsel %vm1633, %v1619, %v1379
  %v1637 = vsel %vm1633, %v1620, %v1381
  %v1638 = vsel %vm1633, %v1621, %v1383
  %v1639 = vsel %vm1633, %v1622, %v1385
  %v1640 = vsel %vm1633, %v1623, %v1387
  %v1641 = vsel %vm1633, %v1624, %v1389
  %v1642 = vsel %vm1633, %v1625, %v1391
  %v1643 = vsel %vm1633, %v1626, %v1393
  %v1644 = vsel %vm1633, %v1627, %v1395
  %v1645 = vsel %vm1633, %v1628, %v1397
  %v1646 = vsel %vm1633, %v1629, %v1399
  %v1647 = vsel %vm1633, %v1630, %v1401
  %v1648 = vsel %vm1633, %v1631, %v1403
  %v1649 = vsel %vm1633, %v1632, %v1405
  %vm1650 = vcmask 457728
  %v1651 = vsel %vm1650, %v1634, %v1439
  %v1652 = vsel %vm1650, %v1635, %v1441
  %v1653 = vsel %vm1650, %v1636, %v1443
  %v1654 = vsel %vm1650, %v1637, %v1445
  %v1655 = vsel %vm1650, %v1638, %v1447
  %v1656 = vsel %vm1650, %v1639, %v1449
  %v1657 = vsel %vm1650, %v1640, %v1451
  %v1658 = vsel %vm1650, %v1641, %v1453
  %v1659 = vsel %vm1650, %v1642, %v1455
  %v1660 = vsel %vm1650, %v1643, %v1457
  %v1661 = vsel %vm1650, %v1644, %v1459
  %v1662 = vsel %vm1650, %v1645, %v1461
  %v1663 = vsel %vm1650, %v1646, %v1463
  %v1664 = vsel %vm1650, %v1647, %v1465
  %v1665 = vsel %vm1650, %v1648, %v1467
  %v1666 = vsel %vm1650, %v1649, %v1469
  %vm1667 = vcmask 523264
  %v1668 = vsel %vm1667, %v1651, %v1503
  %v1669 = vsel %vm1667, %v1652, %v1505
  %v1670 = vsel %vm1667, %v1653, %v1507
  %v1671 = vsel %vm1667, %v1654, %v1509
  %v1672 = vsel %vm1667, %v1655, %v1511
  %v1673 = vsel %vm1667, %v1656, %v1513
  %v1674 = vsel %vm1667, %v1657, %v1515
  %v1675 = vsel %vm1667, %v1658, %v1517
  %v1676 = vsel %vm1667, %v1659, %v1519
  %v1677 = vsel %vm1667, %v1660, %v1521
  %v1678 = vsel %vm1667, %v1661, %v1523
  %v1679 = vsel %vm1667, %v1662, %v1525
  %v1680 = vsel %vm1667, %v1663, %v1527
  %v1681 = vsel %vm1667, %v1664, %v1529
  %v1682 = vsel %vm1667, %v1665, %v1531
  %v1683 = vsel %vm1667, %v1666, %v1533
  %v1684 = vld [vmem:[%s3] sm:$0xff]
  %v1685 = vld [vmem:[%s3 + $0x8] sm:$0xff]
  %v1686 = vld [vmem:[%s3 + $0x10] sm:$0xff]
  %v1687 = vld [vmem:[%s3 + $0x18] sm:$0xff]
  %v1688 = vld [vmem:[%s3 + $0x20] sm:$0xff]
  %v1689 = vld [vmem:[%s3 + $0x28] sm:$0xff]
  %v1690 = vld [vmem:[%s3 + $0x30] sm:$0xff]
  %v1691 = vld [vmem:[%s3 + $0x38] sm:$0xff]
  %v1692 = vld [vmem:[%s3 + $0x40] sm:$0xff]
  %v1693 = vld [vmem:[%s4] sm:$0x1]
  %v1695 = vlaneseq
  %v1696 = vshrl.u32 %v1695, 7
  %v1697 = vsub.s32 0, %v1696
  %v1698 = vrot.slane %v1693, %v1697
  %vm1700 = vcmask 588800
  %v1702 = vsel %vm1700, %v1668, 0
  %v1705 = vsel %vm1700, %v1669, 0
  %v1708 = vsel %vm1700, %v1670, 0
  %v1711 = vsel %vm1700, %v1671, 0
  %v1714 = vsel %vm1700, %v1672, 0
  %v1717 = vsel %vm1700, %v1673, 0
  %v1720 = vsel %vm1700, %v1674, 0
  %v1723 = vsel %vm1700, %v1675, 0
  %v1726 = vsel %vm1700, %v1676, 0
  %v1729 = vsel %vm1700, %v1677, 0
  %v1732 = vsel %vm1700, %v1678, 0
  %v1735 = vsel %vm1700, %v1679, 0
  %v1738 = vsel %vm1700, %v1680, 0
  %v1741 = vsel %vm1700, %v1681, 0
  %v1744 = vsel %vm1700, %v1682, 0
  %v1747 = vsel %vm1700, %v1683, 0
  %1749 = vmatprep.subr.mxu0 0.0
  %1750 = vmatpush1.msra.mxu0 %v1684
  %1751 = vmatprep.subr.mxu0 0.0
  %1752 = vmatpush1.msra.mxu0 %v1685
  %1753 = vmatprep.subr.mxu0 0.0
  %1754 = vmatpush1.msra.mxu0 %v1686
  %1755 = vmatprep.subr.mxu0 0.0
  %1756 = vmatpush1.msra.mxu0 %v1687
  %1757 = vmatprep.subr.mxu0 0.0
  %1758 = vmatpush1.msra.mxu0 %v1688
  %1759 = vmatprep.subr.mxu0 0.0
  %1760 = vmatpush1.msra.mxu0 %v1689
  %1761 = vmatprep.subr.mxu0 0.0
  %1762 = vmatpush1.msra.mxu0 %v1690
  %1763 = vmatprep.subr.mxu0 0.0
  %1764 = vmatpush1.msra.mxu0 %v1691
  %1765 = vmatprep.subr.mxu0 0.0
  %1766 = vmatpush1.msra.mxu0 %v1692
  %1767 = vmatprep.subr.mxu0 0.0
  %1768 = vmatpush1.msra.mxu0 0.0
  %1769 = vmatprep.subr.mxu0 0.0
  %1770 = vmatpush1.msra.mxu0 0.0
  %1771 = vmatprep.subr.mxu0 0.0
  %1772 = vmatpush1.msra.mxu0 0.0
  %1773 = vmatprep.subr.mxu0 0.0
  %1774 = vmatpush1.msra.mxu0 0.0
  %1775 = vmatprep.subr.mxu0 0.0
  %1776 = vmatpush1.msra.mxu0 0.0
  %1777 = vmatprep.subr.mxu0 0.0
  %1778 = vmatpush1.msra.mxu0 0.0
  %1779 = vmatprep.subr.mxu0 0.0
  %1780 = vmatpush1.msra.mxu0 0.0
  %1781 = vmatprep.subr.mxu0 0.0
  %1782 = vmatpush1.msra.mxu0 0.0
  %1783 = vmatprep.subr.mxu0 0.0
  %1784 = vmatpush1.msra.mxu0 0.0
  %1785 = vmatprep.subr.mxu0 0.0
  %1786 = vmatpush1.msra.mxu0 0.0
  %1787 = vmatprep.subr.mxu0 0.0
  %1788 = vmatpush1.msra.mxu0 0.0
  %1789 = vmatprep.subr.mxu0 0.0
  %1790 = vmatpush1.msra.mxu0 0.0
  %1791 = vmatprep.subr.mxu0 0.0
  %1792 = vmatpush1.msra.mxu0 0.0
  %1793 = vmatprep.subr.mxu0 0.0
  %1794 = vmatpush1.msra.mxu0 0.0
  %1795 = vmatprep.subr.mxu0 0.0
  %1796 = vmatpush1.msra.mxu0 0.0
  %1797 = vmatprep.subr.mxu0 0.0
  %1798 = vmatpush1.msra.mxu0 0.0
  %1799 = vmatprep.subr.mxu0 0.0
  %1800 = vmatpush1.msra.mxu0 0.0
  %1801 = vmatprep.subr.mxu0 0.0
  %1802 = vmatpush1.msra.mxu0 0.0
  %1803 = vmatprep.subr.mxu0 0.0
  %1804 = vmatpush1.msra.mxu0 0.0
  %1805 = vmatprep.subr.mxu0 0.0
  %1806 = vmatpush1.msra.mxu0 0.0
  %1807 = vmatprep.subr.mxu0 0.0
  %1808 = vmatpush1.msra.mxu0 0.0
  %1809 = vmatprep.subr.mxu0 0.0
  %1810 = vmatpush1.msra.mxu0 0.0
  %1811 = vmatprep.subr.mxu0 0.0
  %1812 = vmatpush1.msra.mxu0 0.0
  %1813 = vmatprep.mubr.f32.mxu0 0.0
  %1814 = vmatmul.mubr.f32.gmra.mrb[0].mxu0 %v1702
  %v1815 = vpop.f32.mrb[0].mxu0
  %v1816 = vadd.f32 %v1698, %v1815
  %v1817 = vpop.f32.mrb[0].mxu0
  %1818 = vmatprep.mubr.f32.mxu0 0.0
  %1819 = vmatmul.mubr.f32.gmra.mrb[0].mxu0 %v1705
  %v1820 = vpop.f32.mrb[0].mxu0
  %v1821 = vadd.f32 %v1698, %v1820
  %v1822 = vpop.f32.mrb[0].mxu0
  %1823 = vmatprep.mubr.f32.mxu0 0.0
  %1824 = vmatmul.mubr.f32.gmra.mrb[0].mxu0 %v1708
  %v1825 = vpop.f32.mrb[0].mxu0
  %v1826 = vadd.f32 %v1698, %v1825
  %v1827 = vpop.f32.mrb[0].mxu0
  %1828 = vmatprep.mubr.f32.mxu0 0.0
  %1829 = vmatmul.mubr.f32.gmra.mrb[0].mxu0 %v1711
  %v1830 = vpop.f32.mrb[0].mxu0
  %v1831 = vadd.f32 %v1698, %v1830
  %v1832 = vpop.f32.mrb[0].mxu0
  %1833 = vmatprep.mubr.f32.mxu0 0.0
  %1834 = vmatmul.mubr.f32.gmra.mrb[0].mxu0 %v1714
  %v1835 = vpop.f32.mrb[0].mxu0
  %v1836 = vadd.f32 %v1698, %v1835
  %v1837 = vpop.f32.mrb[0].mxu0
  %1838 = vmatprep.mubr.f32.mxu0 0.0
  %1839 = vmatmul.mubr.f32.gmra.mrb[0].mxu0 %v1717
  %v1840 = vpop.f32.mrb[0].mxu0
  %v1841 = vadd.f32 %v1698, %v1840
  %v1842 = vpop.f32.mrb[0].mxu0
  %1843 = vmatprep.mubr.f32.mxu0 0.0
  %1844 = vmatmul.mubr.f32.gmra.mrb[0].mxu0 %v1720
  %v1845 = vpop.f32.mrb[0].mxu0
  %v1846 = vadd.f32 %v1698, %v1845
  %v1847 = vpop.f32.mrb[0].mxu0
  %1848 = vmatprep.mubr.f32.mxu0 0.0
  %1849 = vmatmul.mubr.f32.gmra.mrb[0].mxu0 %v1723
  %v1850 = vpop.f32.mrb[0].mxu0
  %v1851 = vadd.f32 %v1698, %v1850
  %v1852 = vpop.f32.mrb[0].mxu0
  %1853 = vmatprep.mubr.f32.mxu0 0.0
  %1854 = vmatmul.mubr.f32.gmra.mrb[0].mxu0 %v1726
  %v1855 = vpop.f32.mrb[0].mxu0
  %v1856 = vadd.f32 %v1698, %v1855
  %v1857 = vpop.f32.mrb[0].mxu0
  %1858 = vmatprep.mubr.f32.mxu0 0.0
  %1859 = vmatmul.mubr.f32.gmra.mrb[0].mxu0 %v1729
  %v1860 = vpop.f32.mrb[0].mxu0
  %v1861 = vadd.f32 %v1698, %v1860
  %v1862 = vpop.f32.mrb[0].mxu0
  %1863 = vmatprep.mubr.f32.mxu0 0.0
  %1864 = vmatmul.mubr.f32.gmra.mrb[0].mxu0 %v1732
  %v1865 = vpop.f32.mrb[0].mxu0
  %v1866 = vadd.f32 %v1698, %v1865
  %v1867 = vpop.f32.mrb[0].mxu0
  %1868 = vmatprep.mubr.f32.mxu0 0.0
  %1869 = vmatmul.mubr.f32.gmra.mrb[0].mxu0 %v1735
  %v1870 = vpop.f32.mrb[0].mxu0
  %v1871 = vadd.f32 %v1698, %v1870
  %v1872 = vpop.f32.mrb[0].mxu0
  %1873 = vmatprep.mubr.f32.mxu0 0.0
  %1874 = vmatmul.mubr.f32.gmra.mrb[0].mxu0 %v1738
  %v1875 = vpop.f32.mrb[0].mxu0
  %v1876 = vadd.f32 %v1698, %v1875
  %v1877 = vpop.f32.mrb[0].mxu0
  %1878 = vmatprep.mubr.f32.mxu0 0.0
  %1879 = vmatmul.mubr.f32.gmra.mrb[0].mxu0 %v1741
  %v1880 = vpop.f32.mrb[0].mxu0
  %v1881 = vadd.f32 %v1698, %v1880
  %v1882 = vpop.f32.mrb[0].mxu0
  %1883 = vmatprep.mubr.f32.mxu0 0.0
  %1884 = vmatmul.mubr.f32.gmra.mrb[0].mxu0 %v1744
  %v1885 = vpop.f32.mrb[0].mxu0
  %v1886 = vadd.f32 %v1698, %v1885
  %v1887 = vpop.f32.mrb[0].mxu0
  %1888 = vmatprep.mubr.f32.mxu0 0.0
  %1889 = vmatmul.mubr.f32.gmra.mrb[0].mxu0 %v1747
  %v1890 = vpop.f32.mrb[0].mxu0
  %v1891 = vadd.f32 %v1698, %v1890
  %v1892 = vpop.f32.mrb[0].mxu0
  %1893 = vdwg.mxu0
  %v1894 = vmax.f32 %v1816, 0.0
  %v1895 = vmax.f32 %v1821, 0.0
  %v1896 = vmax.f32 %v1826, 0.0
  %v1897 = vmax.f32 %v1831, 0.0
  %v1898 = vmax.f32 %v1836, 0.0
  %v1899 = vmax.f32 %v1841, 0.0
  %v1900 = vmax.f32 %v1846, 0.0
  %v1901 = vmax.f32 %v1851, 0.0
  %v1902 = vmax.f32 %v1856, 0.0
  %v1903 = vmax.f32 %v1861, 0.0
  %v1904 = vmax.f32 %v1866, 0.0
  %v1905 = vmax.f32 %v1871, 0.0
  %v1906 = vmax.f32 %v1876, 0.0
  %v1907 = vmax.f32 %v1881, 0.0
  %v1908 = vmax.f32 %v1886, 0.0
  %v1909 = vmax.f32 %v1891, 0.0
  %1910 = vst.msk [vmem:[#allocation3] sm:$0xff] %vm1566, 0.0
  %vm1911 = vcmask 123904
  %1912 = vst.msk [vmem:[#allocation3 + $0x8] sm:$0x3] %vm1911, 0.0
  %1913 = vst.msk [vmem:[#allocation3 + $0x10] sm:$0xff] %vm1566, 0.0
  %1914 = vst.msk [vmem:[#allocation3 + $0x18] sm:$0x3] %vm1911, 0.0
  %1915 = vst.msk [vmem:[#allocation3 + $0x20] sm:$0xff] %vm1566, 0.0
  %1916 = vst.msk [vmem:[#allocation3 + $0x28] sm:$0x3] %vm1911, 0.0
  %1917 = vst.msk [vmem:[#allocation3 + $0x30] sm:$0xff] %vm1566, 0.0
  %1918 = vst.msk [vmem:[#allocation3 + $0x38] sm:$0x3] %vm1911, 0.0
  %1919 = vst.msk [vmem:[#allocation3 + $0x40] sm:$0xff] %vm1566, 0.0
  %1920 = vst.msk [vmem:[#allocation3 + $0x48] sm:$0x3] %vm1911, 0.0
  %1921 = vst.msk [vmem:[#allocation3 + $0x50] sm:$0xff] %vm1566, 0.0
  %1922 = vst.msk [vmem:[#allocation3 + $0x58] sm:$0x3] %vm1911, 0.0
  %1923 = vst.msk [vmem:[#allocation3 + $0x60] sm:$0xff] %vm1566, 0.0
  %1924 = vst.msk [vmem:[#allocation3 + $0x68] sm:$0x3] %vm1911, 0.0
  %1925 = vst.msk [vmem:[#allocation3 + $0x70] sm:$0xff] %vm1566, 0.0
  %1926 = vst.msk [vmem:[#allocation3 + $0x78] sm:$0x3] %vm1911, 0.0
  %1927 = vst.msk [vmem:[#allocation3 + $0x80] sm:$0xff] %vm1566, 0.0
  %1928 = vst.msk [vmem:[#allocation3 + $0x88] sm:$0x3] %vm1911, 0.0
  %1929 = vst.msk [vmem:[#allocation3 + $0x90] sm:$0xff] %vm1566, 0.0
  %1930 = vst.msk [vmem:[#allocation3 + $0x98] sm:$0x3] %vm1911, 0.0
  %1931 = vst.msk [vmem:[#allocation3 + $0xa0] sm:$0xff] %vm1566, 0.0
  %1932 = vst.msk [vmem:[#allocation3 + $0xa8] sm:$0x3] %vm1911, 0.0
  %1933 = vst.msk [vmem:[#allocation3 + $0xb0] sm:$0xff] %vm1566, 0.0
  %1934 = vst.msk [vmem:[#allocation3 + $0xb8] sm:$0x3] %vm1911, 0.0
  %1935 = vst.msk [vmem:[#allocation3 + $0xc0] sm:$0xff] %vm1566, 0.0
  %1936 = vst.msk [vmem:[#allocation3 + $0xc8] sm:$0x3] %vm1911, 0.0
  %1937 = vst.msk [vmem:[#allocation3 + $0xd0] sm:$0xff] %vm1566, 0.0
  %1938 = vst.msk [vmem:[#allocation3 + $0xd8] sm:$0x3] %vm1911, 0.0
  %1939 = vst.msk [vmem:[#allocation3 + $0xe0] sm:$0xff] %vm1566, 0.0
  %1940 = vst.msk [vmem:[#allocation3 + $0xe8] sm:$0x3] %vm1911, 0.0
  %1941 = vst.msk [vmem:[#allocation3 + $0xf0] sm:$0xff] %vm1566, 0.0
  %1942 = vst.msk [vmem:[#allocation3 + $0xf8] sm:$0x3] %vm1911, 0.0
  %1943 = vst.msk [vmem:[#allocation3 + $0x100] sm:$0xff] %vm1566, 0.0
  %1944 = vst.msk [vmem:[#allocation3 + $0x108] sm:$0x3] %vm1911, 0.0
  %1945 = vst.msk [vmem:[#allocation3 + $0x110] sm:$0xff] %vm1566, 0.0
  %1946 = vst.msk [vmem:[#allocation3 + $0x118] sm:$0x3] %vm1911, 0.0
  %1947 = vst.msk [vmem:[#allocation3 + $0x120] sm:$0xff] %vm1566, 0.0
  %1948 = vst.msk [vmem:[#allocation3 + $0x128] sm:$0x3] %vm1911, 0.0
  %1949 = vst.msk [vmem:[#allocation3 + $0x130] sm:$0xff] %vm1566, 0.0
  %1950 = vst.msk [vmem:[#allocation3 + $0x138] sm:$0x3] %vm1911, 0.0
  %s1951 = scalar_lea.vmem [#allocation3], 16
  %1952 = vst.msk [vmem:[%s1951 + $0x1] sm:$0xff] %vm1566, %v1894
  %1953 = vst.msk [vmem:[%s1951 + $0x11] sm:$0xff] %vm1566, %v1895
  %1954 = vst.msk [vmem:[%s1951 + $0x21] sm:$0xff] %vm1566, %v1896
  %1955 = vst.msk [vmem:[%s1951 + $0x31] sm:$0xff] %vm1566, %v1897
  %1956 = vst.msk [vmem:[%s1951 + $0x41] sm:$0xff] %vm1566, %v1898
  %1957 = vst.msk [vmem:[%s1951 + $0x51] sm:$0xff] %vm1566, %v1899
  %1958 = vst.msk [vmem:[%s1951 + $0x61] sm:$0xff] %vm1566, %v1900
  %1959 = vst.msk [vmem:[%s1951 + $0x71] sm:$0xff] %vm1566, %v1901
  %1960 = vst.msk [vmem:[%s1951 + $0xa1] sm:$0xff] %vm1566, %v1902
  %1961 = vst.msk [vmem:[%s1951 + $0xb1] sm:$0xff] %vm1566, %v1903
  %1962 = vst.msk [vmem:[%s1951 + $0xc1] sm:$0xff] %vm1566, %v1904
  %1963 = vst.msk [vmem:[%s1951 + $0xd1] sm:$0xff] %vm1566, %v1905
  %1964 = vst.msk [vmem:[%s1951 + $0xe1] sm:$0xff] %vm1566, %v1906
  %1965 = vst.msk [vmem:[%s1951 + $0xf1] sm:$0xff] %vm1566, %v1907
  %1966 = vst.msk [vmem:[%s1951 + $0x101] sm:$0xff] %vm1566, %v1908
  %1967 = vst.msk [vmem:[%s1951 + $0x111] sm:$0xff] %vm1566, %v1909
  %v1968 = vld [vmem:[#allocation3] sm:$0xff]
  %v1969 = vld [vmem:[#allocation3 + $0x10] sm:$0xff]
  %v1970 = vld [vmem:[#allocation3 + $0x20] sm:$0xff]
  %v1971 = vld [vmem:[#allocation3 + $0x30] sm:$0xff]
  %v1972 = vld [vmem:[#allocation3 + $0x40] sm:$0xff]
  %v1973 = vld [vmem:[#allocation3 + $0x50] sm:$0xff]
  %v1974 = vld [vmem:[#allocation3 + $0x60] sm:$0xff]
  %v1975 = vld [vmem:[#allocation3 + $0x70] sm:$0xff]
  %v1976 = vld [vmem:[#allocation3 + $0xa0] sm:$0xff]
  %v1977 = vld [vmem:[#allocation3 + $0xb0] sm:$0xff]
  %v1978 = vld [vmem:[#allocation3 + $0xc0] sm:$0xff]
  %v1979 = vld [vmem:[#allocation3 + $0xd0] sm:$0xff]
  %v1980 = vld [vmem:[#allocation3 + $0xe0] sm:$0xff]
  %v1981 = vld [vmem:[#allocation3 + $0xf0] sm:$0xff]
  %v1982 = vld [vmem:[#allocation3 + $0x100] sm:$0xff]
  %v1983 = vld [vmem:[#allocation3 + $0x110] sm:$0xff]
  %v1984 = vld [vmem:[#allocation3 + $0x1] sm:$0xff]
  %v1985 = vld [vmem:[#allocation3 + $0x11] sm:$0xff]
  %v1986 = vld [vmem:[#allocation3 + $0x21] sm:$0xff]
  %v1987 = vld [vmem:[#allocation3 + $0x31] sm:$0xff]
  %v1988 = vld [vmem:[#allocation3 + $0x41] sm:$0xff]
  %v1989 = vld [vmem:[#allocation3 + $0x51] sm:$0xff]
  %v1990 = vld [vmem:[#allocation3 + $0x61] sm:$0xff]
  %v1991 = vld [vmem:[#allocation3 + $0x71] sm:$0xff]
  %v1992 = vld [vmem:[#allocation3 + $0xa1] sm:$0xff]
  %v1993 = vld [vmem:[#allocation3 + $0xb1] sm:$0xff]
  %v1994 = vld [vmem:[#allocation3 + $0xc1] sm:$0xff]
  %v1995 = vld [vmem:[#allocation3 + $0xd1] sm:$0xff]
  %v1996 = vld [vmem:[#allocation3 + $0xe1] sm:$0xff]
  %v1997 = vld [vmem:[#allocation3 + $0xf1] sm:$0xff]
  %v1998 = vld [vmem:[#allocation3 + $0x101] sm:$0xff]
  %v1999 = vld [vmem:[#allocation3 + $0x111] sm:$0xff]
  %v2000 = vld [vmem:[#allocation3 + $0x2] sm:$0xff]
  %v2001 = vld [vmem:[#allocation3 + $0x12] sm:$0xff]
  %v2002 = vld [vmem:[#allocation3 + $0x22] sm:$0xff]
  %v2003 = vld [vmem:[#allocation3 + $0x32] sm:$0xff]
  %v2004 = vld [vmem:[#allocation3 + $0x42] sm:$0xff]
  %v2005 = vld [vmem:[#allocation3 + $0x52] sm:$0xff]
  %v2006 = vld [vmem:[#allocation3 + $0x62] sm:$0xff]
  %v2007 = vld [vmem:[#allocation3 + $0x72] sm:$0xff]
  %v2008 = vld [vmem:[#allocation3 + $0xa2] sm:$0xff]
  %v2009 = vld [vmem:[#allocation3 + $0xb2] sm:$0xff]
  %v2010 = vld [vmem:[#allocation3 + $0xc2] sm:$0xff]
  %v2011 = vld [vmem:[#allocation3 + $0xd2] sm:$0xff]
  %v2012 = vld [vmem:[#allocation3 + $0xe2] sm:$0xff]
  %v2013 = vld [vmem:[#allocation3 + $0xf2] sm:$0xff]
  %v2014 = vld [vmem:[#allocation3 + $0x102] sm:$0xff]
  %v2015 = vld [vmem:[#allocation3 + $0x112] sm:$0xff]
  %v2016 = vld [vmem:[%s1951] sm:$0xff]
  %v2017 = vld [vmem:[%s1951 + $0x10] sm:$0xff]
  %v2018 = vld [vmem:[%s1951 + $0x20] sm:$0xff]
  %v2019 = vld [vmem:[%s1951 + $0x30] sm:$0xff]
  %v2020 = vld [vmem:[%s1951 + $0x40] sm:$0xff]
  %v2021 = vld [vmem:[%s1951 + $0x50] sm:$0xff]
  %v2022 = vld [vmem:[%s1951 + $0x60] sm:$0xff]
  %v2023 = vld [vmem:[%s1951 + $0x70] sm:$0xff]
  %v2024 = vld [vmem:[%s1951 + $0xa0] sm:$0xff]
  %v2025 = vld [vmem:[%s1951 + $0xb0] sm:$0xff]
  %v2026 = vld [vmem:[%s1951 + $0xc0] sm:$0xff]
  %v2027 = vld [vmem:[%s1951 + $0xd0] sm:$0xff]
  %v2028 = vld [vmem:[%s1951 + $0xe0] sm:$0xff]
  %v2029 = vld [vmem:[%s1951 + $0xf0] sm:$0xff]
  %v2030 = vld [vmem:[%s1951 + $0x100] sm:$0xff]
  %v2031 = vld [vmem:[%s1951 + $0x110] sm:$0xff]
  %v2032 = vld [vmem:[%s1951 + $0x1] sm:$0xff]
  %v2033 = vld [vmem:[%s1951 + $0x11] sm:$0xff]
  %v2034 = vld [vmem:[%s1951 + $0x21] sm:$0xff]
  %v2035 = vld [vmem:[%s1951 + $0x31] sm:$0xff]
  %v2036 = vld [vmem:[%s1951 + $0x41] sm:$0xff]
  %v2037 = vld [vmem:[%s1951 + $0x51] sm:$0xff]
  %v2038 = vld [vmem:[%s1951 + $0x61] sm:$0xff]
  %v2039 = vld [vmem:[%s1951 + $0x71] sm:$0xff]
  %v2040 = vld [vmem:[%s1951 + $0xa1] sm:$0xff]
  %v2041 = vld [vmem:[%s1951 + $0xb1] sm:$0xff]
  %v2042 = vld [vmem:[%s1951 + $0xc1] sm:$0xff]
  %v2043 = vld [vmem:[%s1951 + $0xd1] sm:$0xff]
  %v2044 = vld [vmem:[%s1951 + $0xe1] sm:$0xff]
  %v2045 = vld [vmem:[%s1951 + $0xf1] sm:$0xff]
  %v2046 = vld [vmem:[%s1951 + $0x101] sm:$0xff]
  %v2047 = vld [vmem:[%s1951 + $0x111] sm:$0xff]
  %v2048 = vld [vmem:[%s1951 + $0x2] sm:$0xff]
  %v2049 = vld [vmem:[%s1951 + $0x12] sm:$0xff]
  %v2050 = vld [vmem:[%s1951 + $0x22] sm:$0xff]
  %v2051 = vld [vmem:[%s1951 + $0x32] sm:$0xff]
  %v2052 = vld [vmem:[%s1951 + $0x42] sm:$0xff]
  %v2053 = vld [vmem:[%s1951 + $0x52] sm:$0xff]
  %v2054 = vld [vmem:[%s1951 + $0x62] sm:$0xff]
  %v2055 = vld [vmem:[%s1951 + $0x72] sm:$0xff]
  %v2056 = vld [vmem:[%s1951 + $0xa2] sm:$0xff]
  %v2057 = vld [vmem:[%s1951 + $0xb2] sm:$0xff]
  %v2058 = vld [vmem:[%s1951 + $0xc2] sm:$0xff]
  %v2059 = vld [vmem:[%s1951 + $0xd2] sm:$0xff]
  %v2060 = vld [vmem:[%s1951 + $0xe2] sm:$0xff]
  %v2061 = vld [vmem:[%s1951 + $0xf2] sm:$0xff]
  %v2062 = vld [vmem:[%s1951 + $0x102] sm:$0xff]
  %v2063 = vld [vmem:[%s1951 + $0x112] sm:$0xff]
  %s2064 = scalar_lea.vmem [#allocation3], 32
  %v2065 = vld [vmem:[%s2064] sm:$0xff]
  %v2066 = vld [vmem:[%s2064 + $0x10] sm:$0xff]
  %v2067 = vld [vmem:[%s2064 + $0x20] sm:$0xff]
  %v2068 = vld [vmem:[%s2064 + $0x30] sm:$0xff]
  %v2069 = vld [vmem:[%s2064 + $0x40] sm:$0xff]
  %v2070 = vld [vmem:[%s2064 + $0x50] sm:$0xff]
  %v2071 = vld [vmem:[%s2064 + $0x60] sm:$0xff]
  %v2072 = vld [vmem:[%s2064 + $0x70] sm:$0xff]
  %v2073 = vld [vmem:[%s2064 + $0xa0] sm:$0xff]
  %v2074 = vld [vmem:[%s2064 + $0xb0] sm:$0xff]
  %v2075 = vld [vmem:[%s2064 + $0xc0] sm:$0xff]
  %v2076 = vld [vmem:[%s2064 + $0xd0] sm:$0xff]
  %v2077 = vld [vmem:[%s2064 + $0xe0] sm:$0xff]
  %v2078 = vld [vmem:[%s2064 + $0xf0] sm:$0xff]
  %v2079 = vld [vmem:[%s2064 + $0x100] sm:$0xff]
  %v2080 = vld [vmem:[%s2064 + $0x110] sm:$0xff]
  %v2081 = vld [vmem:[%s2064 + $0x1] sm:$0xff]
  %v2082 = vld [vmem:[%s2064 + $0x11] sm:$0xff]
  %v2083 = vld [vmem:[%s2064 + $0x21] sm:$0xff]
  %v2084 = vld [vmem:[%s2064 + $0x31] sm:$0xff]
  %v2085 = vld [vmem:[%s2064 + $0x41] sm:$0xff]
  %v2086 = vld [vmem:[%s2064 + $0x51] sm:$0xff]
  %v2087 = vld [vmem:[%s2064 + $0x61] sm:$0xff]
  %v2088 = vld [vmem:[%s2064 + $0x71] sm:$0xff]
  %v2089 = vld [vmem:[%s2064 + $0xa1] sm:$0xff]
  %v2090 = vld [vmem:[%s2064 + $0xb1] sm:$0xff]
  %v2091 = vld [vmem:[%s2064 + $0xc1] sm:$0xff]
  %v2092 = vld [vmem:[%s2064 + $0xd1] sm:$0xff]
  %v2093 = vld [vmem:[%s2064 + $0xe1] sm:$0xff]
  %v2094 = vld [vmem:[%s2064 + $0xf1] sm:$0xff]
  %v2095 = vld [vmem:[%s2064 + $0x101] sm:$0xff]
  %v2096 = vld [vmem:[%s2064 + $0x111] sm:$0xff]
  %v2097 = vld [vmem:[%s2064 + $0x2] sm:$0xff]
  %v2098 = vld [vmem:[%s2064 + $0x12] sm:$0xff]
  %v2099 = vld [vmem:[%s2064 + $0x22] sm:$0xff]
  %v2100 = vld [vmem:[%s2064 + $0x32] sm:$0xff]
  %v2101 = vld [vmem:[%s2064 + $0x42] sm:$0xff]
  %v2102 = vld [vmem:[%s2064 + $0x52] sm:$0xff]
  %v2103 = vld [vmem:[%s2064 + $0x62] sm:$0xff]
  %v2104 = vld [vmem:[%s2064 + $0x72] sm:$0xff]
  %v2105 = vld [vmem:[%s2064 + $0xa2] sm:$0xff]
  %v2106 = vld [vmem:[%s2064 + $0xb2] sm:$0xff]
  %v2107 = vld [vmem:[%s2064 + $0xc2] sm:$0xff]
  %v2108 = vld [vmem:[%s2064 + $0xd2] sm:$0xff]
  %v2109 = vld [vmem:[%s2064 + $0xe2] sm:$0xff]
  %v2110 = vld [vmem:[%s2064 + $0xf2] sm:$0xff]
  %v2111 = vld [vmem:[%s2064 + $0x102] sm:$0xff]
  %v2112 = vld [vmem:[%s2064 + $0x112] sm:$0xff]
  %2129 = vrot.lane.b32.xlu0 %v1984, 16
  %v2130 = vpop.permute.xlu0 %2129
  %2131 = vrot.lane.b32.xlu0 %v1985, 16
  %v2132 = vpop.permute.xlu0 %2131
  %2133 = vrot.lane.b32.xlu0 %v1986, 16
  %v2134 = vpop.permute.xlu0 %2133
  %2135 = vrot.lane.b32.xlu0 %v1987, 16
  %v2136 = vpop.permute.xlu0 %2135
  %2137 = vrot.lane.b32.xlu0 %v1988, 16
  %v2138 = vpop.permute.xlu0 %2137
  %2139 = vrot.lane.b32.xlu0 %v1989, 16
  %v2140 = vpop.permute.xlu0 %2139
  %2141 = vrot.lane.b32.xlu0 %v1990, 16
  %v2142 = vpop.permute.xlu0 %2141
  %2143 = vrot.lane.b32.xlu0 %v1991, 16
  %v2144 = vpop.permute.xlu0 %2143
  %2145 = vrot.lane.b32.xlu0 %v1992, 16
  %v2146 = vpop.permute.xlu0 %2145
  %2147 = vrot.lane.b32.xlu0 %v1993, 16
  %v2148 = vpop.permute.xlu0 %2147
  %2149 = vrot.lane.b32.xlu0 %v1994, 16
  %v2150 = vpop.permute.xlu0 %2149
  %2151 = vrot.lane.b32.xlu0 %v1995, 16
  %v2152 = vpop.permute.xlu0 %2151
  %2153 = vrot.lane.b32.xlu0 %v1996, 16
  %v2154 = vpop.permute.xlu0 %2153
  %2155 = vrot.lane.b32.xlu0 %v1997, 16
  %v2156 = vpop.permute.xlu0 %2155
  %2157 = vrot.lane.b32.xlu0 %v1998, 16
  %v2158 = vpop.permute.xlu0 %2157
  %2159 = vrot.lane.b32.xlu0 %v1999, 16
  %v2160 = vpop.permute.xlu0 %2159
  %2193 = vrot.lane.b32.xlu0 %v2000, 32
  %v2194 = vpop.permute.xlu0 %2193
  %2195 = vrot.lane.b32.xlu0 %v2001, 32
  %v2196 = vpop.permute.xlu0 %2195
  %2197 = vrot.lane.b32.xlu0 %v2002, 32
  %v2198 = vpop.permute.xlu0 %2197
  %2199 = vrot.lane.b32.xlu0 %v2003, 32
  %v2200 = vpop.permute.xlu0 %2199
  %2201 = vrot.lane.b32.xlu0 %v2004, 32
  %v2202 = vpop.permute.xlu0 %2201
  %2203 = vrot.lane.b32.xlu0 %v2005, 32
  %v2204 = vpop.permute.xlu0 %2203
  %2205 = vrot.lane.b32.xlu0 %v2006, 32
  %v2206 = vpop.permute.xlu0 %2205
  %2207 = vrot.lane.b32.xlu0 %v2007, 32
  %v2208 = vpop.permute.xlu0 %2207
  %2209 = vrot.lane.b32.xlu0 %v2008, 32
  %v2210 = vpop.permute.xlu0 %2209
  %2211 = vrot.lane.b32.xlu0 %v2009, 32
  %v2212 = vpop.permute.xlu0 %2211
  %2213 = vrot.lane.b32.xlu0 %v2010, 32
  %v2214 = vpop.permute.xlu0 %2213
  %2215 = vrot.lane.b32.xlu0 %v2011, 32
  %v2216 = vpop.permute.xlu0 %2215
  %2217 = vrot.lane.b32.xlu0 %v2012, 32
  %v2218 = vpop.permute.xlu0 %2217
  %2219 = vrot.lane.b32.xlu0 %v2013, 32
  %v2220 = vpop.permute.xlu0 %2219
  %2221 = vrot.lane.b32.xlu0 %v2014, 32
  %v2222 = vpop.permute.xlu0 %2221
  %2223 = vrot.lane.b32.xlu0 %v2015, 32
  %v2224 = vpop.permute.xlu0 %2223
  %2257 = vrot.lane.b32.xlu0 %v2016, 48
  %v2258 = vpop.permute.xlu0 %2257
  %2259 = vrot.lane.b32.xlu0 %v2017, 48
  %v2260 = vpop.permute.xlu0 %2259
  %2261 = vrot.lane.b32.xlu0 %v2018, 48
  %v2262 = vpop.permute.xlu0 %2261
  %2263 = vrot.lane.b32.xlu0 %v2019, 48
  %v2264 = vpop.permute.xlu0 %2263
  %2265 = vrot.lane.b32.xlu0 %v2020, 48
  %v2266 = vpop.permute.xlu0 %2265
  %2267 = vrot.lane.b32.xlu0 %v2021, 48
  %v2268 = vpop.permute.xlu0 %2267
  %2269 = vrot.lane.b32.xlu0 %v2022, 48
  %v2270 = vpop.permute.xlu0 %2269
  %2271 = vrot.lane.b32.xlu0 %v2023, 48
  %v2272 = vpop.permute.xlu0 %2271
  %2273 = vrot.lane.b32.xlu0 %v2024, 48
  %v2274 = vpop.permute.xlu0 %2273
  %2275 = vrot.lane.b32.xlu0 %v2025, 48
  %v2276 = vpop.permute.xlu0 %2275
  %2277 = vrot.lane.b32.xlu0 %v2026, 48
  %v2278 = vpop.permute.xlu0 %2277
  %2279 = vrot.lane.b32.xlu0 %v2027, 48
  %v2280 = vpop.permute.xlu0 %2279
  %2281 = vrot.lane.b32.xlu0 %v2028, 48
  %v2282 = vpop.permute.xlu0 %2281
  %2283 = vrot.lane.b32.xlu0 %v2029, 48
  %v2284 = vpop.permute.xlu0 %2283
  %2285 = vrot.lane.b32.xlu0 %v2030, 48
  %v2286 = vpop.permute.xlu0 %2285
  %2287 = vrot.lane.b32.xlu0 %v2031, 48
  %v2288 = vpop.permute.xlu0 %2287
  %2321 = vrot.lane.b32.xlu0 %v2032, 64
  %v2322 = vpop.permute.xlu0 %2321
  %2323 = vrot.lane.b32.xlu0 %v2033, 64
  %v2324 = vpop.permute.xlu0 %2323
  %2325 = vrot.lane.b32.xlu0 %v2034, 64
  %v2326 = vpop.permute.xlu0 %2325
  %2327 = vrot.lane.b32.xlu0 %v2035, 64
  %v2328 = vpop.permute.xlu0 %2327
  %2329 = vrot.lane.b32.xlu0 %v2036, 64
  %v2330 = vpop.permute.xlu0 %2329
  %2331 = vrot.lane.b32.xlu0 %v2037, 64
  %v2332 = vpop.permute.xlu0 %2331
  %2333 = vrot.lane.b32.xlu0 %v2038, 64
  %v2334 = vpop.permute.xlu0 %2333
  %2335 = vrot.lane.b32.xlu0 %v2039, 64
  %v2336 = vpop.permute.xlu0 %2335
  %2337 = vrot.lane.b32.xlu0 %v2040, 64
  %v2338 = vpop.permute.xlu0 %2337
  %2339 = vrot.lane.b32.xlu0 %v2041, 64
  %v2340 = vpop.permute.xlu0 %2339
  %2341 = vrot.lane.b32.xlu0 %v2042, 64
  %v2342 = vpop.permute.xlu0 %2341
  %2343 = vrot.lane.b32.xlu0 %v2043, 64
  %v2344 = vpop.permute.xlu0 %2343
  %2345 = vrot.lane.b32.xlu0 %v2044, 64
  %v2346 = vpop.permute.xlu0 %2345
  %2347 = vrot.lane.b32.xlu0 %v2045, 64
  %v2348 = vpop.permute.xlu0 %2347
  %2349 = vrot.lane.b32.xlu0 %v2046, 64
  %v2350 = vpop.permute.xlu0 %2349
  %2351 = vrot.lane.b32.xlu0 %v2047, 64
  %v2352 = vpop.permute.xlu0 %2351
  %2385 = vrot.lane.b32.xlu0 %v2048, 80
  %v2386 = vpop.permute.xlu0 %2385
  %2387 = vrot.lane.b32.xlu0 %v2049, 80
  %v2388 = vpop.permute.xlu0 %2387
  %2389 = vrot.lane.b32.xlu0 %v2050, 80
  %v2390 = vpop.permute.xlu0 %2389
  %2391 = vrot.lane.b32.xlu0 %v2051, 80
  %v2392 = vpop.permute.xlu0 %2391
  %2393 = vrot.lane.b32.xlu0 %v2052, 80
  %v2394 = vpop.permute.xlu0 %2393
  %2395 = vrot.lane.b32.xlu0 %v2053, 80
  %v2396 = vpop.permute.xlu0 %2395
  %2397 = vrot.lane.b32.xlu0 %v2054, 80
  %v2398 = vpop.permute.xlu0 %2397
  %2399 = vrot.lane.b32.xlu0 %v2055, 80
  %v2400 = vpop.permute.xlu0 %2399
  %2401 = vrot.lane.b32.xlu0 %v2056, 80
  %v2402 = vpop.permute.xlu0 %2401
  %2403 = vrot.lane.b32.xlu0 %v2057, 80
  %v2404 = vpop.permute.xlu0 %2403
  %2405 = vrot.lane.b32.xlu0 %v2058, 80
  %v2406 = vpop.permute.xlu0 %2405
  %2407 = vrot.lane.b32.xlu0 %v2059, 80
  %v2408 = vpop.permute.xlu0 %2407
  %2409 = vrot.lane.b32.xlu0 %v2060, 80
  %v2410 = vpop.permute.xlu0 %2409
  %2411 = vrot.lane.b32.xlu0 %v2061, 80
  %v2412 = vpop.permute.xlu0 %2411
  %2413 = vrot.lane.b32.xlu0 %v2062, 80
  %v2414 = vpop.permute.xlu0 %2413
  %2415 = vrot.lane.b32.xlu0 %v2063, 80
  %v2416 = vpop.permute.xlu0 %2415
  %2449 = vrot.lane.b32.xlu0 %v2065, 96
  %v2450 = vpop.permute.xlu0 %2449
  %2451 = vrot.lane.b32.xlu0 %v2066, 96
  %v2452 = vpop.permute.xlu0 %2451
  %2453 = vrot.lane.b32.xlu0 %v2067, 96
  %v2454 = vpop.permute.xlu0 %2453
  %2455 = vrot.lane.b32.xlu0 %v2068, 96
  %v2456 = vpop.permute.xlu0 %2455
  %2457 = vrot.lane.b32.xlu0 %v2069, 96
  %v2458 = vpop.permute.xlu0 %2457
  %2459 = vrot.lane.b32.xlu0 %v2070, 96
  %v2460 = vpop.permute.xlu0 %2459
  %2461 = vrot.lane.b32.xlu0 %v2071, 96
  %v2462 = vpop.permute.xlu0 %2461
  %2463 = vrot.lane.b32.xlu0 %v2072, 96
  %v2464 = vpop.permute.xlu0 %2463
  %2465 = vrot.lane.b32.xlu0 %v2073, 96
  %v2466 = vpop.permute.xlu0 %2465
  %2467 = vrot.lane.b32.xlu0 %v2074, 96
  %v2468 = vpop.permute.xlu0 %2467
  %2469 = vrot.lane.b32.xlu0 %v2075, 96
  %v2470 = vpop.permute.xlu0 %2469
  %2471 = vrot.lane.b32.xlu0 %v2076, 96
  %v2472 = vpop.permute.xlu0 %2471
  %2473 = vrot.lane.b32.xlu0 %v2077, 96
  %v2474 = vpop.permute.xlu0 %2473
  %2475 = vrot.lane.b32.xlu0 %v2078, 96
  %v2476 = vpop.permute.xlu0 %2475
  %2477 = vrot.lane.b32.xlu0 %v2079, 96
  %v2478 = vpop.permute.xlu0 %2477
  %2479 = vrot.lane.b32.xlu0 %v2080, 96
  %v2480 = vpop.permute.xlu0 %2479
  %2513 = vrot.lane.b32.xlu0 %v2081, 112
  %v2514 = vpop.permute.xlu0 %2513
  %2515 = vrot.lane.b32.xlu0 %v2082, 112
  %v2516 = vpop.permute.xlu0 %2515
  %2517 = vrot.lane.b32.xlu0 %v2083, 112
  %v2518 = vpop.permute.xlu0 %2517
  %2519 = vrot.lane.b32.xlu0 %v2084, 112
  %v2520 = vpop.permute.xlu0 %2519
  %2521 = vrot.lane.b32.xlu0 %v2085, 112
  %v2522 = vpop.permute.xlu0 %2521
  %2523 = vrot.lane.b32.xlu0 %v2086, 112
  %v2524 = vpop.permute.xlu0 %2523
  %2525 = vrot.lane.b32.xlu0 %v2087, 112
  %v2526 = vpop.permute.xlu0 %2525
  %2527 = vrot.lane.b32.xlu0 %v2088, 112
  %v2528 = vpop.permute.xlu0 %2527
  %2529 = vrot.lane.b32.xlu0 %v2089, 112
  %v2530 = vpop.permute.xlu0 %2529
  %2531 = vrot.lane.b32.xlu0 %v2090, 112
  %v2532 = vpop.permute.xlu0 %2531
  %2533 = vrot.lane.b32.xlu0 %v2091, 112
  %v2534 = vpop.permute.xlu0 %2533
  %2535 = vrot.lane.b32.xlu0 %v2092, 112
  %v2536 = vpop.permute.xlu0 %2535
  %2537 = vrot.lane.b32.xlu0 %v2093, 112
  %v2538 = vpop.permute.xlu0 %2537
  %2539 = vrot.lane.b32.xlu0 %v2094, 112
  %v2540 = vpop.permute.xlu0 %2539
  %2541 = vrot.lane.b32.xlu0 %v2095, 112
  %v2542 = vpop.permute.xlu0 %2541
  %2543 = vrot.lane.b32.xlu0 %v2096, 112
  %v2544 = vpop.permute.xlu0 %2543
  %v2561 = vsel %vm1566, %v1968, %v2130
  %v2562 = vsel %vm1566, %v1969, %v2132
  %v2563 = vsel %vm1566, %v1970, %v2134
  %v2564 = vsel %vm1566, %v1971, %v2136
  %v2565 = vsel %vm1566, %v1972, %v2138
  %v2566 = vsel %vm1566, %v1973, %v2140
  %v2567 = vsel %vm1566, %v1974, %v2142
  %v2568 = vsel %vm1566, %v1975, %v2144
  %v2569 = vsel %vm1566, %v1976, %v2146
  %v2570 = vsel %vm1566, %v1977, %v2148
  %v2571 = vsel %vm1566, %v1978, %v2150
  %v2572 = vsel %vm1566, %v1979, %v2152
  %v2573 = vsel %vm1566, %v1980, %v2154
  %v2574 = vsel %vm1566, %v1981, %v2156
  %v2575 = vsel %vm1566, %v1982, %v2158
  %v2576 = vsel %vm1566, %v1983, %v2160
  %v2577 = vsel %vm73, %v2561, %v2194
  %v2578 = vsel %vm73, %v2562, %v2196
  %v2579 = vsel %vm73, %v2563, %v2198
  %v2580 = vsel %vm73, %v2564, %v2200
  %v2581 = vsel %vm73, %v2565, %v2202
  %v2582 = vsel %vm73, %v2566, %v2204
  %v2583 = vsel %vm73, %v2567, %v2206
  %v2584 = vsel %vm73, %v2568, %v2208
  %v2585 = vsel %vm73, %v2569, %v2210
  %v2586 = vsel %vm73, %v2570, %v2212
  %v2587 = vsel %vm73, %v2571, %v2214
  %v2588 = vsel %vm73, %v2572, %v2216
  %v2589 = vsel %vm73, %v2573, %v2218
  %v2590 = vsel %vm73, %v2574, %v2220
  %v2591 = vsel %vm73, %v2575, %v2222
  %v2592 = vsel %vm73, %v2576, %v2224
  %v2593 = vsel %vm1633, %v2577, %v2258
  %v2594 = vsel %vm1633, %v2578, %v2260
  %v2595 = vsel %vm1633, %v2579, %v2262
  %v2596 = vsel %vm1633, %v2580, %v2264
  %v2597 = vsel %vm1633, %v2581, %v2266
  %v2598 = vsel %vm1633, %v2582, %v2268
  %v2599 = vsel %vm1633, %v2583, %v2270
  %v2600 = vsel %vm1633, %v2584, %v2272
  %v2601 = vsel %vm1633, %v2585, %v2274
  %v2602 = vsel %vm1633, %v2586, %v2276
  %v2603 = vsel %vm1633, %v2587, %v2278
  %v2604 = vsel %vm1633, %v2588, %v2280
  %v2605 = vsel %vm1633, %v2589, %v2282
  %v2606 = vsel %vm1633, %v2590, %v2284
  %v2607 = vsel %vm1633, %v2591, %v2286
  %v2608 = vsel %vm1633, %v2592, %v2288
  %v2609 = vsel %vm1667, %v2593, %v2322
  %v2610 = vsel %vm1667, %v2594, %v2324
  %v2611 = vsel %vm1667, %v2595, %v2326
  %v2612 = vsel %vm1667, %v2596, %v2328
  %v2613 = vsel %vm1667, %v2597, %v2330
  %v2614 = vsel %vm1667, %v2598, %v2332
  %v2615 = vsel %vm1667, %v2599, %v2334
  %v2616 = vsel %vm1667, %v2600, %v2336
  %v2617 = vsel %vm1667, %v2601, %v2338
  %v2618 = vsel %vm1667, %v2602, %v2340
  %v2619 = vsel %vm1667, %v2603, %v2342
  %v2620 = vsel %vm1667, %v2604, %v2344
  %v2621 = vsel %vm1667, %v2605, %v2346
  %v2622 = vsel %vm1667, %v2606, %v2348
  %v2623 = vsel %vm1667, %v2607, %v2350
  %v2624 = vsel %vm1667, %v2608, %v2352
  %vm2625 = vcmask 654336
  %v2626 = vsel %vm2625, %v2609, %v2386
  %v2627 = vsel %vm2625, %v2610, %v2388
  %v2628 = vsel %vm2625, %v2611, %v2390
  %v2629 = vsel %vm2625, %v2612, %v2392
  %v2630 = vsel %vm2625, %v2613, %v2394
  %v2631 = vsel %vm2625, %v2614, %v2396
  %v2632 = vsel %vm2625, %v2615, %v2398
  %v2633 = vsel %vm2625, %v2616, %v2400
  %v2634 = vsel %vm2625, %v2617, %v2402
  %v2635 = vsel %vm2625, %v2618, %v2404
  %v2636 = vsel %vm2625, %v2619, %v2406
  %v2637 = vsel %vm2625, %v2620, %v2408
  %v2638 = vsel %vm2625, %v2621, %v2410
  %v2639 = vsel %vm2625, %v2622, %v2412
  %v2640 = vsel %vm2625, %v2623, %v2414
  %v2641 = vsel %vm2625, %v2624, %v2416
  %vm2642 = vcmask 785408
  %v2643 = vsel %vm2642, %v2626, %v2450
  %v2644 = vsel %vm2642, %v2627, %v2452
  %v2645 = vsel %vm2642, %v2628, %v2454
  %v2646 = vsel %vm2642, %v2629, %v2456
  %v2647 = vsel %vm2642, %v2630, %v2458
  %v2648 = vsel %vm2642, %v2631, %v2460
  %v2649 = vsel %vm2642, %v2632, %v2462
  %v2650 = vsel %vm2642, %v2633, %v2464
  %v2651 = vsel %vm2642, %v2634, %v2466
  %v2652 = vsel %vm2642, %v2635, %v2468
  %v2653 = vsel %vm2642, %v2636, %v2470
  %v2654 = vsel %vm2642, %v2637, %v2472
  %v2655 = vsel %vm2642, %v2638, %v2474
  %v2656 = vsel %vm2642, %v2639, %v2476
  %v2657 = vsel %vm2642, %v2640, %v2478
  %v2658 = vsel %vm2642, %v2641, %v2480
  %vm2659 = vcmask 916480
  %v2660 = vsel %vm2659, %v2643, %v2514
  %v2661 = vsel %vm2659, %v2644, %v2516
  %v2662 = vsel %vm2659, %v2645, %v2518
  %v2663 = vsel %vm2659, %v2646, %v2520
  %v2664 = vsel %vm2659, %v2647, %v2522
  %v2665 = vsel %vm2659, %v2648, %v2524
  %v2666 = vsel %vm2659, %v2649, %v2526
  %v2667 = vsel %vm2659, %v2650, %v2528
  %v2668 = vsel %vm2659, %v2651, %v2530
  %v2669 = vsel %vm2659, %v2652, %v2532
  %v2670 = vsel %vm2659, %v2653, %v2534
  %v2671 = vsel %vm2659, %v2654, %v2536
  %v2672 = vsel %vm2659, %v2655, %v2538
  %v2673 = vsel %vm2659, %v2656, %v2540
  %v2674 = vsel %vm2659, %v2657, %v2542
  %v2675 = vsel %vm2659, %v2658, %v2544
  %v2676 = vld [vmem:[%s5] sm:$0xff]
  %v2677 = vld [vmem:[%s5 + $0x8] sm:$0xff]
  %v2678 = vld [vmem:[%s5 + $0x10] sm:$0xff]
  %v2679 = vld [vmem:[%s5 + $0x18] sm:$0xff]
  %v2680 = vld [vmem:[%s5 + $0x20] sm:$0xff]
  %v2681 = vld [vmem:[%s5 + $0x28] sm:$0xff]
  %v2682 = vld [vmem:[%s5 + $0x30] sm:$0xff]
  %v2683 = vld [vmem:[%s5 + $0x38] sm:$0xff]
  %v2684 = vld [vmem:[%s5 + $0x40] sm:$0xff]
  %v2685 = vld [vmem:[%s5 + $0x48] sm:$0xff]
  %v2686 = vld [vmem:[%s5 + $0x50] sm:$0xff]
  %v2687 = vld [vmem:[%s5 + $0x58] sm:$0xff]
  %v2688 = vld [vmem:[%s5 + $0x60] sm:$0xff]
  %v2689 = vld [vmem:[%s5 + $0x68] sm:$0xff]
  %v2690 = vld [vmem:[%s5 + $0x70] sm:$0xff]
  %v2691 = vld [vmem:[%s5 + $0x78] sm:$0xff]
  %v2692 = vld [vmem:[%s5 + $0x80] sm:$0xff]
  %v2693 = vld [vmem:[%s5 + $0x88] sm:$0xff]
  %v2694 = vld [vmem:[%s6] sm:$0x1]
  %v2696 = vlaneseq
  %v2697 = vshrl.u32 %v2696, 7
  %v2698 = vsub.s32 0, %v2697
  %v2699 = vrot.slane %v2694, %v2698
  %v2702 = vsel %vm1566, %v2097, 0
  %v2705 = vsel %vm1566, %v2098, 0
  %v2708 = vsel %vm1566, %v2099, 0
  %v2711 = vsel %vm1566, %v2100, 0
  %v2714 = vsel %vm1566, %v2101, 0
  %v2717 = vsel %vm1566, %v2102, 0
  %v2720 = vsel %vm1566, %v2103, 0
  %v2723 = vsel %vm1566, %v2104, 0
  %v2726 = vsel %vm1566, %v2105, 0
  %v2729 = vsel %vm1566, %v2106, 0
  %v2732 = vsel %vm1566, %v2107, 0
  %v2735 = vsel %vm1566, %v2108, 0
  %v2738 = vsel %vm1566, %v2109, 0
  %v2741 = vsel %vm1566, %v2110, 0
  %v2744 = vsel %vm1566, %v2111, 0
  %v2747 = vsel %vm1566, %v2112, 0
  %2749 = vmatprep.subr.mxu0 0.0
  %2750 = vmatpush1.msra.mxu0 %v2676
  %2751 = vmatprep.subr.mxu0 0.0
  %2752 = vmatpush1.msra.mxu0 %v2677
  %2753 = vmatprep.subr.mxu0 0.0
  %2754 = vmatpush1.msra.mxu0 %v2678
  %2755 = vmatprep.subr.mxu0 0.0
  %2756 = vmatpush1.msra.mxu0 %v2679
  %2757 = vmatprep.subr.mxu0 0.0
  %2758 = vmatpush1.msra.mxu0 %v2680
  %2759 = vmatprep.subr.mxu0 0.0
  %2760 = vmatpush1.msra.mxu0 %v2681
  %2761 = vmatprep.subr.mxu0 0.0
  %2762 = vmatpush1.msra.mxu0 %v2682
  %2763 = vmatprep.subr.mxu0 0.0
  %2764 = vmatpush1.msra.mxu0 %v2683
  %2765 = vmatprep.subr.mxu0 0.0
  %2766 = vmatpush1.msra.mxu0 %v2684
  %2767 = vmatprep.subr.mxu0 0.0
  %2768 = vmatpush1.msra.mxu0 %v2685
  %2769 = vmatprep.subr.mxu0 0.0
  %2770 = vmatpush1.msra.mxu0 %v2686
  %2771 = vmatprep.subr.mxu0 0.0
  %2772 = vmatpush1.msra.mxu0 %v2687
  %2773 = vmatprep.subr.mxu0 0.0
  %2774 = vmatpush1.msra.mxu0 %v2688
  %2775 = vmatprep.subr.mxu0 0.0
  %2776 = vmatpush1.msra.mxu0 %v2689
  %2777 = vmatprep.subr.mxu0 0.0
  %2778 = vmatpush1.msra.mxu0 %v2690
  %2779 = vmatprep.subr.mxu0 0.0
  %2780 = vmatpush1.msra.mxu0 %v2691
  %2781 = vmatprep.subr.mxu0 0.0
  %2782 = vmatpush1.msra.mxu0 %v2692
  %2783 = vmatprep.subr.mxu0 0.0
  %2784 = vmatpush1.msra.mxu0 %v2693
  %2785 = vmatprep.subr.mxu0 0.0
  %2786 = vmatpush1.msra.mxu0 0.0
  %2787 = vmatprep.subr.mxu0 0.0
  %2788 = vmatpush1.msra.mxu0 0.0
  %2789 = vmatprep.subr.mxu0 0.0
  %2790 = vmatpush1.msra.mxu0 0.0
  %2791 = vmatprep.subr.mxu0 0.0
  %2792 = vmatpush1.msra.mxu0 0.0
  %2793 = vmatprep.subr.mxu0 0.0
  %2794 = vmatpush1.msra.mxu0 0.0
  %2795 = vmatprep.subr.mxu0 0.0
  %2796 = vmatpush1.msra.mxu0 0.0
  %2797 = vmatprep.subr.mxu0 0.0
  %2798 = vmatpush1.msra.mxu0 0.0
  %2799 = vmatprep.subr.mxu0 0.0
  %2800 = vmatpush1.msra.mxu0 0.0
  %2801 = vmatprep.subr.mxu0 0.0
  %2802 = vmatpush1.msra.mxu0 0.0
  %2803 = vmatprep.subr.mxu0 0.0
  %2804 = vmatpush1.msra.mxu0 0.0
  %2805 = vmatprep.subr.mxu0 0.0
  %2806 = vmatpush1.msra.mxu0 0.0
  %2807 = vmatprep.subr.mxu0 0.0
  %2808 = vmatpush1.msra.mxu0 0.0
  %2809 = vmatprep.subr.mxu0 0.0
  %2810 = vmatpush1.msra.mxu0 0.0
  %2811 = vmatprep.subr.mxu0 0.0
  %2812 = vmatpush1.msra.mxu0 0.0
  %2813 = vmatprep.mubr.f32.mxu0 %v2702
  %2814 = vmatmul.mubr.f32.gmra.mrb[0].mxu0 %v2660
  %v2815 = vpop.f32.mrb[0].mxu0
  %v2816 = vadd.f32 %v2699, %v2815
  %v2817 = vpop.f32.mrb[0].mxu0
  %2818 = vmatprep.mubr.f32.mxu0 %v2705
  %2819 = vmatmul.mubr.f32.gmra.mrb[0].mxu0 %v2661
  %v2820 = vpop.f32.mrb[0].mxu0
  %v2821 = vadd.f32 %v2699, %v2820
  %v2822 = vpop.f32.mrb[0].mxu0
  %2823 = vmatprep.mubr.f32.mxu0 %v2708
  %2824 = vmatmul.mubr.f32.gmra.mrb[0].mxu0 %v2662
  %v2825 = vpop.f32.mrb[0].mxu0
  %v2826 = vadd.f32 %v2699, %v2825
  %v2827 = vpop.f32.mrb[0].mxu0
  %2828 = vmatprep.mubr.f32.mxu0 %v2711
  %2829 = vmatmul.mubr.f32.gmra.mrb[0].mxu0 %v2663
  %v2830 = vpop.f32.mrb[0].mxu0
  %v2831 = vadd.f32 %v2699, %v2830
  %v2832 = vpop.f32.mrb[0].mxu0
  %2833 = vmatprep.mubr.f32.mxu0 %v2714
  %2834 = vmatmul.mubr.f32.gmra.mrb[0].mxu0 %v2664
  %v2835 = vpop.f32.mrb[0].mxu0
  %v2836 = vadd.f32 %v2699, %v2835
  %v2837 = vpop.f32.mrb[0].mxu0
  %2838 = vmatprep.mubr.f32.mxu0 %v2717
  %2839 = vmatmul.mubr.f32.gmra.mrb[0].mxu0 %v2665
  %v2840 = vpop.f32.mrb[0].mxu0
  %v2841 = vadd.f32 %v2699, %v2840
  %v2842 = vpop.f32.mrb[0].mxu0
  %2843 = vmatprep.mubr.f32.mxu0 %v2720
  %2844 = vmatmul.mubr.f32.gmra.mrb[0].mxu0 %v2666
  %v2845 = vpop.f32.mrb[0].mxu0
  %v2846 = vadd.f32 %v2699, %v2845
  %v2847 = vpop.f32.mrb[0].mxu0
  %2848 = vmatprep.mubr.f32.mxu0 %v2723
  %2849 = vmatmul.mubr.f32.gmra.mrb[0].mxu0 %v2667
  %v2850 = vpop.f32.mrb[0].mxu0
  %v2851 = vadd.f32 %v2699, %v2850
  %v2852 = vpop.f32.mrb[0].mxu0
  %2853 = vmatprep.mubr.f32.mxu0 %v2726
  %2854 = vmatmul.mubr.f32.gmra.mrb[0].mxu0 %v2668
  %v2855 = vpop.f32.mrb[0].mxu0
  %v2856 = vadd.f32 %v2699, %v2855
  %v2857 = vpop.f32.mrb[0].mxu0
  %2858 = vmatprep.mubr.f32.mxu0 %v2729
  %2859 = vmatmul.mubr.f32.gmra.mrb[0].mxu0 %v2669
  %v2860 = vpop.f32.mrb[0].mxu0
  %v2861 = vadd.f32 %v2699, %v2860
  %v2862 = vpop.f32.mrb[0].mxu0
  %2863 = vmatprep.mubr.f32.mxu0 %v2732
  %2864 = vmatmul.mubr.f32.gmra.mrb[0].mxu0 %v2670
  %v2865 = vpop.f32.mrb[0].mxu0
  %v2866 = vadd.f32 %v2699, %v2865
  %v2867 = vpop.f32.mrb[0].mxu0
  %2868 = vmatprep.mubr.f32.mxu0 %v2735
  %2869 = vmatmul.mubr.f32.gmra.mrb[0].mxu0 %v2671
  %v2870 = vpop.f32.mrb[0].mxu0
  %v2871 = vadd.f32 %v2699, %v2870
  %v2872 = vpop.f32.mrb[0].mxu0
  %2873 = vmatprep.mubr.f32.mxu0 %v2738
  %2874 = vmatmul.mubr.f32.gmra.mrb[0].mxu0 %v2672
  %v2875 = vpop.f32.mrb[0].mxu0
  %v2876 = vadd.f32 %v2699, %v2875
  %v2877 = vpop.f32.mrb[0].mxu0
  %2878 = vmatprep.mubr.f32.mxu0 %v2741
  %2879 = vmatmul.mubr.f32.gmra.mrb[0].mxu0 %v2673
  %v2880 = vpop.f32.mrb[0].mxu0
  %v2881 = vadd.f32 %v2699, %v2880
  %v2882 = vpop.f32.mrb[0].mxu0
  %2883 = vmatprep.mubr.f32.mxu0 %v2744
  %2884 = vmatmul.mubr.f32.gmra.mrb[0].mxu0 %v2674
  %v2885 = vpop.f32.mrb[0].mxu0
  %v2886 = vadd.f32 %v2699, %v2885
  %v2887 = vpop.f32.mrb[0].mxu0
  %2888 = vmatprep.mubr.f32.mxu0 %v2747
  %2889 = vmatmul.mubr.f32.gmra.mrb[0].mxu0 %v2675
  %v2890 = vpop.f32.mrb[0].mxu0
  %v2891 = vadd.f32 %v2699, %v2890
  %v2892 = vpop.f32.mrb[0].mxu0
  %2893 = vdwg.mxu0
  %v2894 = vmax.f32 %v2816, 0.0
  %v2895 = vmax.f32 %v2821, 0.0
  %v2896 = vmax.f32 %v2826, 0.0
  %v2897 = vmax.f32 %v2831, 0.0
  %v2898 = vmax.f32 %v2836, 0.0
  %v2899 = vmax.f32 %v2841, 0.0
  %v2900 = vmax.f32 %v2846, 0.0
  %v2901 = vmax.f32 %v2851, 0.0
  %v2902 = vmax.f32 %v2856, 0.0
  %v2903 = vmax.f32 %v2861, 0.0
  %v2904 = vmax.f32 %v2866, 0.0
  %v2905 = vmax.f32 %v2871, 0.0
  %v2906 = vmax.f32 %v2876, 0.0
  %v2907 = vmax.f32 %v2881, 0.0
  %v2908 = vmax.f32 %v2886, 0.0
  %v2909 = vmax.f32 %v2891, 0.0
  %2910 = vst.msk [vmem:[#allocation4] sm:$0xff] %vm73, 0.0
  %vm2911 = vcmask 254976
  %2912 = vst.msk [vmem:[#allocation4 + $0x8] sm:$0x3] %vm2911, 0.0
  %2913 = vst.msk [vmem:[#allocation4 + $0x10] sm:$0xff] %vm73, 0.0
  %2914 = vst.msk [vmem:[#allocation4 + $0x18] sm:$0x3] %vm2911, 0.0
  %2915 = vst.msk [vmem:[#allocation4 + $0x20] sm:$0xff] %vm73, 0.0
  %2916 = vst.msk [vmem:[#allocation4 + $0x28] sm:$0x3] %vm2911, 0.0
  %2917 = vst.msk [vmem:[#allocation4 + $0x30] sm:$0xff] %vm73, 0.0
  %2918 = vst.msk [vmem:[#allocation4 + $0x38] sm:$0x3] %vm2911, 0.0
  %2919 = vst.msk [vmem:[#allocation4 + $0x40] sm:$0xff] %vm73, 0.0
  %2920 = vst.msk [vmem:[#allocation4 + $0x48] sm:$0x3] %vm2911, 0.0
  %2921 = vst.msk [vmem:[#allocation4 + $0x50] sm:$0xff] %vm73, 0.0
  %2922 = vst.msk [vmem:[#allocation4 + $0x58] sm:$0x3] %vm2911, 0.0
  %2923 = vst.msk [vmem:[#allocation4 + $0x60] sm:$0xff] %vm73, 0.0
  %2924 = vst.msk [vmem:[#allocation4 + $0x68] sm:$0x3] %vm2911, 0.0
  %2925 = vst.msk [vmem:[#allocation4 + $0x70] sm:$0xff] %vm73, 0.0
  %2926 = vst.msk [vmem:[#allocation4 + $0x78] sm:$0x3] %vm2911, 0.0
  %2927 = vst.msk [vmem:[#allocation4 + $0x80] sm:$0xff] %vm73, 0.0
  %2928 = vst.msk [vmem:[#allocation4 + $0x88] sm:$0x3] %vm2911, 0.0
  %2929 = vst.msk [vmem:[#allocation4 + $0x90] sm:$0xff] %vm73, 0.0
  %2930 = vst.msk [vmem:[#allocation4 + $0x98] sm:$0x3] %vm2911, 0.0
  %2931 = vst.msk [vmem:[#allocation4 + $0xa0] sm:$0xff] %vm73, 0.0
  %2932 = vst.msk [vmem:[#allocation4 + $0xa8] sm:$0x3] %vm2911, 0.0
  %2933 = vst.msk [vmem:[#allocation4 + $0xb0] sm:$0xff] %vm73, 0.0
  %2934 = vst.msk [vmem:[#allocation4 + $0xb8] sm:$0x3] %vm2911, 0.0
  %2935 = vst.msk [vmem:[#allocation4 + $0xc0] sm:$0xff] %vm73, 0.0
  %2936 = vst.msk [vmem:[#allocation4 + $0xc8] sm:$0x3] %vm2911, 0.0
  %2937 = vst.msk [vmem:[#allocation4 + $0xd0] sm:$0xff] %vm73, 0.0
  %2938 = vst.msk [vmem:[#allocation4 + $0xd8] sm:$0x3] %vm2911, 0.0
  %2939 = vst.msk [vmem:[#allocation4 + $0xe0] sm:$0xff] %vm73, 0.0
  %2940 = vst.msk [vmem:[#allocation4 + $0xe8] sm:$0x3] %vm2911, 0.0
  %2941 = vst.msk [vmem:[#allocation4 + $0xf0] sm:$0xff] %vm73, 0.0
  %2942 = vst.msk [vmem:[#allocation4 + $0xf8] sm:$0x3] %vm2911, 0.0
  %2943 = vst.msk [vmem:[#allocation4 + $0x100] sm:$0xff] %vm73, 0.0
  %2944 = vst.msk [vmem:[#allocation4 + $0x108] sm:$0x3] %vm2911, 0.0
  %2945 = vst.msk [vmem:[#allocation4 + $0x110] sm:$0xff] %vm73, 0.0
  %2946 = vst.msk [vmem:[#allocation4 + $0x118] sm:$0x3] %vm2911, 0.0
  %2947 = vst.msk [vmem:[#allocation4 + $0x120] sm:$0xff] %vm73, 0.0
  %2948 = vst.msk [vmem:[#allocation4 + $0x128] sm:$0x3] %vm2911, 0.0
  %2949 = vst.msk [vmem:[#allocation4 + $0x130] sm:$0xff] %vm73, 0.0
  %2950 = vst.msk [vmem:[#allocation4 + $0x138] sm:$0x3] %vm2911, 0.0
  %s2951 = scalar_lea.vmem [#allocation4], 16
  %2952 = vst.msk [vmem:[%s2951 + $0x1] sm:$0xff] %vm73, %v2894
  %2953 = vst.msk [vmem:[%s2951 + $0x11] sm:$0xff] %vm73, %v2895
  %2954 = vst.msk [vmem:[%s2951 + $0x21] sm:$0xff] %vm73, %v2896
  %2955 = vst.msk [vmem:[%s2951 + $0x31] sm:$0xff] %vm73, %v2897
  %2956 = vst.msk [vmem:[%s2951 + $0x41] sm:$0xff] %vm73, %v2898
  %2957 = vst.msk [vmem:[%s2951 + $0x51] sm:$0xff] %vm73, %v2899
  %2958 = vst.msk [vmem:[%s2951 + $0x61] sm:$0xff] %vm73, %v2900
  %2959 = vst.msk [vmem:[%s2951 + $0x71] sm:$0xff] %vm73, %v2901
  %2960 = vst.msk [vmem:[%s2951 + $0xa1] sm:$0xff] %vm73, %v2902
  %2961 = vst.msk [vmem:[%s2951 + $0xb1] sm:$0xff] %vm73, %v2903
  %2962 = vst.msk [vmem:[%s2951 + $0xc1] sm:$0xff] %vm73, %v2904
  %2963 = vst.msk [vmem:[%s2951 + $0xd1] sm:$0xff] %vm73, %v2905
  %2964 = vst.msk [vmem:[%s2951 + $0xe1] sm:$0xff] %vm73, %v2906
  %2965 = vst.msk [vmem:[%s2951 + $0xf1] sm:$0xff] %vm73, %v2907
  %2966 = vst.msk [vmem:[%s2951 + $0x101] sm:$0xff] %vm73, %v2908
  %2967 = vst.msk [vmem:[%s2951 + $0x111] sm:$0xff] %vm73, %v2909
  %v2968 = vld [vmem:[#allocation4] sm:$0xff]
  %v2969 = vld [vmem:[#allocation4 + $0x10] sm:$0xff]
  %v2970 = vld [vmem:[#allocation4 + $0x20] sm:$0xff]
  %v2971 = vld [vmem:[#allocation4 + $0x30] sm:$0xff]
  %v2972 = vld [vmem:[#allocation4 + $0x40] sm:$0xff]
  %v2973 = vld [vmem:[#allocation4 + $0x50] sm:$0xff]
  %v2974 = vld [vmem:[#allocation4 + $0x60] sm:$0xff]
  %v2975 = vld [vmem:[#allocation4 + $0x70] sm:$0xff]
  %v2976 = vld [vmem:[#allocation4 + $0xa0] sm:$0xff]
  %v2977 = vld [vmem:[#allocation4 + $0xb0] sm:$0xff]
  %v2978 = vld [vmem:[#allocation4 + $0xc0] sm:$0xff]
  %v2979 = vld [vmem:[#allocation4 + $0xd0] sm:$0xff]
  %v2980 = vld [vmem:[#allocation4 + $0xe0] sm:$0xff]
  %v2981 = vld [vmem:[#allocation4 + $0xf0] sm:$0xff]
  %v2982 = vld [vmem:[#allocation4 + $0x100] sm:$0xff]
  %v2983 = vld [vmem:[#allocation4 + $0x110] sm:$0xff]
  %v2984 = vld [vmem:[#allocation4 + $0x1] sm:$0xff]
  %v2985 = vld [vmem:[#allocation4 + $0x11] sm:$0xff]
  %v2986 = vld [vmem:[#allocation4 + $0x21] sm:$0xff]
  %v2987 = vld [vmem:[#allocation4 + $0x31] sm:$0xff]
  %v2988 = vld [vmem:[#allocation4 + $0x41] sm:$0xff]
  %v2989 = vld [vmem:[#allocation4 + $0x51] sm:$0xff]
  %v2990 = vld [vmem:[#allocation4 + $0x61] sm:$0xff]
  %v2991 = vld [vmem:[#allocation4 + $0x71] sm:$0xff]
  %v2992 = vld [vmem:[#allocation4 + $0xa1] sm:$0xff]
  %v2993 = vld [vmem:[#allocation4 + $0xb1] sm:$0xff]
  %v2994 = vld [vmem:[#allocation4 + $0xc1] sm:$0xff]
  %v2995 = vld [vmem:[#allocation4 + $0xd1] sm:$0xff]
  %v2996 = vld [vmem:[#allocation4 + $0xe1] sm:$0xff]
  %v2997 = vld [vmem:[#allocation4 + $0xf1] sm:$0xff]
  %v2998 = vld [vmem:[#allocation4 + $0x101] sm:$0xff]
  %v2999 = vld [vmem:[#allocation4 + $0x111] sm:$0xff]
  %v3000 = vld [vmem:[#allocation4 + $0x2] sm:$0xff]
  %v3001 = vld [vmem:[#allocation4 + $0x12] sm:$0xff]
  %v3002 = vld [vmem:[#allocation4 + $0x22] sm:$0xff]
  %v3003 = vld [vmem:[#allocation4 + $0x32] sm:$0xff]
  %v3004 = vld [vmem:[#allocation4 + $0x42] sm:$0xff]
  %v3005 = vld [vmem:[#allocation4 + $0x52] sm:$0xff]
  %v3006 = vld [vmem:[#allocation4 + $0x62] sm:$0xff]
  %v3007 = vld [vmem:[#allocation4 + $0x72] sm:$0xff]
  %v3008 = vld [vmem:[#allocation4 + $0xa2] sm:$0xff]
  %v3009 = vld [vmem:[#allocation4 + $0xb2] sm:$0xff]
  %v3010 = vld [vmem:[#allocation4 + $0xc2] sm:$0xff]
  %v3011 = vld [vmem:[#allocation4 + $0xd2] sm:$0xff]
  %v3012 = vld [vmem:[#allocation4 + $0xe2] sm:$0xff]
  %v3013 = vld [vmem:[#allocation4 + $0xf2] sm:$0xff]
  %v3014 = vld [vmem:[#allocation4 + $0x102] sm:$0xff]
  %v3015 = vld [vmem:[#allocation4 + $0x112] sm:$0xff]
  %v3016 = vld [vmem:[%s2951] sm:$0xff]
  %v3017 = vld [vmem:[%s2951 + $0x10] sm:$0xff]
  %v3018 = vld [vmem:[%s2951 + $0x20] sm:$0xff]
  %v3019 = vld [vmem:[%s2951 + $0x30] sm:$0xff]
  %v3020 = vld [vmem:[%s2951 + $0x40] sm:$0xff]
  %v3021 = vld [vmem:[%s2951 + $0x50] sm:$0xff]
  %v3022 = vld [vmem:[%s2951 + $0x60] sm:$0xff]
  %v3023 = vld [vmem:[%s2951 + $0x70] sm:$0xff]
  %v3024 = vld [vmem:[%s2951 + $0xa0] sm:$0xff]
  %v3025 = vld [vmem:[%s2951 + $0xb0] sm:$0xff]
  %v3026 = vld [vmem:[%s2951 + $0xc0] sm:$0xff]
  %v3027 = vld [vmem:[%s2951 + $0xd0] sm:$0xff]
  %v3028 = vld [vmem:[%s2951 + $0xe0] sm:$0xff]
  %v3029 = vld [vmem:[%s2951 + $0xf0] sm:$0xff]
  %v3030 = vld [vmem:[%s2951 + $0x100] sm:$0xff]
  %v3031 = vld [vmem:[%s2951 + $0x110] sm:$0xff]
  %v3032 = vld [vmem:[%s2951 + $0x1] sm:$0xff]
  %v3033 = vld [vmem:[%s2951 + $0x11] sm:$0xff]
  %v3034 = vld [vmem:[%s2951 + $0x21] sm:$0xff]
  %v3035 = vld [vmem:[%s2951 + $0x31] sm:$0xff]
  %v3036 = vld [vmem:[%s2951 + $0x41] sm:$0xff]
  %v3037 = vld [vmem:[%s2951 + $0x51] sm:$0xff]
  %v3038 = vld [vmem:[%s2951 + $0x61] sm:$0xff]
  %v3039 = vld [vmem:[%s2951 + $0x71] sm:$0xff]
  %v3040 = vld [vmem:[%s2951 + $0xa1] sm:$0xff]
  %v3041 = vld [vmem:[%s2951 + $0xb1] sm:$0xff]
  %v3042 = vld [vmem:[%s2951 + $0xc1] sm:$0xff]
  %v3043 = vld [vmem:[%s2951 + $0xd1] sm:$0xff]
  %v3044 = vld [vmem:[%s2951 + $0xe1] sm:$0xff]
  %v3045 = vld [vmem:[%s2951 + $0xf1] sm:$0xff]
  %v3046 = vld [vmem:[%s2951 + $0x101] sm:$0xff]
  %v3047 = vld [vmem:[%s2951 + $0x111] sm:$0xff]
  %v3048 = vld [vmem:[%s2951 + $0x2] sm:$0xff]
  %v3049 = vld [vmem:[%s2951 + $0x12] sm:$0xff]
  %v3050 = vld [vmem:[%s2951 + $0x22] sm:$0xff]
  %v3051 = vld [vmem:[%s2951 + $0x32] sm:$0xff]
  %v3052 = vld [vmem:[%s2951 + $0x42] sm:$0xff]
  %v3053 = vld [vmem:[%s2951 + $0x52] sm:$0xff]
  %v3054 = vld [vmem:[%s2951 + $0x62] sm:$0xff]
  %v3055 = vld [vmem:[%s2951 + $0x72] sm:$0xff]
  %v3056 = vld [vmem:[%s2951 + $0xa2] sm:$0xff]
  %v3057 = vld [vmem:[%s2951 + $0xb2] sm:$0xff]
  %v3058 = vld [vmem:[%s2951 + $0xc2] sm:$0xff]
  %v3059 = vld [vmem:[%s2951 + $0xd2] sm:$0xff]
  %v3060 = vld [vmem:[%s2951 + $0xe2] sm:$0xff]
  %v3061 = vld [vmem:[%s2951 + $0xf2] sm:$0xff]
  %v3062 = vld [vmem:[%s2951 + $0x102] sm:$0xff]
  %v3063 = vld [vmem:[%s2951 + $0x112] sm:$0xff]
  %s3064 = scalar_lea.vmem [#allocation4], 32
  %v3065 = vld [vmem:[%s3064] sm:$0xff]
  %v3066 = vld [vmem:[%s3064 + $0x10] sm:$0xff]
  %v3067 = vld [vmem:[%s3064 + $0x20] sm:$0xff]
  %v3068 = vld [vmem:[%s3064 + $0x30] sm:$0xff]
  %v3069 = vld [vmem:[%s3064 + $0x40] sm:$0xff]
  %v3070 = vld [vmem:[%s3064 + $0x50] sm:$0xff]
  %v3071 = vld [vmem:[%s3064 + $0x60] sm:$0xff]
  %v3072 = vld [vmem:[%s3064 + $0x70] sm:$0xff]
  %v3073 = vld [vmem:[%s3064 + $0xa0] sm:$0xff]
  %v3074 = vld [vmem:[%s3064 + $0xb0] sm:$0xff]
  %v3075 = vld [vmem:[%s3064 + $0xc0] sm:$0xff]
  %v3076 = vld [vmem:[%s3064 + $0xd0] sm:$0xff]
  %v3077 = vld [vmem:[%s3064 + $0xe0] sm:$0xff]
  %v3078 = vld [vmem:[%s3064 + $0xf0] sm:$0xff]
  %v3079 = vld [vmem:[%s3064 + $0x100] sm:$0xff]
  %v3080 = vld [vmem:[%s3064 + $0x110] sm:$0xff]
  %v3081 = vld [vmem:[%s3064 + $0x1] sm:$0xff]
  %v3082 = vld [vmem:[%s3064 + $0x11] sm:$0xff]
  %v3083 = vld [vmem:[%s3064 + $0x21] sm:$0xff]
  %v3084 = vld [vmem:[%s3064 + $0x31] sm:$0xff]
  %v3085 = vld [vmem:[%s3064 + $0x41] sm:$0xff]
  %v3086 = vld [vmem:[%s3064 + $0x51] sm:$0xff]
  %v3087 = vld [vmem:[%s3064 + $0x61] sm:$0xff]
  %v3088 = vld [vmem:[%s3064 + $0x71] sm:$0xff]
  %v3089 = vld [vmem:[%s3064 + $0xa1] sm:$0xff]
  %v3090 = vld [vmem:[%s3064 + $0xb1] sm:$0xff]
  %v3091 = vld [vmem:[%s3064 + $0xc1] sm:$0xff]
  %v3092 = vld [vmem:[%s3064 + $0xd1] sm:$0xff]
  %v3093 = vld [vmem:[%s3064 + $0xe1] sm:$0xff]
  %v3094 = vld [vmem:[%s3064 + $0xf1] sm:$0xff]
  %v3095 = vld [vmem:[%s3064 + $0x101] sm:$0xff]
  %v3096 = vld [vmem:[%s3064 + $0x111] sm:$0xff]
  %v3097 = vld [vmem:[%s3064 + $0x2] sm:$0xff]
  %v3098 = vld [vmem:[%s3064 + $0x12] sm:$0xff]
  %v3099 = vld [vmem:[%s3064 + $0x22] sm:$0xff]
  %v3100 = vld [vmem:[%s3064 + $0x32] sm:$0xff]
  %v3101 = vld [vmem:[%s3064 + $0x42] sm:$0xff]
  %v3102 = vld [vmem:[%s3064 + $0x52] sm:$0xff]
  %v3103 = vld [vmem:[%s3064 + $0x62] sm:$0xff]
  %v3104 = vld [vmem:[%s3064 + $0x72] sm:$0xff]
  %v3105 = vld [vmem:[%s3064 + $0xa2] sm:$0xff]
  %v3106 = vld [vmem:[%s3064 + $0xb2] sm:$0xff]
  %v3107 = vld [vmem:[%s3064 + $0xc2] sm:$0xff]
  %v3108 = vld [vmem:[%s3064 + $0xd2] sm:$0xff]
  %v3109 = vld [vmem:[%s3064 + $0xe2] sm:$0xff]
  %v3110 = vld [vmem:[%s3064 + $0xf2] sm:$0xff]
  %v3111 = vld [vmem:[%s3064 + $0x102] sm:$0xff]
  %v3112 = vld [vmem:[%s3064 + $0x112] sm:$0xff]
  %3129 = vrot.lane.b32.xlu0 %v2984, 32
  %v3130 = vpop.permute.xlu0 %3129
  %3131 = vrot.lane.b32.xlu0 %v2985, 32
  %v3132 = vpop.permute.xlu0 %3131
  %3133 = vrot.lane.b32.xlu0 %v2986, 32
  %v3134 = vpop.permute.xlu0 %3133
  %3135 = vrot.lane.b32.xlu0 %v2987, 32
  %v3136 = vpop.permute.xlu0 %3135
  %3137 = vrot.lane.b32.xlu0 %v2988, 32
  %v3138 = vpop.permute.xlu0 %3137
  %3139 = vrot.lane.b32.xlu0 %v2989, 32
  %v3140 = vpop.permute.xlu0 %3139
  %3141 = vrot.lane.b32.xlu0 %v2990, 32
  %v3142 = vpop.permute.xlu0 %3141
  %3143 = vrot.lane.b32.xlu0 %v2991, 32
  %v3144 = vpop.permute.xlu0 %3143
  %3145 = vrot.lane.b32.xlu0 %v2992, 32
  %v3146 = vpop.permute.xlu0 %3145
  %3147 = vrot.lane.b32.xlu0 %v2993, 32
  %v3148 = vpop.permute.xlu0 %3147
  %3149 = vrot.lane.b32.xlu0 %v2994, 32
  %v3150 = vpop.permute.xlu0 %3149
  %3151 = vrot.lane.b32.xlu0 %v2995, 32
  %v3152 = vpop.permute.xlu0 %3151
  %3153 = vrot.lane.b32.xlu0 %v2996, 32
  %v3154 = vpop.permute.xlu0 %3153
  %3155 = vrot.lane.b32.xlu0 %v2997, 32
  %v3156 = vpop.permute.xlu0 %3155
  %3157 = vrot.lane.b32.xlu0 %v2998, 32
  %v3158 = vpop.permute.xlu0 %3157
  %3159 = vrot.lane.b32.xlu0 %v2999, 32
  %v3160 = vpop.permute.xlu0 %3159
  %3193 = vrot.lane.b32.xlu0 %v3000, 64
  %v3194 = vpop.permute.xlu0 %3193
  %3195 = vrot.lane.b32.xlu0 %v3001, 64
  %v3196 = vpop.permute.xlu0 %3195
  %3197 = vrot.lane.b32.xlu0 %v3002, 64
  %v3198 = vpop.permute.xlu0 %3197
  %3199 = vrot.lane.b32.xlu0 %v3003, 64
  %v3200 = vpop.permute.xlu0 %3199
  %3201 = vrot.lane.b32.xlu0 %v3004, 64
  %v3202 = vpop.permute.xlu0 %3201
  %3203 = vrot.lane.b32.xlu0 %v3005, 64
  %v3204 = vpop.permute.xlu0 %3203
  %3205 = vrot.lane.b32.xlu0 %v3006, 64
  %v3206 = vpop.permute.xlu0 %3205
  %3207 = vrot.lane.b32.xlu0 %v3007, 64
  %v3208 = vpop.permute.xlu0 %3207
  %3209 = vrot.lane.b32.xlu0 %v3008, 64
  %v3210 = vpop.permute.xlu0 %3209
  %3211 = vrot.lane.b32.xlu0 %v3009, 64
  %v3212 = vpop.permute.xlu0 %3211
  %3213 = vrot.lane.b32.xlu0 %v3010, 64
  %v3214 = vpop.permute.xlu0 %3213
  %3215 = vrot.lane.b32.xlu0 %v3011, 64
  %v3216 = vpop.permute.xlu0 %3215
  %3217 = vrot.lane.b32.xlu0 %v3012, 64
  %v3218 = vpop.permute.xlu0 %3217
  %3219 = vrot.lane.b32.xlu0 %v3013, 64
  %v3220 = vpop.permute.xlu0 %3219
  %3221 = vrot.lane.b32.xlu0 %v3014, 64
  %v3222 = vpop.permute.xlu0 %3221
  %3223 = vrot.lane.b32.xlu0 %v3015, 64
  %v3224 = vpop.permute.xlu0 %3223
  %3257 = vrot.lane.b32.xlu0 %v3016, 96
  %v3258 = vpop.permute.xlu0 %3257
  %3259 = vrot.lane.b32.xlu0 %v3017, 96
  %v3260 = vpop.permute.xlu0 %3259
  %3261 = vrot.lane.b32.xlu0 %v3018, 96
  %v3262 = vpop.permute.xlu0 %3261
  %3263 = vrot.lane.b32.xlu0 %v3019, 96
  %v3264 = vpop.permute.xlu0 %3263
  %3265 = vrot.lane.b32.xlu0 %v3020, 96
  %v3266 = vpop.permute.xlu0 %3265
  %3267 = vrot.lane.b32.xlu0 %v3021, 96
  %v3268 = vpop.permute.xlu0 %3267
  %3269 = vrot.lane.b32.xlu0 %v3022, 96
  %v3270 = vpop.permute.xlu0 %3269
  %3271 = vrot.lane.b32.xlu0 %v3023, 96
  %v3272 = vpop.permute.xlu0 %3271
  %3273 = vrot.lane.b32.xlu0 %v3024, 96
  %v3274 = vpop.permute.xlu0 %3273
  %3275 = vrot.lane.b32.xlu0 %v3025, 96
  %v3276 = vpop.permute.xlu0 %3275
  %3277 = vrot.lane.b32.xlu0 %v3026, 96
  %v3278 = vpop.permute.xlu0 %3277
  %3279 = vrot.lane.b32.xlu0 %v3027, 96
  %v3280 = vpop.permute.xlu0 %3279
  %3281 = vrot.lane.b32.xlu0 %v3028, 96
  %v3282 = vpop.permute.xlu0 %3281
  %3283 = vrot.lane.b32.xlu0 %v3029, 96
  %v3284 = vpop.permute.xlu0 %3283
  %3285 = vrot.lane.b32.xlu0 %v3030, 96
  %v3286 = vpop.permute.xlu0 %3285
  %3287 = vrot.lane.b32.xlu0 %v3031, 96
  %v3288 = vpop.permute.xlu0 %3287
  %3321 = vrot.lane.b32.xlu0 %v3048, 32
  %v3322 = vpop.permute.xlu0 %3321
  %3323 = vrot.lane.b32.xlu0 %v3049, 32
  %v3324 = vpop.permute.xlu0 %3323
  %3325 = vrot.lane.b32.xlu0 %v3050, 32
  %v3326 = vpop.permute.xlu0 %3325
  %3327 = vrot.lane.b32.xlu0 %v3051, 32
  %v3328 = vpop.permute.xlu0 %3327
  %3329 = vrot.lane.b32.xlu0 %v3052, 32
  %v3330 = vpop.permute.xlu0 %3329
  %3331 = vrot.lane.b32.xlu0 %v3053, 32
  %v3332 = vpop.permute.xlu0 %3331
  %3333 = vrot.lane.b32.xlu0 %v3054, 32
  %v3334 = vpop.permute.xlu0 %3333
  %3335 = vrot.lane.b32.xlu0 %v3055, 32
  %v3336 = vpop.permute.xlu0 %3335
  %3337 = vrot.lane.b32.xlu0 %v3056, 32
  %v3338 = vpop.permute.xlu0 %3337
  %3339 = vrot.lane.b32.xlu0 %v3057, 32
  %v3340 = vpop.permute.xlu0 %3339
  %3341 = vrot.lane.b32.xlu0 %v3058, 32
  %v3342 = vpop.permute.xlu0 %3341
  %3343 = vrot.lane.b32.xlu0 %v3059, 32
  %v3344 = vpop.permute.xlu0 %3343
  %3345 = vrot.lane.b32.xlu0 %v3060, 32
  %v3346 = vpop.permute.xlu0 %3345
  %3347 = vrot.lane.b32.xlu0 %v3061, 32
  %v3348 = vpop.permute.xlu0 %3347
  %3349 = vrot.lane.b32.xlu0 %v3062, 32
  %v3350 = vpop.permute.xlu0 %3349
  %3351 = vrot.lane.b32.xlu0 %v3063, 32
  %v3352 = vpop.permute.xlu0 %3351
  %3385 = vrot.lane.b32.xlu0 %v3065, 64
  %v3386 = vpop.permute.xlu0 %3385
  %3387 = vrot.lane.b32.xlu0 %v3066, 64
  %v3388 = vpop.permute.xlu0 %3387
  %3389 = vrot.lane.b32.xlu0 %v3067, 64
  %v3390 = vpop.permute.xlu0 %3389
  %3391 = vrot.lane.b32.xlu0 %v3068, 64
  %v3392 = vpop.permute.xlu0 %3391
  %3393 = vrot.lane.b32.xlu0 %v3069, 64
  %v3394 = vpop.permute.xlu0 %3393
  %3395 = vrot.lane.b32.xlu0 %v3070, 64
  %v3396 = vpop.permute.xlu0 %3395
  %3397 = vrot.lane.b32.xlu0 %v3071, 64
  %v3398 = vpop.permute.xlu0 %3397
  %3399 = vrot.lane.b32.xlu0 %v3072, 64
  %v3400 = vpop.permute.xlu0 %3399
  %3401 = vrot.lane.b32.xlu0 %v3073, 64
  %v3402 = vpop.permute.xlu0 %3401
  %3403 = vrot.lane.b32.xlu0 %v3074, 64
  %v3404 = vpop.permute.xlu0 %3403
  %3405 = vrot.lane.b32.xlu0 %v3075, 64
  %v3406 = vpop.permute.xlu0 %3405
  %3407 = vrot.lane.b32.xlu0 %v3076, 64
  %v3408 = vpop.permute.xlu0 %3407
  %3409 = vrot.lane.b32.xlu0 %v3077, 64
  %v3410 = vpop.permute.xlu0 %3409
  %3411 = vrot.lane.b32.xlu0 %v3078, 64
  %v3412 = vpop.permute.xlu0 %3411
  %3413 = vrot.lane.b32.xlu0 %v3079, 64
  %v3414 = vpop.permute.xlu0 %3413
  %3415 = vrot.lane.b32.xlu0 %v3080, 64
  %v3416 = vpop.permute.xlu0 %3415
  %3449 = vrot.lane.b32.xlu0 %v3081, 96
  %v3450 = vpop.permute.xlu0 %3449
  %3451 = vrot.lane.b32.xlu0 %v3082, 96
  %v3452 = vpop.permute.xlu0 %3451
  %3453 = vrot.lane.b32.xlu0 %v3083, 96
  %v3454 = vpop.permute.xlu0 %3453
  %3455 = vrot.lane.b32.xlu0 %v3084, 96
  %v3456 = vpop.permute.xlu0 %3455
  %3457 = vrot.lane.b32.xlu0 %v3085, 96
  %v3458 = vpop.permute.xlu0 %3457
  %3459 = vrot.lane.b32.xlu0 %v3086, 96
  %v3460 = vpop.permute.xlu0 %3459
  %3461 = vrot.lane.b32.xlu0 %v3087, 96
  %v3462 = vpop.permute.xlu0 %3461
  %3463 = vrot.lane.b32.xlu0 %v3088, 96
  %v3464 = vpop.permute.xlu0 %3463
  %3465 = vrot.lane.b32.xlu0 %v3089, 96
  %v3466 = vpop.permute.xlu0 %3465
  %3467 = vrot.lane.b32.xlu0 %v3090, 96
  %v3468 = vpop.permute.xlu0 %3467
  %3469 = vrot.lane.b32.xlu0 %v3091, 96
  %v3470 = vpop.permute.xlu0 %3469
  %3471 = vrot.lane.b32.xlu0 %v3092, 96
  %v3472 = vpop.permute.xlu0 %3471
  %3473 = vrot.lane.b32.xlu0 %v3093, 96
  %v3474 = vpop.permute.xlu0 %3473
  %3475 = vrot.lane.b32.xlu0 %v3094, 96
  %v3476 = vpop.permute.xlu0 %3475
  %3477 = vrot.lane.b32.xlu0 %v3095, 96
  %v3478 = vpop.permute.xlu0 %3477
  %3479 = vrot.lane.b32.xlu0 %v3096, 96
  %v3480 = vpop.permute.xlu0 %3479
  %v3497 = vsel %vm73, %v2968, %v3130
  %v3498 = vsel %vm73, %v2969, %v3132
  %v3499 = vsel %vm73, %v2970, %v3134
  %v3500 = vsel %vm73, %v2971, %v3136
  %v3501 = vsel %vm73, %v2972, %v3138
  %v3502 = vsel %vm73, %v2973, %v3140
  %v3503 = vsel %vm73, %v2974, %v3142
  %v3504 = vsel %vm73, %v2975, %v3144
  %v3505 = vsel %vm73, %v2976, %v3146
  %v3506 = vsel %vm73, %v2977, %v3148
  %v3507 = vsel %vm73, %v2978, %v3150
  %v3508 = vsel %vm73, %v2979, %v3152
  %v3509 = vsel %vm73, %v2980, %v3154
  %v3510 = vsel %vm73, %v2981, %v3156
  %v3511 = vsel %vm73, %v2982, %v3158
  %v3512 = vsel %vm73, %v2983, %v3160
  %v3513 = vsel %vm1667, %v3497, %v3194
  %v3514 = vsel %vm1667, %v3498, %v3196
  %v3515 = vsel %vm1667, %v3499, %v3198
  %v3516 = vsel %vm1667, %v3500, %v3200
  %v3517 = vsel %vm1667, %v3501, %v3202
  %v3518 = vsel %vm1667, %v3502, %v3204
  %v3519 = vsel %vm1667, %v3503, %v3206
  %v3520 = vsel %vm1667, %v3504, %v3208
  %v3521 = vsel %vm1667, %v3505, %v3210
  %v3522 = vsel %vm1667, %v3506, %v3212
  %v3523 = vsel %vm1667, %v3507, %v3214
  %v3524 = vsel %vm1667, %v3508, %v3216
  %v3525 = vsel %vm1667, %v3509, %v3218
  %v3526 = vsel %vm1667, %v3510, %v3220
  %v3527 = vsel %vm1667, %v3511, %v3222
  %v3528 = vsel %vm1667, %v3512, %v3224
  %v3529 = vsel %vm2642, %v3513, %v3258
  %v3530 = vsel %vm2642, %v3514, %v3260
  %v3531 = vsel %vm2642, %v3515, %v3262
  %v3532 = vsel %vm2642, %v3516, %v3264
  %v3533 = vsel %vm2642, %v3517, %v3266
  %v3534 = vsel %vm2642, %v3518, %v3268
  %v3535 = vsel %vm2642, %v3519, %v3270
  %v3536 = vsel %vm2642, %v3520, %v3272
  %v3537 = vsel %vm2642, %v3521, %v3274
  %v3538 = vsel %vm2642, %v3522, %v3276
  %v3539 = vsel %vm2642, %v3523, %v3278
  %v3540 = vsel %vm2642, %v3524, %v3280
  %v3541 = vsel %vm2642, %v3525, %v3282
  %v3542 = vsel %vm2642, %v3526, %v3284
  %v3543 = vsel %vm2642, %v3527, %v3286
  %v3544 = vsel %vm2642, %v3528, %v3288
  %v3545 = vsel %vm73, %v3032, %v3322
  %v3546 = vsel %vm73, %v3033, %v3324
  %v3547 = vsel %vm73, %v3034, %v3326
  %v3548 = vsel %vm73, %v3035, %v3328
  %v3549 = vsel %vm73, %v3036, %v3330
  %v3550 = vsel %vm73, %v3037, %v3332
  %v3551 = vsel %vm73, %v3038, %v3334
  %v3552 = vsel %vm73, %v3039, %v3336
  %v3553 = vsel %vm73, %v3040, %v3338
  %v3554 = vsel %vm73, %v3041, %v3340
  %v3555 = vsel %vm73, %v3042, %v3342
  %v3556 = vsel %vm73, %v3043, %v3344
  %v3557 = vsel %vm73, %v3044, %v3346
  %v3558 = vsel %vm73, %v3045, %v3348
  %v3559 = vsel %vm73, %v3046, %v3350
  %v3560 = vsel %vm73, %v3047, %v3352
  %v3561 = vsel %vm1667, %v3545, %v3386
  %v3562 = vsel %vm1667, %v3546, %v3388
  %v3563 = vsel %vm1667, %v3547, %v3390
  %v3564 = vsel %vm1667, %v3548, %v3392
  %v3565 = vsel %vm1667, %v3549, %v3394
  %v3566 = vsel %vm1667, %v3550, %v3396
  %v3567 = vsel %vm1667, %v3551, %v3398
  %v3568 = vsel %vm1667, %v3552, %v3400
  %v3569 = vsel %vm1667, %v3553, %v3402
  %v3570 = vsel %vm1667, %v3554, %v3404
  %v3571 = vsel %vm1667, %v3555, %v3406
  %v3572 = vsel %vm1667, %v3556, %v3408
  %v3573 = vsel %vm1667, %v3557, %v3410
  %v3574 = vsel %vm1667, %v3558, %v3412
  %v3575 = vsel %vm1667, %v3559, %v3414
  %v3576 = vsel %vm1667, %v3560, %v3416
  %v3577 = vsel %vm2642, %v3561, %v3450
  %v3578 = vsel %vm2642, %v3562, %v3452
  %v3579 = vsel %vm2642, %v3563, %v3454
  %v3580 = vsel %vm2642, %v3564, %v3456
  %v3581 = vsel %vm2642, %v3565, %v3458
  %v3582 = vsel %vm2642, %v3566, %v3460
  %v3583 = vsel %vm2642, %v3567, %v3462
  %v3584 = vsel %vm2642, %v3568, %v3464
  %v3585 = vsel %vm2642, %v3569, %v3466
  %v3586 = vsel %vm2642, %v3570, %v3468
  %v3587 = vsel %vm2642, %v3571, %v3470
  %v3588 = vsel %vm2642, %v3572, %v3472
  %v3589 = vsel %vm2642, %v3573, %v3474
  %v3590 = vsel %vm2642, %v3574, %v3476
  %v3591 = vsel %vm2642, %v3575, %v3478
  %v3592 = vsel %vm2642, %v3576, %v3480
  %v3593 = vld [vmem:[%s7] sm:$0xff]
  %v3594 = vld [vmem:[%s7 + $0x8] sm:$0xff]
  %v3595 = vld [vmem:[%s7 + $0x10] sm:$0xff]
  %v3596 = vld [vmem:[%s7 + $0x18] sm:$0xff]
  %v3597 = vld [vmem:[%s7 + $0x20] sm:$0xff]
  %v3598 = vld [vmem:[%s7 + $0x28] sm:$0xff]
  %v3599 = vld [vmem:[%s7 + $0x30] sm:$0xff]
  %v3600 = vld [vmem:[%s7 + $0x38] sm:$0xff]
  %v3601 = vld [vmem:[%s7 + $0x40] sm:$0xff]
  %v3602 = vld [vmem:[%s7 + $0x48] sm:$0xff]
  %v3603 = vld [vmem:[%s7 + $0x50] sm:$0xff]
  %v3604 = vld [vmem:[%s7 + $0x58] sm:$0xff]
  %v3605 = vld [vmem:[%s7 + $0x60] sm:$0xff]
  %v3606 = vld [vmem:[%s7 + $0x68] sm:$0xff]
  %v3607 = vld [vmem:[%s7 + $0x70] sm:$0xff]
  %v3608 = vld [vmem:[%s7 + $0x78] sm:$0xff]
  %v3609 = vld [vmem:[%s7 + $0x80] sm:$0xff]
  %v3610 = vld [vmem:[%s7 + $0x88] sm:$0xff]
  %v3611 = vld [vmem:[%s7 + $0x90] sm:$0xff]
  %v3612 = vld [vmem:[%s7 + $0x98] sm:$0xff]
  %v3613 = vld [vmem:[%s7 + $0xa0] sm:$0xff]
  %v3614 = vld [vmem:[%s7 + $0xa8] sm:$0xff]
  %v3615 = vld [vmem:[%s7 + $0xb0] sm:$0xff]
  %v3616 = vld [vmem:[%s7 + $0xb8] sm:$0xff]
  %v3617 = vld [vmem:[%s7 + $0xc0] sm:$0xff]
  %v3618 = vld [vmem:[%s7 + $0xc8] sm:$0xff]
  %v3619 = vld [vmem:[%s7 + $0xd0] sm:$0xff]
  %v3620 = vld [vmem:[%s7 + $0xd8] sm:$0xff]
  %v3621 = vld [vmem:[%s7 + $0xe0] sm:$0xff]
  %v3622 = vld [vmem:[%s7 + $0xe8] sm:$0xff]
  %v3623 = vld [vmem:[%s7 + $0xf0] sm:$0xff]
  %v3624 = vld [vmem:[%s7 + $0xf8] sm:$0xff]
  %v3625 = vld [vmem:[%s7 + $0x100] sm:$0xff]
  %v3626 = vld [vmem:[%s7 + $0x108] sm:$0xff]
  %v3627 = vld [vmem:[%s7 + $0x110] sm:$0xff]
  %v3628 = vld [vmem:[%s7 + $0x118] sm:$0xff]
  %v3629 = vld [vmem:[#allocation5] sm:$0x1]
  %v3631 = vlaneseq
  %v3632 = vshrl.u32 %v3631, 7
  %v3633 = vsub.s32 0, %v3632
  %v3634 = vrot.slane %v3629, %v3633
  %v3637 = vsel %vm73, %v3097, 0
  %v3640 = vsel %vm73, %v3098, 0
  %v3643 = vsel %vm73, %v3099, 0
  %v3646 = vsel %vm73, %v3100, 0
  %v3649 = vsel %vm73, %v3101, 0
  %v3652 = vsel %vm73, %v3102, 0
  %v3655 = vsel %vm73, %v3103, 0
  %v3658 = vsel %vm73, %v3104, 0
  %v3661 = vsel %vm73, %v3105, 0
  %v3664 = vsel %vm73, %v3106, 0
  %v3667 = vsel %vm73, %v3107, 0
  %v3670 = vsel %vm73, %v3108, 0
  %v3673 = vsel %vm73, %v3109, 0
  %v3676 = vsel %vm73, %v3110, 0
  %v3679 = vsel %vm73, %v3111, 0
  %v3682 = vsel %vm73, %v3112, 0
  %3684 = vmatprep.subr.mxu0 0.0
  %3685 = vmatpush1.msra.mxu0 %v3593
  %3686 = vmatprep.subr.mxu0 0.0
  %3687 = vmatpush1.msra.mxu0 %v3594
  %3688 = vmatprep.subr.mxu0 0.0
  %3689 = vmatpush1.msra.mxu0 %v3595
  %3690 = vmatprep.subr.mxu0 0.0
  %3691 = vmatpush1.msra.mxu0 %v3596
  %3692 = vmatprep.subr.mxu0 0.0
  %3693 = vmatpush1.msra.mxu0 %v3597
  %3694 = vmatprep.subr.mxu0 0.0
  %3695 = vmatpush1.msra.mxu0 %v3598
  %3696 = vmatprep.subr.mxu0 0.0
  %3697 = vmatpush1.msra.mxu0 %v3599
  %3698 = vmatprep.subr.mxu0 0.0
  %3699 = vmatpush1.msra.mxu0 %v3600
  %3700 = vmatprep.subr.mxu0 0.0
  %3701 = vmatpush1.msra.mxu0 %v3601
  %3702 = vmatprep.subr.mxu0 0.0
  %3703 = vmatpush1.msra.mxu0 %v3602
  %3704 = vmatprep.subr.mxu0 0.0
  %3705 = vmatpush1.msra.mxu0 %v3603
  %3706 = vmatprep.subr.mxu0 0.0
  %3707 = vmatpush1.msra.mxu0 %v3604
  %3708 = vmatprep.subr.mxu0 0.0
  %3709 = vmatpush1.msra.mxu0 %v3605
  %3710 = vmatprep.subr.mxu0 0.0
  %3711 = vmatpush1.msra.mxu0 %v3606
  %3712 = vmatprep.subr.mxu0 0.0
  %3713 = vmatpush1.msra.mxu0 %v3607
  %3714 = vmatprep.subr.mxu0 0.0
  %3715 = vmatpush1.msra.mxu0 %v3608
  %3716 = vmatprep.subr.mxu0 0.0
  %3717 = vmatpush1.msra.mxu0 %v3609
  %3718 = vmatprep.subr.mxu0 0.0
  %3719 = vmatpush1.msra.mxu0 %v3610
  %3720 = vmatprep.subr.mxu0 0.0
  %3721 = vmatpush1.msra.mxu0 %v3611
  %3722 = vmatprep.subr.mxu0 0.0
  %3723 = vmatpush1.msra.mxu0 %v3612
  %3724 = vmatprep.subr.mxu0 0.0
  %3725 = vmatpush1.msra.mxu0 %v3613
  %3726 = vmatprep.subr.mxu0 0.0
  %3727 = vmatpush1.msra.mxu0 %v3614
  %3728 = vmatprep.subr.mxu0 0.0
  %3729 = vmatpush1.msra.mxu0 %v3615
  %3730 = vmatprep.subr.mxu0 0.0
  %3731 = vmatpush1.msra.mxu0 %v3616
  %3732 = vmatprep.subr.mxu0 0.0
  %3733 = vmatpush1.msra.mxu0 %v3617
  %3734 = vmatprep.subr.mxu0 0.0
  %3735 = vmatpush1.msra.mxu0 %v3618
  %3736 = vmatprep.subr.mxu0 0.0
  %3737 = vmatpush1.msra.mxu0 %v3619
  %3738 = vmatprep.subr.mxu0 0.0
  %3739 = vmatpush1.msra.mxu0 %v3620
  %3740 = vmatprep.subr.mxu0 0.0
  %3741 = vmatpush1.msra.mxu0 %v3621
  %3742 = vmatprep.subr.mxu0 0.0
  %3743 = vmatpush1.msra.mxu0 %v3622
  %3744 = vmatprep.subr.mxu0 0.0
  %3745 = vmatpush1.msra.mxu0 %v3623
  %3746 = vmatprep.subr.mxu0 0.0
  %3747 = vmatpush1.msra.mxu0 %v3624
  %3748 = vmatprep.mubr.f32.mxu0 %v3577
  %3749 = vmatmul.mubr.f32.gmra.mrb[0].mxu0 %v3529
  %v3750 = vpop.f32.mrb[0].mxu0
  %v3751 = vadd.f32 %v3634, %v3750
  %v3752 = vpop.f32.mrb[0].mxu0
  %3753 = vmatprep.mubr.f32.mxu0 %v3578
  %3754 = vmatmul.mubr.f32.gmra.mrb[0].mxu0 %v3530
  %v3755 = vpop.f32.mrb[0].mxu0
  %v3756 = vadd.f32 %v3634, %v3755
  %v3757 = vpop.f32.mrb[0].mxu0
  %3758 = vmatprep.mubr.f32.mxu0 %v3579
  %3759 = vmatmul.mubr.f32.gmra.mrb[0].mxu0 %v3531
  %v3760 = vpop.f32.mrb[0].mxu0
  %v3761 = vadd.f32 %v3634, %v3760
  %v3762 = vpop.f32.mrb[0].mxu0
  %3763 = vmatprep.mubr.f32.mxu0 %v3580
  %3764 = vmatmul.mubr.f32.gmra.mrb[0].mxu0 %v3532
  %v3765 = vpop.f32.mrb[0].mxu0
  %v3766 = vadd.f32 %v3634, %v3765
  %v3767 = vpop.f32.mrb[0].mxu0
  %3768 = vmatprep.mubr.f32.mxu0 %v3581
  %3769 = vmatmul.mubr.f32.gmra.mrb[0].mxu0 %v3533
  %v3770 = vpop.f32.mrb[0].mxu0
  %v3771 = vadd.f32 %v3634, %v3770
  %v3772 = vpop.f32.mrb[0].mxu0
  %3773 = vmatprep.mubr.f32.mxu0 %v3582
  %3774 = vmatmul.mubr.f32.gmra.mrb[0].mxu0 %v3534
  %v3775 = vpop.f32.mrb[0].mxu0
  %v3776 = vadd.f32 %v3634, %v3775
  %v3777 = vpop.f32.mrb[0].mxu0
  %3778 = vmatprep.mubr.f32.mxu0 %v3583
  %3779 = vmatmul.mubr.f32.gmra.mrb[0].mxu0 %v3535
  %v3780 = vpop.f32.mrb[0].mxu0
  %v3781 = vadd.f32 %v3634, %v3780
  %v3782 = vpop.f32.mrb[0].mxu0
  %3783 = vmatprep.mubr.f32.mxu0 %v3584
  %3784 = vmatmul.mubr.f32.gmra.mrb[0].mxu0 %v3536
  %v3785 = vpop.f32.mrb[0].mxu0
  %v3786 = vadd.f32 %v3634, %v3785
  %v3787 = vpop.f32.mrb[0].mxu0
  %3788 = vmatprep.mubr.f32.mxu0 %v3585
  %3789 = vmatmul.mubr.f32.gmra.mrb[0].mxu0 %v3537
  %v3790 = vpop.f32.mrb[0].mxu0
  %v3791 = vadd.f32 %v3634, %v3790
  %v3792 = vpop.f32.mrb[0].mxu0
  %3793 = vmatprep.mubr.f32.mxu0 %v3586
  %3794 = vmatmul.mubr.f32.gmra.mrb[0].mxu0 %v3538
  %v3795 = vpop.f32.mrb[0].mxu0
  %v3796 = vadd.f32 %v3634, %v3795
  %v3797 = vpop.f32.mrb[0].mxu0
  %3798 = vmatprep.mubr.f32.mxu0 %v3587
  %3799 = vmatmul.mubr.f32.gmra.mrb[0].mxu0 %v3539
  %v3800 = vpop.f32.mrb[0].mxu0
  %v3801 = vadd.f32 %v3634, %v3800
  %v3802 = vpop.f32.mrb[0].mxu0
  %3803 = vmatprep.mubr.f32.mxu0 %v3588
  %3804 = vmatmul.mubr.f32.gmra.mrb[0].mxu0 %v3540
  %v3805 = vpop.f32.mrb[0].mxu0
  %v3806 = vadd.f32 %v3634, %v3805
  %v3807 = vpop.f32.mrb[0].mxu0
  %3808 = vmatprep.mubr.f32.mxu0 %v3589
  %3809 = vmatmul.mubr.f32.gmra.mrb[0].mxu0 %v3541
  %v3810 = vpop.f32.mrb[0].mxu0
  %v3811 = vadd.f32 %v3634, %v3810
  %v3812 = vpop.f32.mrb[0].mxu0
  %3813 = vmatprep.mubr.f32.mxu0 %v3590
  %3814 = vmatmul.mubr.f32.gmra.mrb[0].mxu0 %v3542
  %v3815 = vpop.f32.mrb[0].mxu0
  %v3816 = vadd.f32 %v3634, %v3815
  %v3817 = vpop.f32.mrb[0].mxu0
  %3818 = vmatprep.mubr.f32.mxu0 %v3591
  %3819 = vmatmul.mubr.f32.gmra.mrb[0].mxu0 %v3543
  %v3820 = vpop.f32.mrb[0].mxu0
  %v3821 = vadd.f32 %v3634, %v3820
  %v3822 = vpop.f32.mrb[0].mxu0
  %3823 = vmatprep.mubr.f32.mxu0 %v3592
  %3824 = vmatmul.mubr.f32.gmra.mrb[0].mxu0 %v3544
  %v3825 = vpop.f32.mrb[0].mxu0
  %v3826 = vadd.f32 %v3634, %v3825
  %v3827 = vpop.f32.mrb[0].mxu0
  %3828 = vdwg.mxu0
  %3829 = vmatprep.subr.mxu0 0.0
  %3830 = vmatpush1.msra.mxu0 %v3625
  %3831 = vmatprep.subr.mxu0 0.0
  %3832 = vmatpush1.msra.mxu0 %v3626
  %3833 = vmatprep.subr.mxu0 0.0
  %3834 = vmatpush1.msra.mxu0 %v3627
  %3835 = vmatprep.subr.mxu0 0.0
  %3836 = vmatpush1.msra.mxu0 %v3628
  %3837 = vmatprep.subr.mxu0 0.0
  %3838 = vmatpush1.msra.mxu0 0.0
  %3839 = vmatprep.subr.mxu0 0.0
  %3840 = vmatpush1.msra.mxu0 0.0
  %3841 = vmatprep.subr.mxu0 0.0
  %3842 = vmatpush1.msra.mxu0 0.0
  %3843 = vmatprep.subr.mxu0 0.0
  %3844 = vmatpush1.msra.mxu0 0.0
  %3845 = vmatprep.subr.mxu0 0.0
  %3846 = vmatpush1.msra.mxu0 0.0
  %3847 = vmatprep.subr.mxu0 0.0
  %3848 = vmatpush1.msra.mxu0 0.0
  %3849 = vmatprep.subr.mxu0 0.0
  %3850 = vmatpush1.msra.mxu0 0.0
  %3851 = vmatprep.subr.mxu0 0.0
  %3852 = vmatpush1.msra.mxu0 0.0
  %3853 = vmatprep.subr.mxu0 0.0
  %3854 = vmatpush1.msra.mxu0 0.0
  %3855 = vmatprep.subr.mxu0 0.0
  %3856 = vmatpush1.msra.mxu0 0.0
  %3857 = vmatprep.subr.mxu0 0.0
  %3858 = vmatpush1.msra.mxu0 0.0
  %3859 = vmatprep.subr.mxu0 0.0
  %3860 = vmatpush1.msra.mxu0 0.0
  %3861 = vmatprep.subr.mxu0 0.0
  %3862 = vmatpush1.msra.mxu0 0.0
  %3863 = vmatprep.subr.mxu0 0.0
  %3864 = vmatpush1.msra.mxu0 0.0
  %3865 = vmatprep.subr.mxu0 0.0
  %3866 = vmatpush1.msra.mxu0 0.0
  %3867 = vmatprep.subr.mxu0 0.0
  %3868 = vmatpush1.msra.mxu0 0.0
  %3869 = vmatprep.subr.mxu0 0.0
  %3870 = vmatpush1.msra.mxu0 0.0
  %3871 = vmatprep.subr.mxu0 0.0
  %3872 = vmatpush1.msra.mxu0 0.0
  %3873 = vmatprep.subr.mxu0 0.0
  %3874 = vmatpush1.msra.mxu0 0.0
  %3875 = vmatprep.subr.mxu0 0.0
  %3876 = vmatpush1.msra.mxu0 0.0
  %3877 = vmatprep.subr.mxu0 0.0
  %3878 = vmatpush1.msra.mxu0 0.0
  %3879 = vmatprep.subr.mxu0 0.0
  %3880 = vmatpush1.msra.mxu0 0.0
  %3881 = vmatprep.subr.mxu0 0.0
  %3882 = vmatpush1.msra.mxu0 0.0
  %3883 = vmatprep.subr.mxu0 0.0
  %3884 = vmatpush1.msra.mxu0 0.0
  %3885 = vmatprep.subr.mxu0 0.0
  %3886 = vmatpush1.msra.mxu0 0.0
  %3887 = vmatprep.subr.mxu0 0.0
  %3888 = vmatpush1.msra.mxu0 0.0
  %3889 = vmatprep.subr.mxu0 0.0
  %3890 = vmatpush1.msra.mxu0 0.0
  %3891 = vmatprep.subr.mxu0 0.0
  %3892 = vmatpush1.msra.mxu0 0.0
  %3893 = vmatprep.mubr.f32.mxu0 0.0
  %3894 = vmatmul.mubr.f32.gmra.mrb[0].mxu0 %v3637
  %v3895 = vpop.f32.mrb[0].mxu0
  %v3896 = vadd.f32 %v3751, %v3895
  %v3897 = vpop.f32.mrb[0].mxu0
  %3898 = vmatprep.mubr.f32.mxu0 0.0
  %3899 = vmatmul.mubr.f32.gmra.mrb[0].mxu0 %v3640
  %v3900 = vpop.f32.mrb[0].mxu0
  %v3901 = vadd.f32 %v3756, %v3900
  %v3902 = vpop.f32.mrb[0].mxu0
  %3903 = vmatprep.mubr.f32.mxu0 0.0
  %3904 = vmatmul.mubr.f32.gmra.mrb[0].mxu0 %v3643
  %v3905 = vpop.f32.mrb[0].mxu0
  %v3906 = vadd.f32 %v3761, %v3905
  %v3907 = vpop.f32.mrb[0].mxu0
  %3908 = vmatprep.mubr.f32.mxu0 0.0
  %3909 = vmatmul.mubr.f32.gmra.mrb[0].mxu0 %v3646
  %v3910 = vpop.f32.mrb[0].mxu0
  %v3911 = vadd.f32 %v3766, %v3910
  %v3912 = vpop.f32.mrb[0].mxu0
  %3913 = vmatprep.mubr.f32.mxu0 0.0
  %3914 = vmatmul.mubr.f32.gmra.mrb[0].mxu0 %v3649
  %v3915 = vpop.f32.mrb[0].mxu0
  %v3916 = vadd.f32 %v3771, %v3915
  %v3917 = vpop.f32.mrb[0].mxu0
  %3918 = vmatprep.mubr.f32.mxu0 0.0
  %3919 = vmatmul.mubr.f32.gmra.mrb[0].mxu0 %v3652
  %v3920 = vpop.f32.mrb[0].mxu0
  %v3921 = vadd.f32 %v3776, %v3920
  %v3922 = vpop.f32.mrb[0].mxu0
  %3923 = vmatprep.mubr.f32.mxu0 0.0
  %3924 = vmatmul.mubr.f32.gmra.mrb[0].mxu0 %v3655
  %v3925 = vpop.f32.mrb[0].mxu0
  %v3926 = vadd.f32 %v3781, %v3925
  %v3927 = vpop.f32.mrb[0].mxu0
  %3928 = vmatprep.mubr.f32.mxu0 0.0
  %3929 = vmatmul.mubr.f32.gmra.mrb[0].mxu0 %v3658
  %v3930 = vpop.f32.mrb[0].mxu0
  %v3931 = vadd.f32 %v3786, %v3930
  %v3932 = vpop.f32.mrb[0].mxu0
  %3933 = vmatprep.mubr.f32.mxu0 0.0
  %3934 = vmatmul.mubr.f32.gmra.mrb[0].mxu0 %v3661
  %v3935 = vpop.f32.mrb[0].mxu0
  %v3936 = vadd.f32 %v3791, %v3935
  %v3937 = vpop.f32.mrb[0].mxu0
  %3938 = vmatprep.mubr.f32.mxu0 0.0
  %3939 = vmatmul.mubr.f32.gmra.mrb[0].mxu0 %v3664
  %v3940 = vpop.f32.mrb[0].mxu0
  %v3941 = vadd.f32 %v3796, %v3940
  %v3942 = vpop.f32.mrb[0].mxu0
  %3943 = vmatprep.mubr.f32.mxu0 0.0
  %3944 = vmatmul.mubr.f32.gmra.mrb[0].mxu0 %v3667
  %v3945 = vpop.f32.mrb[0].mxu0
  %v3946 = vadd.f32 %v3801, %v3945
  %v3947 = vpop.f32.mrb[0].mxu0
  %3948 = vmatprep.mubr.f32.mxu0 0.0
  %3949 = vmatmul.mubr.f32.gmra.mrb[0].mxu0 %v3670
  %v3950 = vpop.f32.mrb[0].mxu0
  %v3951 = vadd.f32 %v3806, %v3950
  %v3952 = vpop.f32.mrb[0].mxu0
  %3953 = vmatprep.mubr.f32.mxu0 0.0
  %3954 = vmatmul.mubr.f32.gmra.mrb[0].mxu0 %v3673
  %v3955 = vpop.f32.mrb[0].mxu0
  %v3956 = vadd.f32 %v3811, %v3955
  %v3957 = vpop.f32.mrb[0].mxu0
  %3958 = vmatprep.mubr.f32.mxu0 0.0
  %3959 = vmatmul.mubr.f32.gmra.mrb[0].mxu0 %v3676
  %v3960 = vpop.f32.mrb[0].mxu0
  %v3961 = vadd.f32 %v3816, %v3960
  %v3962 = vpop.f32.mrb[0].mxu0
  %3963 = vmatprep.mubr.f32.mxu0 0.0
  %3964 = vmatmul.mubr.f32.gmra.mrb[0].mxu0 %v3679
  %v3965 = vpop.f32.mrb[0].mxu0
  %v3966 = vadd.f32 %v3821, %v3965
  %v3967 = vpop.f32.mrb[0].mxu0
  %3968 = vmatprep.mubr.f32.mxu0 0.0
  %3969 = vmatmul.mubr.f32.gmra.mrb[0].mxu0 %v3682
  %v3970 = vpop.f32.mrb[0].mxu0
  %v3971 = vadd.f32 %v3826, %v3970
  %v3972 = vpop.f32.mrb[0].mxu0
  %3973 = vdwg.mxu0
  %v3974 = vxor.u32 %v3896, 2147483648
  %v3975 = vxor.u32 %v3901, 2147483648
  %v3976 = vxor.u32 %v3906, 2147483648
  %v3977 = vxor.u32 %v3911, 2147483648
  %v3978 = vxor.u32 %v3916, 2147483648
  %v3979 = vxor.u32 %v3921, 2147483648
  %v3980 = vxor.u32 %v3926, 2147483648
  %v3981 = vxor.u32 %v3931, 2147483648
  %v3982 = vxor.u32 %v3936, 2147483648
  %v3983 = vxor.u32 %v3941, 2147483648
  %v3984 = vxor.u32 %v3946, 2147483648
  %v3985 = vxor.u32 %v3951, 2147483648
  %v3986 = vxor.u32 %v3956, 2147483648
  %v3987 = vxor.u32 %v3961, 2147483648
  %v3988 = vxor.u32 %v3966, 2147483648
  %v3989 = vxor.u32 %v3971, 2147483648
  %v3990 = vmul.f32 %v3974, 1.442695
  %v3991 = vpow.pop %v3990
  %v3992 = vmul.f32 %v3975, 1.442695
  %v3993 = vpow.pop %v3992
  %v3994 = vmul.f32 %v3976, 1.442695
  %v3995 = vpow.pop %v3994
  %v3996 = vmul.f32 %v3977, 1.442695
  %v3997 = vpow.pop %v3996
  %v3998 = vmul.f32 %v3978, 1.442695
  %v3999 = vpow.pop %v3998
  %v4000 = vmul.f32 %v3979, 1.442695
  %v4001 = vpow.pop %v4000
  %v4002 = vmul.f32 %v3980, 1.442695
  %v4003 = vpow.pop %v4002
  %v4004 = vmul.f32 %v3981, 1.442695
  %v4005 = vpow.pop %v4004
  %v4006 = vmul.f32 %v3982, 1.442695
  %v4007 = vpow.pop %v4006
  %v4008 = vmul.f32 %v3983, 1.442695
  %v4009 = vpow.pop %v4008
  %v4010 = vmul.f32 %v3984, 1.442695
  %v4011 = vpow.pop %v4010
  %v4012 = vmul.f32 %v3985, 1.442695
  %v4013 = vpow.pop %v4012
  %v4014 = vmul.f32 %v3986, 1.442695
  %v4015 = vpow.pop %v4014
  %v4016 = vmul.f32 %v3987, 1.442695
  %v4017 = vpow.pop %v4016
  %v4018 = vmul.f32 %v3988, 1.442695
  %v4019 = vpow.pop %v4018
  %v4020 = vmul.f32 %v3989, 1.442695
  %v4021 = vpow.pop %v4020
  %v4022 = vadd.f32 %v3991, 1.0
  %v4023 = vadd.f32 %v3993, 1.0
  %v4024 = vadd.f32 %v3995, 1.0
  %v4025 = vadd.f32 %v3997, 1.0
  %v4026 = vadd.f32 %v3999, 1.0
  %v4027 = vadd.f32 %v4001, 1.0
  %v4028 = vadd.f32 %v4003, 1.0
  %v4029 = vadd.f32 %v4005, 1.0
  %v4030 = vadd.f32 %v4007, 1.0
  %v4031 = vadd.f32 %v4009, 1.0
  %v4032 = vadd.f32 %v4011, 1.0
  %v4033 = vadd.f32 %v4013, 1.0
  %v4034 = vadd.f32 %v4015, 1.0
  %v4035 = vadd.f32 %v4017, 1.0
  %v4036 = vadd.f32 %v4019, 1.0
  %v4037 = vadd.f32 %v4021, 1.0
  %v4038 = vrcp.pop %v4022
  %v4039 = vmul.f32 1.0, %v4038
  %v4040 = vrcp.pop %v4023
  %v4041 = vmul.f32 1.0, %v4040
  %v4042 = vrcp.pop %v4024
  %v4043 = vmul.f32 1.0, %v4042
  %v4044 = vrcp.pop %v4025
  %v4045 = vmul.f32 1.0, %v4044
  %v4046 = vrcp.pop %v4026
  %v4047 = vmul.f32 1.0, %v4046
  %v4048 = vrcp.pop %v4027
  %v4049 = vmul.f32 1.0, %v4048
  %v4050 = vrcp.pop %v4028
  %v4051 = vmul.f32 1.0, %v4050
  %v4052 = vrcp.pop %v4029
  %v4053 = vmul.f32 1.0, %v4052
  %v4054 = vrcp.pop %v4030
  %v4055 = vmul.f32 1.0, %v4054
  %v4056 = vrcp.pop %v4031
  %v4057 = vmul.f32 1.0, %v4056
  %v4058 = vrcp.pop %v4032
  %v4059 = vmul.f32 1.0, %v4058
  %v4060 = vrcp.pop %v4033
  %v4061 = vmul.f32 1.0, %v4060
  %v4062 = vrcp.pop %v4034
  %v4063 = vmul.f32 1.0, %v4062
  %v4064 = vrcp.pop %v4035
  %v4065 = vmul.f32 1.0, %v4064
  %v4066 = vrcp.pop %v4036
  %v4067 = vmul.f32 1.0, %v4066
  %v4068 = vrcp.pop %v4037
  %v4069 = vmul.f32 1.0, %v4068
  %vm4070 = vcmask 7168
  %4071 = vst.msk [vmem:[%s9] sm:$0xff] %vm4070, %v4039
  %4072 = vst.msk [vmem:[%s9 + $0x8] sm:$0xff] %vm4070, %v4041
  %4073 = vst.msk [vmem:[%s9 + $0x10] sm:$0xff] %vm4070, %v4043
  %4074 = vst.msk [vmem:[%s9 + $0x18] sm:$0xff] %vm4070, %v4045
  %4075 = vst.msk [vmem:[%s9 + $0x20] sm:$0xff] %vm4070, %v4047
  %4076 = vst.msk [vmem:[%s9 + $0x28] sm:$0xff] %vm4070, %v4049
  %4077 = vst.msk [vmem:[%s9 + $0x30] sm:$0xff] %vm4070, %v4051
  %4078 = vst.msk [vmem:[%s9 + $0x38] sm:$0xff] %vm4070, %v4053
  %4079 = vst.msk [vmem:[%s9 + $0x40] sm:$0xff] %vm4070, %v4055
  %4080 = vst.msk [vmem:[%s9 + $0x48] sm:$0xff] %vm4070, %v4057
  %4081 = vst.msk [vmem:[%s9 + $0x50] sm:$0xff] %vm4070, %v4059
  %4082 = vst.msk [vmem:[%s9 + $0x58] sm:$0xff] %vm4070, %v4061
  %4083 = vst.msk [vmem:[%s9 + $0x60] sm:$0xff] %vm4070, %v4063
  %4084 = vst.msk [vmem:[%s9 + $0x68] sm:$0xff] %vm4070, %v4065
  %4085 = vst.msk [vmem:[%s9 + $0x70] sm:$0xff] %vm4070, %v4067
  %4086 = vst.msk [vmem:[%s9 + $0x78] sm:$0xff] %vm4070, %v4069
  // Predicated region
  $region38: #{conv_decoder_forward.1} parent=0 // pred_check
    _
  $region39: #{conv_decoder_forward.1} parent=0 // pred_check_branch
    %4088 = sbr.rel (0) target = $region41
  $region40: #{conv_decoder_forward.1} parent=0 // pred_region
    _
  $region41: #{conv_decoder_forward.1} parent=0 // pred_fallthru
    _
  // Predicated region
  $region42: #{conv_decoder_forward.1} parent=0 // pred_check
    _
  $region43: #{conv_decoder_forward.1} parent=0 // pred_check_branch
    %4090 = sbr.rel (0) target = $region45
  $region44: #{conv_decoder_forward.1} parent=0 // pred_region
    _
  $region45: #{conv_decoder_forward.1} parent=0 // pred_fallthru
    _

</llo_original>
